<compile_context>
chip_gen: v5e
topology: v5e:2x2
jax: 0.10.0
libtpu: 0.0.40
codegen_flags: <defaults>
</compile_context>

<pallas_src>
import functools
import numpy as np
import jax
import jax.numpy as jnp
from jax import lax
from jax.experimental import pallas as pl
from jax.experimental.pallas import tpu as pltpu

NEG_SLOPE = 0.01   # torch nn.LeakyReLU default
_N_MLPS = 12       # nc1, nc2, nc3, then (msg, init, out) for ec1, ec2, ec3


def _leaky_relu(h):
    return jnp.where(h > 0, h, NEG_SLOPE * h)


# ----------------------------------------------------------------------------
# The single fused Pallas kernel: whole Gcnn forward, everything in VMEM.
# ----------------------------------------------------------------------------
def _gcnn_kernel(*refs):
    (src_c_ref, dst_c_ref, src_r_ref, dst_r_ref, x_ref, ang_ref) = refs[:6]
    w_refs = refs[6:6 + 4 * _N_MLPS]
    ef_ref, sl_ref = refs[6 + 4 * _N_MLPS:]

    n_edges = src_c_ref.shape[0]
    n_nodes = x_ref.shape[0]
    f32 = jnp.float32

    def get_mlp(k):
        b = 4 * k
        return (w_refs[b][...], w_refs[b + 1][...],
                w_refs[b + 2][...], w_refs[b + 3][...])

    nc = [get_mlp(0), get_mlp(1), get_mlp(2)]
    ec = [(get_mlp(3 + 3 * t), get_mlp(4 + 3 * t), get_mlp(5 + 3 * t))
          for t in range(3)]                        # (msg, init, out) per EdgeConv

    # --- one-hot gather / scatter matrices built in-kernel from edge indices ---
    src_c = src_c_ref[...]                          # (E, 1) int32
    dst_c = dst_c_ref[...]                          # (E, 1) int32
    src_r = src_r_ref[...]                          # (1, E) int32
    dst_r = dst_r_ref[...]                          # (1, E) int32
    iota_en = lax.broadcasted_iota(jnp.int32, (n_edges, n_nodes), 1)
    g_src = (src_c == iota_en).astype(f32)          # (E, N): g_src @ x == x[src]
    g_dst = (dst_c == iota_en).astype(f32)          # (E, N): g_dst @ x == x[dst]
    iota_ne = lax.broadcasted_iota(jnp.int32, (n_nodes, n_edges), 0)
    s_src = (iota_ne == src_r).astype(f32)          # (N, E): scatter-add into src
    s_dst = (iota_ne == dst_r).astype(f32)          # (N, E): scatter-add into dst
    deg = jnp.maximum(jnp.sum(s_src + s_dst, axis=1, keepdims=True), 1.0)  # (N, 1)

    def dot(a, b):
        return jnp.dot(a, b, preferred_element_type=f32)

    def mlp(x, p):
        w1, b1, w2, b2 = p
        h = _leaky_relu(dot(x, w1) + b1)
        return dot(h, w2) + b2

    def mlp_cat(xa, xb, p):
        # MLP applied to concat([xa, xb], axis=1) via split first-layer weights
        w1, b1, w2, b2 = p
        c = xa.shape[1]
        h = _leaky_relu(dot(xa, w1[:c, :]) + dot(xb, w1[c:, :]) + b1)
        return dot(h, w2) + b2

    def node_conv(x, p):
        x_s = dot(g_src, x)                         # (E, C) == x[src]
        x_d = dot(g_dst, x)                         # (E, C) == x[dst]
        m_to_dst = mlp_cat(x_d, x_s, p)             # receiver features first
        m_to_src = mlp_cat(x_s, x_d, p)
        summed = dot(s_dst, m_to_dst) + dot(s_src, m_to_src)   # (N, C)
        return summed / deg                         # mean aggregation

    def edge_conv(x, e0, p_msg, p_init, p_out):
        xi = dot(g_src, x)                          # x[i], i = edge_index[0]
        xj = dot(g_dst, x)                          # x[j], j = edge_index[1]
        m_ij = mlp_cat(xi, xj, p_msg)
        m_ji = mlp_cat(xj, xi, p_msg)
        d = m_ij - m_ji
        sl = jnp.sum(jnp.sum(d * d, axis=1, keepdims=True), axis=0, keepdims=True)
        sl = sl * (1.0 / (d.shape[0] * d.shape[1]))             # mean, kept (1, 1)
        e_sym = 0.5 * (m_ij + m_ji)
        e_init = mlp(e0, p_init)
        return mlp_cat(e_sym, e_init, p_out), sl

    # ------------------------------ forward chain -----------------------------
    x = x_ref[...]
    nf = node_conv(x, nc[0])
    ef, sl1 = edge_conv(nf, ang_ref[...], *ec[0])
    nf = nf + node_conv(nf, nc[1])
    ef2, sl2 = edge_conv(nf, ef, *ec[1])
    ef = ef2 + ef
    nf = nf + node_conv(nf, nc[2])
    ef, sl3 = edge_conv(nf, ef, *ec[2])

    ef_ref[...] = ef.astype(ef_ref.dtype)
    sl_ref[...] = ((sl1 + sl2 + sl3) * (1.0 / 3.0)).astype(sl_ref.dtype)


# ----------------------------------------------------------------------------
# Wrapper: flatten params, hand everything to the single pallas_call.
# ----------------------------------------------------------------------------
def gcnn_forward(params, node_features, edge_index, angles, gt_edges=None,
                 post_input=False):
    del gt_edges, post_input  # plotting branch not implemented
    n_edges = edge_index.shape[1]
    n_out = params["ec3"]["out"][2].shape[1]

    src = edge_index[0].astype(jnp.int32)
    dst = edge_index[1].astype(jnp.int32)
    src_c = src.reshape(n_edges, 1)
    dst_c = dst.reshape(n_edges, 1)
    src_r = src.reshape(1, n_edges)
    dst_r = dst.reshape(1, n_edges)

    flat_w = []
    for name in ("nc1", "nc2", "nc3"):
        w1, b1, w2, b2 = params[name]
        flat_w += [w1, b1.reshape(1, -1), w2, b2.reshape(1, -1)]
    for name in ("ec1", "ec2", "ec3"):
        for sub in ("msg", "init", "out"):
            w1, b1, w2, b2 = params[name][sub]
            flat_w += [w1, b1.reshape(1, -1), w2, b2.reshape(1, -1)]
    assert len(flat_w) == 4 * _N_MLPS

    vmem = pl.BlockSpec(memory_space=pltpu.MemorySpace.VMEM)
    n_inputs = 6 + len(flat_w)
    ef, sl = pl.pallas_call(
        _gcnn_kernel,
        out_shape=(jax.ShapeDtypeStruct((n_edges, n_out), node_features.dtype),
                   jax.ShapeDtypeStruct((1, 1), jnp.float32)),
        in_specs=[vmem] * n_inputs,
        out_specs=(vmem, vmem),
    )(src_c, dst_c, src_r, dst_r, node_features, angles, *flat_w)
    return ef, sl[0, 0]


# ----------------------------------------------------------------------------
# Deterministic parameter init
# ----------------------------------------------------------------------------
def init_mlp(key, fin, fout, hl_factor):
    h = fin * hl_factor
    k1, k2 = jax.random.split(key)
    w1 = jax.random.normal(k1, (fin, h), jnp.float32) / np.sqrt(fin)
    b1 = jnp.zeros((h,), jnp.float32)
    w2 = jax.random.normal(k2, (h, fout), jnp.float32) / np.sqrt(h)
    b2 = jnp.zeros((fout,), jnp.float32)
    return (w1, b1, w2, b2)


def init_gcnn_params(key, n_in, n_out, hl_factor):
    ks = jax.random.split(key, 12)
    return {
        "nc1": init_mlp(ks[0], 2 * n_in, n_in, hl_factor),
        "nc2": init_mlp(ks[1], 2 * n_in, n_in, hl_factor),
        "nc3": init_mlp(ks[2], 2 * n_in, n_in, hl_factor),
        "ec1": {"msg":  init_mlp(ks[3], 2 * n_in, n_in, hl_factor),
                "init": init_mlp(ks[4], 1, n_in, hl_factor * n_in),
                "out":  init_mlp(ks[5], 2 * n_in, n_in, hl_factor)},
        "ec2": {"msg":  init_mlp(ks[6], 2 * n_in, n_in, hl_factor),
                "init": init_mlp(ks[7], n_in, n_in, hl_factor),
                "out":  init_mlp(ks[8], 2 * n_in, n_in, hl_factor)},
        "ec3": {"msg":  init_mlp(ks[9], 2 * n_in, n_out, hl_factor),
                "init": init_mlp(ks[10], n_in, n_out, hl_factor),
                "out":  init_mlp(ks[11], 2 * n_out, n_out, hl_factor)},
    }


# ----------------------------------------------------------------------------
# Pure-JAX reference (same semantics, standard gather/scatter) for sanity check
# ----------------------------------------------------------------------------
def _mlp_ref(x, p):
    w1, b1, w2, b2 = p
    h = jnp.dot(x, w1, precision=lax.Precision.HIGHEST) + b1
    h = jnp.where(h > 0, h, NEG_SLOPE * h)
    return jnp.dot(h, w2, precision=lax.Precision.HIGHEST) + b2


def _node_conv_ref(x, edge_index, p):
    n = x.shape[0]
    src = jnp.concatenate([edge_index[0], edge_index[1]])
    dst = jnp.concatenate([edge_index[1], edge_index[0]])
    msgs = _mlp_ref(jnp.concatenate([x[dst], x[src]], axis=1), p)
    summed = jnp.zeros((n, msgs.shape[1]), x.dtype).at[dst].add(msgs)
    cnt = jnp.zeros((n,), x.dtype).at[dst].add(1.0)
    return summed / jnp.maximum(cnt, 1.0)[:, None]


def _edge_conv_ref(x, edge_index, e0, p):
    i, j = edge_index[0], edge_index[1]
    m_ij = _mlp_ref(jnp.concatenate([x[i], x[j]], axis=1), p["msg"])
    m_ji = _mlp_ref(jnp.concatenate([x[j], x[i]], axis=1), p["msg"])
    side = jnp.mean((m_ij - m_ji) ** 2)
    e = 0.5 * (m_ij + m_ji)
    e_init = _mlp_ref(e0, p["init"])
    return _mlp_ref(jnp.concatenate([e, e_init], axis=1), p["out"]), side


def gcnn_forward_ref(params, x, edge_index, angles):
    nf = _node_conv_ref(x, edge_index, params["nc1"])
    ef, s1 = _edge_conv_ref(nf, edge_index, angles, params["ec1"])
    nf = nf + _node_conv_ref(nf, edge_index, params["nc2"])
    ef2, s2 = _edge_conv_ref(nf, edge_index, ef, params["ec2"])
    ef = ef2 + ef
    nf = nf + _node_conv_ref(nf, edge_index, params["nc3"])
    ef, s3 = _edge_conv_ref(nf, edge_index, ef, params["ec3"])
    return ef, (s1 + s2 + s3) / 3.0


# ----------------------------------------------------------------------------
# Example run
# ----------------------------------------------------------------------------
if __name__ == "__main__":
    n_in_channels = 8
    n_out_channels = 8
    hl_factor = 2
    N_NODES = 16
    N_EDGES = 24

    key = jax.random.PRNGKey(0)
    kp, kx, ka, kg = jax.random.split(key, 4)

    params = init_gcnn_params(kp, n_in_channels, n_out_channels, hl_factor)
    node_features = jax.random.normal(kx, (N_NODES, n_in_channels), jnp.float32)

    # simple deterministic graph: ring + chords
    src = np.concatenate([np.arange(16), np.arange(8)])
    dst = np.concatenate([(np.arange(16) + 1) % 16, (np.arange(8) + 5) % 16])
    edge_index = jnp.asarray(np.stack([src, dst]), dtype=jnp.int32)   # (2, 24)

    angles = jax.random.normal(ka, (N_EDGES, 1), jnp.float32)
    gt_edges = jax.random.uniform(kg, (N_EDGES,), jnp.float32)

    fwd = jax.jit(functools.partial(gcnn_forward, params))
    edge_features, side_loss = fwd(node_features, edge_index, angles, gt_edges)
    jax.block_until_ready((edge_features, side_loss))

    # loose-tolerance sanity check against a pure-JAX reference (wiring, not bits)
    ef_r, sl_r = jax.jit(functools.partial(gcnn_forward_ref, params))(
        node_features, edge_index, angles)
    np.testing.assert_allclose(np.asarray(edge_features), np.asarray(ef_r),
                               rtol=5e-2, atol=5e-2)
    np.testing.assert_allclose(float(side_loss), float(sl_r),
                               rtol=5e-2, atol=5e-2)

    assert edge_features.shape == (N_EDGES, n_out_channels)
    assert side_loss.shape == ()
    print("KERNEL_OK")
</pallas_src>

<mosaic_0001>
module attributes {stable_mosaic.version = 11 : i64} {
  func.func @_gcnn_kernel(%arg0: memref<24x1xi32, #tpu.memory_space<vmem>>, %arg1: memref<24x1xi32, #tpu.memory_space<vmem>>, %arg2: memref<1x24xi32, #tpu.memory_space<vmem>>, %arg3: memref<1x24xi32, #tpu.memory_space<vmem>>, %arg4: memref<16x8xf32, #tpu.memory_space<vmem>>, %arg5: memref<24x1xf32, #tpu.memory_space<vmem>>, %arg6: memref<16x32xf32, #tpu.memory_space<vmem>>, %arg7: memref<1x32xf32, #tpu.memory_space<vmem>>, %arg8: memref<32x8xf32, #tpu.memory_space<vmem>>, %arg9: memref<1x8xf32, #tpu.memory_space<vmem>>, %arg10: memref<16x32xf32, #tpu.memory_space<vmem>>, %arg11: memref<1x32xf32, #tpu.memory_space<vmem>>, %arg12: memref<32x8xf32, #tpu.memory_space<vmem>>, %arg13: memref<1x8xf32, #tpu.memory_space<vmem>>, %arg14: memref<16x32xf32, #tpu.memory_space<vmem>>, %arg15: memref<1x32xf32, #tpu.memory_space<vmem>>, %arg16: memref<32x8xf32, #tpu.memory_space<vmem>>, %arg17: memref<1x8xf32, #tpu.memory_space<vmem>>, %arg18: memref<16x32xf32, #tpu.memory_space<vmem>>, %arg19: memref<1x32xf32, #tpu.memory_space<vmem>>, %arg20: memref<32x8xf32, #tpu.memory_space<vmem>>, %arg21: memref<1x8xf32, #tpu.memory_space<vmem>>, %arg22: memref<1x16xf32, #tpu.memory_space<vmem>>, %arg23: memref<1x16xf32, #tpu.memory_space<vmem>>, %arg24: memref<16x8xf32, #tpu.memory_space<vmem>>, %arg25: memref<1x8xf32, #tpu.memory_space<vmem>>, %arg26: memref<16x32xf32, #tpu.memory_space<vmem>>, %arg27: memref<1x32xf32, #tpu.memory_space<vmem>>, %arg28: memref<32x8xf32, #tpu.memory_space<vmem>>, %arg29: memref<1x8xf32, #tpu.memory_space<vmem>>, %arg30: memref<16x32xf32, #tpu.memory_space<vmem>>, %arg31: memref<1x32xf32, #tpu.memory_space<vmem>>, %arg32: memref<32x8xf32, #tpu.memory_space<vmem>>, %arg33: memref<1x8xf32, #tpu.memory_space<vmem>>, %arg34: memref<8x16xf32, #tpu.memory_space<vmem>>, %arg35: memref<1x16xf32, #tpu.memory_space<vmem>>, %arg36: memref<16x8xf32, #tpu.memory_space<vmem>>, %arg37: memref<1x8xf32, #tpu.memory_space<vmem>>, %arg38: memref<16x32xf32, #tpu.memory_space<vmem>>, %arg39: memref<1x32xf32, #tpu.memory_space<vmem>>, %arg40: memref<32x8xf32, #tpu.memory_space<vmem>>, %arg41: memref<1x8xf32, #tpu.memory_space<vmem>>, %arg42: memref<16x32xf32, #tpu.memory_space<vmem>>, %arg43: memref<1x32xf32, #tpu.memory_space<vmem>>, %arg44: memref<32x8xf32, #tpu.memory_space<vmem>>, %arg45: memref<1x8xf32, #tpu.memory_space<vmem>>, %arg46: memref<8x16xf32, #tpu.memory_space<vmem>>, %arg47: memref<1x16xf32, #tpu.memory_space<vmem>>, %arg48: memref<16x8xf32, #tpu.memory_space<vmem>>, %arg49: memref<1x8xf32, #tpu.memory_space<vmem>>, %arg50: memref<16x32xf32, #tpu.memory_space<vmem>>, %arg51: memref<1x32xf32, #tpu.memory_space<vmem>>, %arg52: memref<32x8xf32, #tpu.memory_space<vmem>>, %arg53: memref<1x8xf32, #tpu.memory_space<vmem>>, %arg54: memref<24x8xf32, #tpu.memory_space<vmem>>, %arg55: memref<1x1xf32, #tpu.memory_space<vmem>>) attributes {dimension_semantics = [], scalar_prefetch = 0 : i64, scratch_operands = 0 : i64, tpu.core_type = #tpu.core_type<tc>} {
    %c0 = arith.constant 0 : index
    %c0_0 = arith.constant 0 : index
    %0 = vector.load %arg6[%c0, %c0_0] : memref<16x32xf32, #tpu.memory_space<vmem>>, vector<16x32xf32>
    %c0_1 = arith.constant 0 : index
    %c0_2 = arith.constant 0 : index
    %1 = vector.load %arg7[%c0_1, %c0_2] : memref<1x32xf32, #tpu.memory_space<vmem>>, vector<1x32xf32>
    %c0_3 = arith.constant 0 : index
    %c0_4 = arith.constant 0 : index
    %2 = vector.load %arg8[%c0_3, %c0_4] : memref<32x8xf32, #tpu.memory_space<vmem>>, vector<32x8xf32>
    %c0_5 = arith.constant 0 : index
    %c0_6 = arith.constant 0 : index
    %3 = vector.load %arg9[%c0_5, %c0_6] : memref<1x8xf32, #tpu.memory_space<vmem>>, vector<1x8xf32>
    %c0_7 = arith.constant 0 : index
    %c0_8 = arith.constant 0 : index
    %4 = vector.load %arg10[%c0_7, %c0_8] : memref<16x32xf32, #tpu.memory_space<vmem>>, vector<16x32xf32>
    %c0_9 = arith.constant 0 : index
    %c0_10 = arith.constant 0 : index
    %5 = vector.load %arg11[%c0_9, %c0_10] : memref<1x32xf32, #tpu.memory_space<vmem>>, vector<1x32xf32>
    %c0_11 = arith.constant 0 : index
    %c0_12 = arith.constant 0 : index
    %6 = vector.load %arg12[%c0_11, %c0_12] : memref<32x8xf32, #tpu.memory_space<vmem>>, vector<32x8xf32>
    %c0_13 = arith.constant 0 : index
    %c0_14 = arith.constant 0 : index
    %7 = vector.load %arg13[%c0_13, %c0_14] : memref<1x8xf32, #tpu.memory_space<vmem>>, vector<1x8xf32>
    %c0_15 = arith.constant 0 : index
    %c0_16 = arith.constant 0 : index
    %8 = vector.load %arg14[%c0_15, %c0_16] : memref<16x32xf32, #tpu.memory_space<vmem>>, vector<16x32xf32>
    %c0_17 = arith.constant 0 : index
    %c0_18 = arith.constant 0 : index
    %9 = vector.load %arg15[%c0_17, %c0_18] : memref<1x32xf32, #tpu.memory_space<vmem>>, vector<1x32xf32>
    %c0_19 = arith.constant 0 : index
    %c0_20 = arith.constant 0 : index
    %10 = vector.load %arg16[%c0_19, %c0_20] : memref<32x8xf32, #tpu.memory_space<vmem>>, vector<32x8xf32>
    %c0_21 = arith.constant 0 : index
    %c0_22 = arith.constant 0 : index
    %11 = vector.load %arg17[%c0_21, %c0_22] : memref<1x8xf32, #tpu.memory_space<vmem>>, vector<1x8xf32>
    %c0_23 = arith.constant 0 : index
    %c0_24 = arith.constant 0 : index
    %12 = vector.load %arg18[%c0_23, %c0_24] : memref<16x32xf32, #tpu.memory_space<vmem>>, vector<16x32xf32>
    %c0_25 = arith.constant 0 : index
    %c0_26 = arith.constant 0 : index
    %13 = vector.load %arg19[%c0_25, %c0_26] : memref<1x32xf32, #tpu.memory_space<vmem>>, vector<1x32xf32>
    %c0_27 = arith.constant 0 : index
    %c0_28 = arith.constant 0 : index
    %14 = vector.load %arg20[%c0_27, %c0_28] : memref<32x8xf32, #tpu.memory_space<vmem>>, vector<32x8xf32>
    %c0_29 = arith.constant 0 : index
    %c0_30 = arith.constant 0 : index
    %15 = vector.load %arg21[%c0_29, %c0_30] : memref<1x8xf32, #tpu.memory_space<vmem>>, vector<1x8xf32>
    %c0_31 = arith.constant 0 : index
    %c0_32 = arith.constant 0 : index
    %16 = vector.load %arg22[%c0_31, %c0_32] : memref<1x16xf32, #tpu.memory_space<vmem>>, vector<1x16xf32>
    %c0_33 = arith.constant 0 : index
    %c0_34 = arith.constant 0 : index
    %17 = vector.load %arg23[%c0_33, %c0_34] : memref<1x16xf32, #tpu.memory_space<vmem>>, vector<1x16xf32>
    %c0_35 = arith.constant 0 : index
    %c0_36 = arith.constant 0 : index
    %18 = vector.load %arg24[%c0_35, %c0_36] : memref<16x8xf32, #tpu.memory_space<vmem>>, vector<16x8xf32>
    %c0_37 = arith.constant 0 : index
    %c0_38 = arith.constant 0 : index
    %19 = vector.load %arg25[%c0_37, %c0_38] : memref<1x8xf32, #tpu.memory_space<vmem>>, vector<1x8xf32>
    %c0_39 = arith.constant 0 : index
    %c0_40 = arith.constant 0 : index
    %20 = vector.load %arg26[%c0_39, %c0_40] : memref<16x32xf32, #tpu.memory_space<vmem>>, vector<16x32xf32>
    %c0_41 = arith.constant 0 : index
    %c0_42 = arith.constant 0 : index
    %21 = vector.load %arg27[%c0_41, %c0_42] : memref<1x32xf32, #tpu.memory_space<vmem>>, vector<1x32xf32>
    %c0_43 = arith.constant 0 : index
    %c0_44 = arith.constant 0 : index
    %22 = vector.load %arg28[%c0_43, %c0_44] : memref<32x8xf32, #tpu.memory_space<vmem>>, vector<32x8xf32>
    %c0_45 = arith.constant 0 : index
    %c0_46 = arith.constant 0 : index
    %23 = vector.load %arg29[%c0_45, %c0_46] : memref<1x8xf32, #tpu.memory_space<vmem>>, vector<1x8xf32>
    %c0_47 = arith.constant 0 : index
    %c0_48 = arith.constant 0 : index
    %24 = vector.load %arg30[%c0_47, %c0_48] : memref<16x32xf32, #tpu.memory_space<vmem>>, vector<16x32xf32>
    %c0_49 = arith.constant 0 : index
    %c0_50 = arith.constant 0 : index
    %25 = vector.load %arg31[%c0_49, %c0_50] : memref<1x32xf32, #tpu.memory_space<vmem>>, vector<1x32xf32>
    %c0_51 = arith.constant 0 : index
    %c0_52 = arith.constant 0 : index
    %26 = vector.load %arg32[%c0_51, %c0_52] : memref<32x8xf32, #tpu.memory_space<vmem>>, vector<32x8xf32>
    %c0_53 = arith.constant 0 : index
    %c0_54 = arith.constant 0 : index
    %27 = vector.load %arg33[%c0_53, %c0_54] : memref<1x8xf32, #tpu.memory_space<vmem>>, vector<1x8xf32>
    %c0_55 = arith.constant 0 : index
    %c0_56 = arith.constant 0 : index
    %28 = vector.load %arg34[%c0_55, %c0_56] : memref<8x16xf32, #tpu.memory_space<vmem>>, vector<8x16xf32>
    %c0_57 = arith.constant 0 : index
    %c0_58 = arith.constant 0 : index
    %29 = vector.load %arg35[%c0_57, %c0_58] : memref<1x16xf32, #tpu.memory_space<vmem>>, vector<1x16xf32>
    %c0_59 = arith.constant 0 : index
    %c0_60 = arith.constant 0 : index
    %30 = vector.load %arg36[%c0_59, %c0_60] : memref<16x8xf32, #tpu.memory_space<vmem>>, vector<16x8xf32>
    %c0_61 = arith.constant 0 : index
    %c0_62 = arith.constant 0 : index
    %31 = vector.load %arg37[%c0_61, %c0_62] : memref<1x8xf32, #tpu.memory_space<vmem>>, vector<1x8xf32>
    %c0_63 = arith.constant 0 : index
    %c0_64 = arith.constant 0 : index
    %32 = vector.load %arg38[%c0_63, %c0_64] : memref<16x32xf32, #tpu.memory_space<vmem>>, vector<16x32xf32>
    %c0_65 = arith.constant 0 : index
    %c0_66 = arith.constant 0 : index
    %33 = vector.load %arg39[%c0_65, %c0_66] : memref<1x32xf32, #tpu.memory_space<vmem>>, vector<1x32xf32>
    %c0_67 = arith.constant 0 : index
    %c0_68 = arith.constant 0 : index
    %34 = vector.load %arg40[%c0_67, %c0_68] : memref<32x8xf32, #tpu.memory_space<vmem>>, vector<32x8xf32>
    %c0_69 = arith.constant 0 : index
    %c0_70 = arith.constant 0 : index
    %35 = vector.load %arg41[%c0_69, %c0_70] : memref<1x8xf32, #tpu.memory_space<vmem>>, vector<1x8xf32>
    %c0_71 = arith.constant 0 : index
    %c0_72 = arith.constant 0 : index
    %36 = vector.load %arg42[%c0_71, %c0_72] : memref<16x32xf32, #tpu.memory_space<vmem>>, vector<16x32xf32>
    %c0_73 = arith.constant 0 : index
    %c0_74 = arith.constant 0 : index
    %37 = vector.load %arg43[%c0_73, %c0_74] : memref<1x32xf32, #tpu.memory_space<vmem>>, vector<1x32xf32>
    %c0_75 = arith.constant 0 : index
    %c0_76 = arith.constant 0 : index
    %38 = vector.load %arg44[%c0_75, %c0_76] : memref<32x8xf32, #tpu.memory_space<vmem>>, vector<32x8xf32>
    %c0_77 = arith.constant 0 : index
    %c0_78 = arith.constant 0 : index
    %39 = vector.load %arg45[%c0_77, %c0_78] : memref<1x8xf32, #tpu.memory_space<vmem>>, vector<1x8xf32>
    %c0_79 = arith.constant 0 : index
    %c0_80 = arith.constant 0 : index
    %40 = vector.load %arg46[%c0_79, %c0_80] : memref<8x16xf32, #tpu.memory_space<vmem>>, vector<8x16xf32>
    %c0_81 = arith.constant 0 : index
    %c0_82 = arith.constant 0 : index
    %41 = vector.load %arg47[%c0_81, %c0_82] : memref<1x16xf32, #tpu.memory_space<vmem>>, vector<1x16xf32>
    %c0_83 = arith.constant 0 : index
    %c0_84 = arith.constant 0 : index
    %42 = vector.load %arg48[%c0_83, %c0_84] : memref<16x8xf32, #tpu.memory_space<vmem>>, vector<16x8xf32>
    %c0_85 = arith.constant 0 : index
    %c0_86 = arith.constant 0 : index
    %43 = vector.load %arg49[%c0_85, %c0_86] : memref<1x8xf32, #tpu.memory_space<vmem>>, vector<1x8xf32>
    %c0_87 = arith.constant 0 : index
    %c0_88 = arith.constant 0 : index
    %44 = vector.load %arg50[%c0_87, %c0_88] : memref<16x32xf32, #tpu.memory_space<vmem>>, vector<16x32xf32>
    %c0_89 = arith.constant 0 : index
    %c0_90 = arith.constant 0 : index
    %45 = vector.load %arg51[%c0_89, %c0_90] : memref<1x32xf32, #tpu.memory_space<vmem>>, vector<1x32xf32>
    %c0_91 = arith.constant 0 : index
    %c0_92 = arith.constant 0 : index
    %46 = vector.load %arg52[%c0_91, %c0_92] : memref<32x8xf32, #tpu.memory_space<vmem>>, vector<32x8xf32>
    %c0_93 = arith.constant 0 : index
    %c0_94 = arith.constant 0 : index
    %47 = vector.load %arg53[%c0_93, %c0_94] : memref<1x8xf32, #tpu.memory_space<vmem>>, vector<1x8xf32>
    %c0_95 = arith.constant 0 : index
    %c0_96 = arith.constant 0 : index
    %48 = vector.load %arg0[%c0_95, %c0_96] : memref<24x1xi32, #tpu.memory_space<vmem>>, vector<24x1xi32>
    %c0_97 = arith.constant 0 : index
    %c0_98 = arith.constant 0 : index
    %49 = vector.load %arg1[%c0_97, %c0_98] : memref<24x1xi32, #tpu.memory_space<vmem>>, vector<24x1xi32>
    %c0_99 = arith.constant 0 : index
    %c0_100 = arith.constant 0 : index
    %50 = vector.load %arg2[%c0_99, %c0_100] : memref<1x24xi32, #tpu.memory_space<vmem>>, vector<1x24xi32>
    %c0_101 = arith.constant 0 : index
    %c0_102 = arith.constant 0 : index
    %51 = vector.load %arg3[%c0_101, %c0_102] : memref<1x24xi32, #tpu.memory_space<vmem>>, vector<1x24xi32>
    %52 = tpu.iota {dimensions = array<i32: 1>} : vector<24x16xi32>
    %53 = vector.broadcast %48 : vector<24x1xi32> to vector<24x16xi32>
    %54 = arith.cmpi eq, %53, %52 : vector<24x16xi32>
    %55 = arith.extui %54 : vector<24x16xi1> to vector<24x16xi32>
    %56 = arith.sitofp %55 : vector<24x16xi32> to vector<24x16xf32>
    %57 = vector.broadcast %49 : vector<24x1xi32> to vector<24x16xi32>
    %58 = arith.cmpi eq, %57, %52 : vector<24x16xi32>
    %59 = arith.extui %58 : vector<24x16xi1> to vector<24x16xi32>
    %60 = arith.sitofp %59 : vector<24x16xi32> to vector<24x16xf32>
    %61 = tpu.iota {dimensions = array<i32: 0>} : vector<16x24xi32>
    %62 = vector.broadcast %50 : vector<1x24xi32> to vector<16x24xi32>
    %63 = arith.cmpi eq, %61, %62 : vector<16x24xi32>
    %64 = arith.extui %63 : vector<16x24xi1> to vector<16x24xi32>
    %65 = arith.sitofp %64 : vector<16x24xi32> to vector<16x24xf32>
    %66 = vector.broadcast %51 : vector<1x24xi32> to vector<16x24xi32>
    %67 = arith.cmpi eq, %61, %66 : vector<16x24xi32>
    %68 = arith.extui %67 : vector<16x24xi1> to vector<16x24xi32>
    %69 = arith.sitofp %68 : vector<16x24xi32> to vector<16x24xf32>
    %70 = arith.addf %65, %69 : vector<16x24xf32>
    %cst = arith.constant dense<0.000000e+00> : vector<16xf32>
    %71 = vector.multi_reduction <add>, %70, %cst [1] : vector<16x24xf32> to vector<16xf32>
    %72 = vector.shape_cast %71 : vector<16xf32> to vector<16x1xf32>
    %cst_103 = arith.constant 1.000000e+00 : f32
    %73 = vector.broadcast %cst_103 : f32 to vector<16x1xf32>
    %74 = arith.maximumf %72, %73 : vector<16x1xf32>
    %c0_104 = arith.constant 0 : index
    %c0_105 = arith.constant 0 : index
    %75 = vector.load %arg4[%c0_104, %c0_105] : memref<16x8xf32, #tpu.memory_space<vmem>>, vector<16x8xf32>
    %cst_106 = arith.constant dense<0.000000e+00> : vector<24x8xf32>
    %76 = tpu.matmul %56, %75, %cst_106 {dimension_numbers = #tpu.dot_dimension_numbers<[1], [0], [0], [1], [0, 0, 1, 1], [], []>} : vector<24x16xf32>, vector<16x8xf32>, vector<24x8xf32> -> vector<24x8xf32>
    %cst_107 = arith.constant dense<0.000000e+00> : vector<24x8xf32>
    %77 = tpu.matmul %60, %75, %cst_107 {dimension_numbers = #tpu.dot_dimension_numbers<[1], [0], [0], [1], [0, 0, 1, 1], [], []>} : vector<24x16xf32>, vector<16x8xf32>, vector<24x8xf32> -> vector<24x8xf32>
    %78 = vector.extract_strided_slice %0 {offsets = [0, 0], sizes = [8, 32], strides = [1, 1]} : vector<16x32xf32> to vector<8x32xf32>
    %cst_108 = arith.constant dense<0.000000e+00> : vector<24x32xf32>
    %79 = tpu.matmul %77, %78, %cst_108 {dimension_numbers = #tpu.dot_dimension_numbers<[1], [0], [0], [1], [0, 0, 1, 1], [], []>} : vector<24x8xf32>, vector<8x32xf32>, vector<24x32xf32> -> vector<24x32xf32>
    %80 = vector.extract_strided_slice %0 {offsets = [8, 0], sizes = [8, 32], strides = [1, 1]} : vector<16x32xf32> to vector<8x32xf32>
    %cst_109 = arith.constant dense<0.000000e+00> : vector<24x32xf32>
    %81 = tpu.matmul %76, %80, %cst_109 {dimension_numbers = #tpu.dot_dimension_numbers<[1], [0], [0], [1], [0, 0, 1, 1], [], []>} : vector<24x8xf32>, vector<8x32xf32>, vector<24x32xf32> -> vector<24x32xf32>
    %82 = arith.addf %79, %81 : vector<24x32xf32>
    %83 = vector.broadcast %1 : vector<1x32xf32> to vector<24x32xf32>
    %84 = arith.addf %82, %83 : vector<24x32xf32>
    %cst_110 = arith.constant 0.000000e+00 : f32
    %85 = vector.broadcast %cst_110 : f32 to vector<24x32xf32>
    %86 = arith.cmpf ogt, %84, %85 : vector<24x32xf32>
    %cst_111 = arith.constant 0.00999999977 : f32
    %87 = vector.broadcast %cst_111 : f32 to vector<24x32xf32>
    %88 = arith.mulf %87, %84 : vector<24x32xf32>
    %89 = arith.select %86, %84, %88 : vector<24x32xi1>, vector<24x32xf32>
    %cst_112 = arith.constant dense<0.000000e+00> : vector<24x8xf32>
    %90 = tpu.matmul %89, %2, %cst_112 {dimension_numbers = #tpu.dot_dimension_numbers<[1], [0], [0], [1], [0, 0, 1, 1], [], []>} : vector<24x32xf32>, vector<32x8xf32>, vector<24x8xf32> -> vector<24x8xf32>
    %91 = vector.broadcast %3 : vector<1x8xf32> to vector<24x8xf32>
    %92 = arith.addf %90, %91 : vector<24x8xf32>
    %93 = vector.extract_strided_slice %0 {offsets = [0, 0], sizes = [8, 32], strides = [1, 1]} : vector<16x32xf32> to vector<8x32xf32>
    %cst_113 = arith.constant dense<0.000000e+00> : vector<24x32xf32>
    %94 = tpu.matmul %76, %93, %cst_113 {dimension_numbers = #tpu.dot_dimension_numbers<[1], [0], [0], [1], [0, 0, 1, 1], [], []>} : vector<24x8xf32>, vector<8x32xf32>, vector<24x32xf32> -> vector<24x32xf32>
    %95 = vector.extract_strided_slice %0 {offsets = [8, 0], sizes = [8, 32], strides = [1, 1]} : vector<16x32xf32> to vector<8x32xf32>
    %cst_114 = arith.constant dense<0.000000e+00> : vector<24x32xf32>
    %96 = tpu.matmul %77, %95, %cst_114 {dimension_numbers = #tpu.dot_dimension_numbers<[1], [0], [0], [1], [0, 0, 1, 1], [], []>} : vector<24x8xf32>, vector<8x32xf32>, vector<24x32xf32> -> vector<24x32xf32>
    %97 = arith.addf %94, %96 : vector<24x32xf32>
    %98 = vector.broadcast %1 : vector<1x32xf32> to vector<24x32xf32>
    %99 = arith.addf %97, %98 : vector<24x32xf32>
    %cst_115 = arith.constant 0.000000e+00 : f32
    %100 = vector.broadcast %cst_115 : f32 to vector<24x32xf32>
    %101 = arith.cmpf ogt, %99, %100 : vector<24x32xf32>
    %cst_116 = arith.constant 0.00999999977 : f32
    %102 = vector.broadcast %cst_116 : f32 to vector<24x32xf32>
    %103 = arith.mulf %102, %99 : vector<24x32xf32>
    %104 = arith.select %101, %99, %103 : vector<24x32xi1>, vector<24x32xf32>
    %cst_117 = arith.constant dense<0.000000e+00> : vector<24x8xf32>
    %105 = tpu.matmul %104, %2, %cst_117 {dimension_numbers = #tpu.dot_dimension_numbers<[1], [0], [0], [1], [0, 0, 1, 1], [], []>} : vector<24x32xf32>, vector<32x8xf32>, vector<24x8xf32> -> vector<24x8xf32>
    %106 = vector.broadcast %3 : vector<1x8xf32> to vector<24x8xf32>
    %107 = arith.addf %105, %106 : vector<24x8xf32>
    %cst_118 = arith.constant dense<0.000000e+00> : vector<16x8xf32>
    %108 = tpu.matmul %69, %92, %cst_118 {dimension_numbers = #tpu.dot_dimension_numbers<[1], [0], [0], [1], [0, 0, 1, 1], [], []>} : vector<16x24xf32>, vector<24x8xf32>, vector<16x8xf32> -> vector<16x8xf32>
    %cst_119 = arith.constant dense<0.000000e+00> : vector<16x8xf32>
    %109 = tpu.matmul %65, %107, %cst_119 {dimension_numbers = #tpu.dot_dimension_numbers<[1], [0], [0], [1], [0, 0, 1, 1], [], []>} : vector<16x24xf32>, vector<24x8xf32>, vector<16x8xf32> -> vector<16x8xf32>
    %110 = arith.addf %108, %109 : vector<16x8xf32>
    %111 = vector.broadcast %74 : vector<16x1xf32> to vector<16x8xf32>
    %112 = arith.divf %110, %111 : vector<16x8xf32>
    %c0_120 = arith.constant 0 : index
    %c0_121 = arith.constant 0 : index
    %113 = vector.load %arg5[%c0_120, %c0_121] : memref<24x1xf32, #tpu.memory_space<vmem>>, vector<24x1xf32>
    %cst_122 = arith.constant dense<0.000000e+00> : vector<24x8xf32>
    %114 = tpu.matmul %56, %112, %cst_122 {dimension_numbers = #tpu.dot_dimension_numbers<[1], [0], [0], [1], [0, 0, 1, 1], [], []>} : vector<24x16xf32>, vector<16x8xf32>, vector<24x8xf32> -> vector<24x8xf32>
    %cst_123 = arith.constant dense<0.000000e+00> : vector<24x8xf32>
    %115 = tpu.matmul %60, %112, %cst_123 {dimension_numbers = #tpu.dot_dimension_numbers<[1], [0], [0], [1], [0, 0, 1, 1], [], []>} : vector<24x16xf32>, vector<16x8xf32>, vector<24x8xf32> -> vector<24x8xf32>
    %116 = vector.extract_strided_slice %12 {offsets = [0, 0], sizes = [8, 32], strides = [1, 1]} : vector<16x32xf32> to vector<8x32xf32>
    %cst_124 = arith.constant dense<0.000000e+00> : vector<24x32xf32>
    %117 = tpu.matmul %114, %116, %cst_124 {dimension_numbers = #tpu.dot_dimension_numbers<[1], [0], [0], [1], [0, 0, 1, 1], [], []>} : vector<24x8xf32>, vector<8x32xf32>, vector<24x32xf32> -> vector<24x32xf32>
    %118 = vector.extract_strided_slice %12 {offsets = [8, 0], sizes = [8, 32], strides = [1, 1]} : vector<16x32xf32> to vector<8x32xf32>
    %cst_125 = arith.constant dense<0.000000e+00> : vector<24x32xf32>
    %119 = tpu.matmul %115, %118, %cst_125 {dimension_numbers = #tpu.dot_dimension_numbers<[1], [0], [0], [1], [0, 0, 1, 1], [], []>} : vector<24x8xf32>, vector<8x32xf32>, vector<24x32xf32> -> vector<24x32xf32>
    %120 = arith.addf %117, %119 : vector<24x32xf32>
    %121 = vector.broadcast %13 : vector<1x32xf32> to vector<24x32xf32>
    %122 = arith.addf %120, %121 : vector<24x32xf32>
    %cst_126 = arith.constant 0.000000e+00 : f32
    %123 = vector.broadcast %cst_126 : f32 to vector<24x32xf32>
    %124 = arith.cmpf ogt, %122, %123 : vector<24x32xf32>
    %cst_127 = arith.constant 0.00999999977 : f32
    %125 = vector.broadcast %cst_127 : f32 to vector<24x32xf32>
    %126 = arith.mulf %125, %122 : vector<24x32xf32>
    %127 = arith.select %124, %122, %126 : vector<24x32xi1>, vector<24x32xf32>
    %cst_128 = arith.constant dense<0.000000e+00> : vector<24x8xf32>
    %128 = tpu.matmul %127, %14, %cst_128 {dimension_numbers = #tpu.dot_dimension_numbers<[1], [0], [0], [1], [0, 0, 1, 1], [], []>} : vector<24x32xf32>, vector<32x8xf32>, vector<24x8xf32> -> vector<24x8xf32>
    %129 = vector.broadcast %15 : vector<1x8xf32> to vector<24x8xf32>
    %130 = arith.addf %128, %129 : vector<24x8xf32>
    %131 = vector.extract_strided_slice %12 {offsets = [0, 0], sizes = [8, 32], strides = [1, 1]} : vector<16x32xf32> to vector<8x32xf32>
    %cst_129 = arith.constant dense<0.000000e+00> : vector<24x32xf32>
    %132 = tpu.matmul %115, %131, %cst_129 {dimension_numbers = #tpu.dot_dimension_numbers<[1], [0], [0], [1], [0, 0, 1, 1], [], []>} : vector<24x8xf32>, vector<8x32xf32>, vector<24x32xf32> -> vector<24x32xf32>
    %133 = vector.extract_strided_slice %12 {offsets = [8, 0], sizes = [8, 32], strides = [1, 1]} : vector<16x32xf32> to vector<8x32xf32>
    %cst_130 = arith.constant dense<0.000000e+00> : vector<24x32xf32>
    %134 = tpu.matmul %114, %133, %cst_130 {dimension_numbers = #tpu.dot_dimension_numbers<[1], [0], [0], [1], [0, 0, 1, 1], [], []>} : vector<24x8xf32>, vector<8x32xf32>, vector<24x32xf32> -> vector<24x32xf32>
    %135 = arith.addf %132, %134 : vector<24x32xf32>
    %136 = vector.broadcast %13 : vector<1x32xf32> to vector<24x32xf32>
    %137 = arith.addf %135, %136 : vector<24x32xf32>
    %cst_131 = arith.constant 0.000000e+00 : f32
    %138 = vector.broadcast %cst_131 : f32 to vector<24x32xf32>
    %139 = arith.cmpf ogt, %137, %138 : vector<24x32xf32>
    %cst_132 = arith.constant 0.00999999977 : f32
    %140 = vector.broadcast %cst_132 : f32 to vector<24x32xf32>
    %141 = arith.mulf %140, %137 : vector<24x32xf32>
    %142 = arith.select %139, %137, %141 : vector<24x32xi1>, vector<24x32xf32>
    %cst_133 = arith.constant dense<0.000000e+00> : vector<24x8xf32>
    %143 = tpu.matmul %142, %14, %cst_133 {dimension_numbers = #tpu.dot_dimension_numbers<[1], [0], [0], [1], [0, 0, 1, 1], [], []>} : vector<24x32xf32>, vector<32x8xf32>, vector<24x8xf32> -> vector<24x8xf32>
    %144 = vector.broadcast %15 : vector<1x8xf32> to vector<24x8xf32>
    %145 = arith.addf %143, %144 : vector<24x8xf32>
    %146 = arith.subf %130, %145 : vector<24x8xf32>
    %147 = arith.mulf %146, %146 : vector<24x8xf32>
    %cst_134 = arith.constant dense<0.000000e+00> : vector<24xf32>
    %148 = vector.multi_reduction <add>, %147, %cst_134 [1] : vector<24x8xf32> to vector<24xf32>
    %149 = vector.shape_cast %148 : vector<24xf32> to vector<24x1xf32>
    %cst_135 = arith.constant dense<0.000000e+00> : vector<1xf32>
    %150 = vector.multi_reduction <add>, %149, %cst_135 [0] : vector<24x1xf32> to vector<1xf32>
    %151 = vector.shape_cast %150 : vector<1xf32> to vector<1x1xf32>
    %cst_136 = arith.constant 0.00520833349 : f32
    %152 = vector.broadcast %cst_136 : f32 to vector<1x1xf32>
    %153 = arith.mulf %151, %152 : vector<1x1xf32>
    %154 = arith.addf %130, %145 : vector<24x8xf32>
    %cst_137 = arith.constant 5.000000e-01 : f32
    %155 = vector.broadcast %cst_137 : f32 to vector<24x8xf32>
    %156 = arith.mulf %155, %154 : vector<24x8xf32>
    %cst_138 = arith.constant dense<0.000000e+00> : vector<24x16xf32>
    %157 = tpu.matmul %113, %16, %cst_138 {dimension_numbers = #tpu.dot_dimension_numbers<[1], [0], [0], [1], [0, 0, 1, 1], [], []>} : vector<24x1xf32>, vector<1x16xf32>, vector<24x16xf32> -> vector<24x16xf32>
    %158 = vector.broadcast %17 : vector<1x16xf32> to vector<24x16xf32>
    %159 = arith.addf %157, %158 : vector<24x16xf32>
    %cst_139 = arith.constant 0.000000e+00 : f32
    %160 = vector.broadcast %cst_139 : f32 to vector<24x16xf32>
    %161 = arith.cmpf ogt, %159, %160 : vector<24x16xf32>
    %cst_140 = arith.constant 0.00999999977 : f32
    %162 = vector.broadcast %cst_140 : f32 to vector<24x16xf32>
    %163 = arith.mulf %162, %159 : vector<24x16xf32>
    %164 = arith.select %161, %159, %163 : vector<24x16xi1>, vector<24x16xf32>
    %cst_141 = arith.constant dense<0.000000e+00> : vector<24x8xf32>
    %165 = tpu.matmul %164, %18, %cst_141 {dimension_numbers = #tpu.dot_dimension_numbers<[1], [0], [0], [1], [0, 0, 1, 1], [], []>} : vector<24x16xf32>, vector<16x8xf32>, vector<24x8xf32> -> vector<24x8xf32>
    %166 = vector.broadcast %19 : vector<1x8xf32> to vector<24x8xf32>
    %167 = arith.addf %165, %166 : vector<24x8xf32>
    %168 = vector.extract_strided_slice %20 {offsets = [0, 0], sizes = [8, 32], strides = [1, 1]} : vector<16x32xf32> to vector<8x32xf32>
    %cst_142 = arith.constant dense<0.000000e+00> : vector<24x32xf32>
    %169 = tpu.matmul %156, %168, %cst_142 {dimension_numbers = #tpu.dot_dimension_numbers<[1], [0], [0], [1], [0, 0, 1, 1], [], []>} : vector<24x8xf32>, vector<8x32xf32>, vector<24x32xf32> -> vector<24x32xf32>
    %170 = vector.extract_strided_slice %20 {offsets = [8, 0], sizes = [8, 32], strides = [1, 1]} : vector<16x32xf32> to vector<8x32xf32>
    %cst_143 = arith.constant dense<0.000000e+00> : vector<24x32xf32>
    %171 = tpu.matmul %167, %170, %cst_143 {dimension_numbers = #tpu.dot_dimension_numbers<[1], [0], [0], [1], [0, 0, 1, 1], [], []>} : vector<24x8xf32>, vector<8x32xf32>, vector<24x32xf32> -> vector<24x32xf32>
    %172 = arith.addf %169, %171 : vector<24x32xf32>
    %173 = vector.broadcast %21 : vector<1x32xf32> to vector<24x32xf32>
    %174 = arith.addf %172, %173 : vector<24x32xf32>
    %cst_144 = arith.constant 0.000000e+00 : f32
    %175 = vector.broadcast %cst_144 : f32 to vector<24x32xf32>
    %176 = arith.cmpf ogt, %174, %175 : vector<24x32xf32>
    %cst_145 = arith.constant 0.00999999977 : f32
    %177 = vector.broadcast %cst_145 : f32 to vector<24x32xf32>
    %178 = arith.mulf %177, %174 : vector<24x32xf32>
    %179 = arith.select %176, %174, %178 : vector<24x32xi1>, vector<24x32xf32>
    %cst_146 = arith.constant dense<0.000000e+00> : vector<24x8xf32>
    %180 = tpu.matmul %179, %22, %cst_146 {dimension_numbers = #tpu.dot_dimension_numbers<[1], [0], [0], [1], [0, 0, 1, 1], [], []>} : vector<24x32xf32>, vector<32x8xf32>, vector<24x8xf32> -> vector<24x8xf32>
    %181 = vector.broadcast %23 : vector<1x8xf32> to vector<24x8xf32>
    %182 = arith.addf %180, %181 : vector<24x8xf32>
    %cst_147 = arith.constant dense<0.000000e+00> : vector<24x8xf32>
    %183 = tpu.matmul %56, %112, %cst_147 {dimension_numbers = #tpu.dot_dimension_numbers<[1], [0], [0], [1], [0, 0, 1, 1], [], []>} : vector<24x16xf32>, vector<16x8xf32>, vector<24x8xf32> -> vector<24x8xf32>
    %cst_148 = arith.constant dense<0.000000e+00> : vector<24x8xf32>
    %184 = tpu.matmul %60, %112, %cst_148 {dimension_numbers = #tpu.dot_dimension_numbers<[1], [0], [0], [1], [0, 0, 1, 1], [], []>} : vector<24x16xf32>, vector<16x8xf32>, vector<24x8xf32> -> vector<24x8xf32>
    %185 = vector.extract_strided_slice %4 {offsets = [0, 0], sizes = [8, 32], strides = [1, 1]} : vector<16x32xf32> to vector<8x32xf32>
    %cst_149 = arith.constant dense<0.000000e+00> : vector<24x32xf32>
    %186 = tpu.matmul %184, %185, %cst_149 {dimension_numbers = #tpu.dot_dimension_numbers<[1], [0], [0], [1], [0, 0, 1, 1], [], []>} : vector<24x8xf32>, vector<8x32xf32>, vector<24x32xf32> -> vector<24x32xf32>
    %187 = vector.extract_strided_slice %4 {offsets = [8, 0], sizes = [8, 32], strides = [1, 1]} : vector<16x32xf32> to vector<8x32xf32>
    %cst_150 = arith.constant dense<0.000000e+00> : vector<24x32xf32>
    %188 = tpu.matmul %183, %187, %cst_150 {dimension_numbers = #tpu.dot_dimension_numbers<[1], [0], [0], [1], [0, 0, 1, 1], [], []>} : vector<24x8xf32>, vector<8x32xf32>, vector<24x32xf32> -> vector<24x32xf32>
    %189 = arith.addf %186, %188 : vector<24x32xf32>
    %190 = vector.broadcast %5 : vector<1x32xf32> to vector<24x32xf32>
    %191 = arith.addf %189, %190 : vector<24x32xf32>
    %cst_151 = arith.constant 0.000000e+00 : f32
    %192 = vector.broadcast %cst_151 : f32 to vector<24x32xf32>
    %193 = arith.cmpf ogt, %191, %192 : vector<24x32xf32>
    %cst_152 = arith.constant 0.00999999977 : f32
    %194 = vector.broadcast %cst_152 : f32 to vector<24x32xf32>
    %195 = arith.mulf %194, %191 : vector<24x32xf32>
    %196 = arith.select %193, %191, %195 : vector<24x32xi1>, vector<24x32xf32>
    %cst_153 = arith.constant dense<0.000000e+00> : vector<24x8xf32>
    %197 = tpu.matmul %196, %6, %cst_153 {dimension_numbers = #tpu.dot_dimension_numbers<[1], [0], [0], [1], [0, 0, 1, 1], [], []>} : vector<24x32xf32>, vector<32x8xf32>, vector<24x8xf32> -> vector<24x8xf32>
    %198 = vector.broadcast %7 : vector<1x8xf32> to vector<24x8xf32>
    %199 = arith.addf %197, %198 : vector<24x8xf32>
    %200 = vector.extract_strided_slice %4 {offsets = [0, 0], sizes = [8, 32], strides = [1, 1]} : vector<16x32xf32> to vector<8x32xf32>
    %cst_154 = arith.constant dense<0.000000e+00> : vector<24x32xf32>
    %201 = tpu.matmul %183, %200, %cst_154 {dimension_numbers = #tpu.dot_dimension_numbers<[1], [0], [0], [1], [0, 0, 1, 1], [], []>} : vector<24x8xf32>, vector<8x32xf32>, vector<24x32xf32> -> vector<24x32xf32>
    %202 = vector.extract_strided_slice %4 {offsets = [8, 0], sizes = [8, 32], strides = [1, 1]} : vector<16x32xf32> to vector<8x32xf32>
    %cst_155 = arith.constant dense<0.000000e+00> : vector<24x32xf32>
    %203 = tpu.matmul %184, %202, %cst_155 {dimension_numbers = #tpu.dot_dimension_numbers<[1], [0], [0], [1], [0, 0, 1, 1], [], []>} : vector<24x8xf32>, vector<8x32xf32>, vector<24x32xf32> -> vector<24x32xf32>
    %204 = arith.addf %201, %203 : vector<24x32xf32>
    %205 = vector.broadcast %5 : vector<1x32xf32> to vector<24x32xf32>
    %206 = arith.addf %204, %205 : vector<24x32xf32>
    %cst_156 = arith.constant 0.000000e+00 : f32
    %207 = vector.broadcast %cst_156 : f32 to vector<24x32xf32>
    %208 = arith.cmpf ogt, %206, %207 : vector<24x32xf32>
    %cst_157 = arith.constant 0.00999999977 : f32
    %209 = vector.broadcast %cst_157 : f32 to vector<24x32xf32>
    %210 = arith.mulf %209, %206 : vector<24x32xf32>
    %211 = arith.select %208, %206, %210 : vector<24x32xi1>, vector<24x32xf32>
    %cst_158 = arith.constant dense<0.000000e+00> : vector<24x8xf32>
    %212 = tpu.matmul %211, %6, %cst_158 {dimension_numbers = #tpu.dot_dimension_numbers<[1], [0], [0], [1], [0, 0, 1, 1], [], []>} : vector<24x32xf32>, vector<32x8xf32>, vector<24x8xf32> -> vector<24x8xf32>
    %213 = vector.broadcast %7 : vector<1x8xf32> to vector<24x8xf32>
    %214 = arith.addf %212, %213 : vector<24x8xf32>
    %cst_159 = arith.constant dense<0.000000e+00> : vector<16x8xf32>
    %215 = tpu.matmul %69, %199, %cst_159 {dimension_numbers = #tpu.dot_dimension_numbers<[1], [0], [0], [1], [0, 0, 1, 1], [], []>} : vector<16x24xf32>, vector<24x8xf32>, vector<16x8xf32> -> vector<16x8xf32>
    %cst_160 = arith.constant dense<0.000000e+00> : vector<16x8xf32>
    %216 = tpu.matmul %65, %214, %cst_160 {dimension_numbers = #tpu.dot_dimension_numbers<[1], [0], [0], [1], [0, 0, 1, 1], [], []>} : vector<16x24xf32>, vector<24x8xf32>, vector<16x8xf32> -> vector<16x8xf32>
    %217 = arith.addf %215, %216 : vector<16x8xf32>
    %218 = vector.broadcast %74 : vector<16x1xf32> to vector<16x8xf32>
    %219 = arith.divf %217, %218 : vector<16x8xf32>
    %220 = arith.addf %112, %219 : vector<16x8xf32>
    %cst_161 = arith.constant dense<0.000000e+00> : vector<24x8xf32>
    %221 = tpu.matmul %56, %220, %cst_161 {dimension_numbers = #tpu.dot_dimension_numbers<[1], [0], [0], [1], [0, 0, 1, 1], [], []>} : vector<24x16xf32>, vector<16x8xf32>, vector<24x8xf32> -> vector<24x8xf32>
    %cst_162 = arith.constant dense<0.000000e+00> : vector<24x8xf32>
    %222 = tpu.matmul %60, %220, %cst_162 {dimension_numbers = #tpu.dot_dimension_numbers<[1], [0], [0], [1], [0, 0, 1, 1], [], []>} : vector<24x16xf32>, vector<16x8xf32>, vector<24x8xf32> -> vector<24x8xf32>
    %223 = vector.extract_strided_slice %24 {offsets = [0, 0], sizes = [8, 32], strides = [1, 1]} : vector<16x32xf32> to vector<8x32xf32>
    %cst_163 = arith.constant dense<0.000000e+00> : vector<24x32xf32>
    %224 = tpu.matmul %221, %223, %cst_163 {dimension_numbers = #tpu.dot_dimension_numbers<[1], [0], [0], [1], [0, 0, 1, 1], [], []>} : vector<24x8xf32>, vector<8x32xf32>, vector<24x32xf32> -> vector<24x32xf32>
    %225 = vector.extract_strided_slice %24 {offsets = [8, 0], sizes = [8, 32], strides = [1, 1]} : vector<16x32xf32> to vector<8x32xf32>
    %cst_164 = arith.constant dense<0.000000e+00> : vector<24x32xf32>
    %226 = tpu.matmul %222, %225, %cst_164 {dimension_numbers = #tpu.dot_dimension_numbers<[1], [0], [0], [1], [0, 0, 1, 1], [], []>} : vector<24x8xf32>, vector<8x32xf32>, vector<24x32xf32> -> vector<24x32xf32>
    %227 = arith.addf %224, %226 : vector<24x32xf32>
    %228 = vector.broadcast %25 : vector<1x32xf32> to vector<24x32xf32>
    %229 = arith.addf %227, %228 : vector<24x32xf32>
    %cst_165 = arith.constant 0.000000e+00 : f32
    %230 = vector.broadcast %cst_165 : f32 to vector<24x32xf32>
    %231 = arith.cmpf ogt, %229, %230 : vector<24x32xf32>
    %cst_166 = arith.constant 0.00999999977 : f32
    %232 = vector.broadcast %cst_166 : f32 to vector<24x32xf32>
    %233 = arith.mulf %232, %229 : vector<24x32xf32>
    %234 = arith.select %231, %229, %233 : vector<24x32xi1>, vector<24x32xf32>
    %cst_167 = arith.constant dense<0.000000e+00> : vector<24x8xf32>
    %235 = tpu.matmul %234, %26, %cst_167 {dimension_numbers = #tpu.dot_dimension_numbers<[1], [0], [0], [1], [0, 0, 1, 1], [], []>} : vector<24x32xf32>, vector<32x8xf32>, vector<24x8xf32> -> vector<24x8xf32>
    %236 = vector.broadcast %27 : vector<1x8xf32> to vector<24x8xf32>
    %237 = arith.addf %235, %236 : vector<24x8xf32>
    %238 = vector.extract_strided_slice %24 {offsets = [0, 0], sizes = [8, 32], strides = [1, 1]} : vector<16x32xf32> to vector<8x32xf32>
    %cst_168 = arith.constant dense<0.000000e+00> : vector<24x32xf32>
    %239 = tpu.matmul %222, %238, %cst_168 {dimension_numbers = #tpu.dot_dimension_numbers<[1], [0], [0], [1], [0, 0, 1, 1], [], []>} : vector<24x8xf32>, vector<8x32xf32>, vector<24x32xf32> -> vector<24x32xf32>
    %240 = vector.extract_strided_slice %24 {offsets = [8, 0], sizes = [8, 32], strides = [1, 1]} : vector<16x32xf32> to vector<8x32xf32>
    %cst_169 = arith.constant dense<0.000000e+00> : vector<24x32xf32>
    %241 = tpu.matmul %221, %240, %cst_169 {dimension_numbers = #tpu.dot_dimension_numbers<[1], [0], [0], [1], [0, 0, 1, 1], [], []>} : vector<24x8xf32>, vector<8x32xf32>, vector<24x32xf32> -> vector<24x32xf32>
    %242 = arith.addf %239, %241 : vector<24x32xf32>
    %243 = vector.broadcast %25 : vector<1x32xf32> to vector<24x32xf32>
    %244 = arith.addf %242, %243 : vector<24x32xf32>
    %cst_170 = arith.constant 0.000000e+00 : f32
    %245 = vector.broadcast %cst_170 : f32 to vector<24x32xf32>
    %246 = arith.cmpf ogt, %244, %245 : vector<24x32xf32>
    %cst_171 = arith.constant 0.00999999977 : f32
    %247 = vector.broadcast %cst_171 : f32 to vector<24x32xf32>
    %248 = arith.mulf %247, %244 : vector<24x32xf32>
    %249 = arith.select %246, %244, %248 : vector<24x32xi1>, vector<24x32xf32>
    %cst_172 = arith.constant dense<0.000000e+00> : vector<24x8xf32>
    %250 = tpu.matmul %249, %26, %cst_172 {dimension_numbers = #tpu.dot_dimension_numbers<[1], [0], [0], [1], [0, 0, 1, 1], [], []>} : vector<24x32xf32>, vector<32x8xf32>, vector<24x8xf32> -> vector<24x8xf32>
    %251 = vector.broadcast %27 : vector<1x8xf32> to vector<24x8xf32>
    %252 = arith.addf %250, %251 : vector<24x8xf32>
    %253 = arith.subf %237, %252 : vector<24x8xf32>
    %254 = arith.mulf %253, %253 : vector<24x8xf32>
    %cst_173 = arith.constant dense<0.000000e+00> : vector<24xf32>
    %255 = vector.multi_reduction <add>, %254, %cst_173 [1] : vector<24x8xf32> to vector<24xf32>
    %256 = vector.shape_cast %255 : vector<24xf32> to vector<24x1xf32>
    %cst_174 = arith.constant dense<0.000000e+00> : vector<1xf32>
    %257 = vector.multi_reduction <add>, %256, %cst_174 [0] : vector<24x1xf32> to vector<1xf32>
    %258 = vector.shape_cast %257 : vector<1xf32> to vector<1x1xf32>
    %cst_175 = arith.constant 0.00520833349 : f32
    %259 = vector.broadcast %cst_175 : f32 to vector<1x1xf32>
    %260 = arith.mulf %258, %259 : vector<1x1xf32>
    %261 = arith.addf %237, %252 : vector<24x8xf32>
    %cst_176 = arith.constant 5.000000e-01 : f32
    %262 = vector.broadcast %cst_176 : f32 to vector<24x8xf32>
    %263 = arith.mulf %262, %261 : vector<24x8xf32>
    %cst_177 = arith.constant dense<0.000000e+00> : vector<24x16xf32>
    %264 = tpu.matmul %182, %28, %cst_177 {dimension_numbers = #tpu.dot_dimension_numbers<[1], [0], [0], [1], [0, 0, 1, 1], [], []>} : vector<24x8xf32>, vector<8x16xf32>, vector<24x16xf32> -> vector<24x16xf32>
    %265 = vector.broadcast %29 : vector<1x16xf32> to vector<24x16xf32>
    %266 = arith.addf %264, %265 : vector<24x16xf32>
    %cst_178 = arith.constant 0.000000e+00 : f32
    %267 = vector.broadcast %cst_178 : f32 to vector<24x16xf32>
    %268 = arith.cmpf ogt, %266, %267 : vector<24x16xf32>
    %cst_179 = arith.constant 0.00999999977 : f32
    %269 = vector.broadcast %cst_179 : f32 to vector<24x16xf32>
    %270 = arith.mulf %269, %266 : vector<24x16xf32>
    %271 = arith.select %268, %266, %270 : vector<24x16xi1>, vector<24x16xf32>
    %cst_180 = arith.constant dense<0.000000e+00> : vector<24x8xf32>
    %272 = tpu.matmul %271, %30, %cst_180 {dimension_numbers = #tpu.dot_dimension_numbers<[1], [0], [0], [1], [0, 0, 1, 1], [], []>} : vector<24x16xf32>, vector<16x8xf32>, vector<24x8xf32> -> vector<24x8xf32>
    %273 = vector.broadcast %31 : vector<1x8xf32> to vector<24x8xf32>
    %274 = arith.addf %272, %273 : vector<24x8xf32>
    %275 = vector.extract_strided_slice %32 {offsets = [0, 0], sizes = [8, 32], strides = [1, 1]} : vector<16x32xf32> to vector<8x32xf32>
    %cst_181 = arith.constant dense<0.000000e+00> : vector<24x32xf32>
    %276 = tpu.matmul %263, %275, %cst_181 {dimension_numbers = #tpu.dot_dimension_numbers<[1], [0], [0], [1], [0, 0, 1, 1], [], []>} : vector<24x8xf32>, vector<8x32xf32>, vector<24x32xf32> -> vector<24x32xf32>
    %277 = vector.extract_strided_slice %32 {offsets = [8, 0], sizes = [8, 32], strides = [1, 1]} : vector<16x32xf32> to vector<8x32xf32>
    %cst_182 = arith.constant dense<0.000000e+00> : vector<24x32xf32>
    %278 = tpu.matmul %274, %277, %cst_182 {dimension_numbers = #tpu.dot_dimension_numbers<[1], [0], [0], [1], [0, 0, 1, 1], [], []>} : vector<24x8xf32>, vector<8x32xf32>, vector<24x32xf32> -> vector<24x32xf32>
    %279 = arith.addf %276, %278 : vector<24x32xf32>
    %280 = vector.broadcast %33 : vector<1x32xf32> to vector<24x32xf32>
    %281 = arith.addf %279, %280 : vector<24x32xf32>
    %cst_183 = arith.constant 0.000000e+00 : f32
    %282 = vector.broadcast %cst_183 : f32 to vector<24x32xf32>
    %283 = arith.cmpf ogt, %281, %282 : vector<24x32xf32>
    %cst_184 = arith.constant 0.00999999977 : f32
    %284 = vector.broadcast %cst_184 : f32 to vector<24x32xf32>
    %285 = arith.mulf %284, %281 : vector<24x32xf32>
    %286 = arith.select %283, %281, %285 : vector<24x32xi1>, vector<24x32xf32>
    %cst_185 = arith.constant dense<0.000000e+00> : vector<24x8xf32>
    %287 = tpu.matmul %286, %34, %cst_185 {dimension_numbers = #tpu.dot_dimension_numbers<[1], [0], [0], [1], [0, 0, 1, 1], [], []>} : vector<24x32xf32>, vector<32x8xf32>, vector<24x8xf32> -> vector<24x8xf32>
    %288 = vector.broadcast %35 : vector<1x8xf32> to vector<24x8xf32>
    %289 = arith.addf %287, %288 : vector<24x8xf32>
    %290 = arith.addf %289, %182 : vector<24x8xf32>
    %cst_186 = arith.constant dense<0.000000e+00> : vector<24x8xf32>
    %291 = tpu.matmul %56, %220, %cst_186 {dimension_numbers = #tpu.dot_dimension_numbers<[1], [0], [0], [1], [0, 0, 1, 1], [], []>} : vector<24x16xf32>, vector<16x8xf32>, vector<24x8xf32> -> vector<24x8xf32>
    %cst_187 = arith.constant dense<0.000000e+00> : vector<24x8xf32>
    %292 = tpu.matmul %60, %220, %cst_187 {dimension_numbers = #tpu.dot_dimension_numbers<[1], [0], [0], [1], [0, 0, 1, 1], [], []>} : vector<24x16xf32>, vector<16x8xf32>, vector<24x8xf32> -> vector<24x8xf32>
    %293 = vector.extract_strided_slice %8 {offsets = [0, 0], sizes = [8, 32], strides = [1, 1]} : vector<16x32xf32> to vector<8x32xf32>
    %cst_188 = arith.constant dense<0.000000e+00> : vector<24x32xf32>
    %294 = tpu.matmul %292, %293, %cst_188 {dimension_numbers = #tpu.dot_dimension_numbers<[1], [0], [0], [1], [0, 0, 1, 1], [], []>} : vector<24x8xf32>, vector<8x32xf32>, vector<24x32xf32> -> vector<24x32xf32>
    %295 = vector.extract_strided_slice %8 {offsets = [8, 0], sizes = [8, 32], strides = [1, 1]} : vector<16x32xf32> to vector<8x32xf32>
    %cst_189 = arith.constant dense<0.000000e+00> : vector<24x32xf32>
    %296 = tpu.matmul %291, %295, %cst_189 {dimension_numbers = #tpu.dot_dimension_numbers<[1], [0], [0], [1], [0, 0, 1, 1], [], []>} : vector<24x8xf32>, vector<8x32xf32>, vector<24x32xf32> -> vector<24x32xf32>
    %297 = arith.addf %294, %296 : vector<24x32xf32>
    %298 = vector.broadcast %9 : vector<1x32xf32> to vector<24x32xf32>
    %299 = arith.addf %297, %298 : vector<24x32xf32>
    %cst_190 = arith.constant 0.000000e+00 : f32
    %300 = vector.broadcast %cst_190 : f32 to vector<24x32xf32>
    %301 = arith.cmpf ogt, %299, %300 : vector<24x32xf32>
    %cst_191 = arith.constant 0.00999999977 : f32
    %302 = vector.broadcast %cst_191 : f32 to vector<24x32xf32>
    %303 = arith.mulf %302, %299 : vector<24x32xf32>
    %304 = arith.select %301, %299, %303 : vector<24x32xi1>, vector<24x32xf32>
    %cst_192 = arith.constant dense<0.000000e+00> : vector<24x8xf32>
    %305 = tpu.matmul %304, %10, %cst_192 {dimension_numbers = #tpu.dot_dimension_numbers<[1], [0], [0], [1], [0, 0, 1, 1], [], []>} : vector<24x32xf32>, vector<32x8xf32>, vector<24x8xf32> -> vector<24x8xf32>
    %306 = vector.broadcast %11 : vector<1x8xf32> to vector<24x8xf32>
    %307 = arith.addf %305, %306 : vector<24x8xf32>
    %308 = vector.extract_strided_slice %8 {offsets = [0, 0], sizes = [8, 32], strides = [1, 1]} : vector<16x32xf32> to vector<8x32xf32>
    %cst_193 = arith.constant dense<0.000000e+00> : vector<24x32xf32>
    %309 = tpu.matmul %291, %308, %cst_193 {dimension_numbers = #tpu.dot_dimension_numbers<[1], [0], [0], [1], [0, 0, 1, 1], [], []>} : vector<24x8xf32>, vector<8x32xf32>, vector<24x32xf32> -> vector<24x32xf32>
    %310 = vector.extract_strided_slice %8 {offsets = [8, 0], sizes = [8, 32], strides = [1, 1]} : vector<16x32xf32> to vector<8x32xf32>
    %cst_194 = arith.constant dense<0.000000e+00> : vector<24x32xf32>
    %311 = tpu.matmul %292, %310, %cst_194 {dimension_numbers = #tpu.dot_dimension_numbers<[1], [0], [0], [1], [0, 0, 1, 1], [], []>} : vector<24x8xf32>, vector<8x32xf32>, vector<24x32xf32> -> vector<24x32xf32>
    %312 = arith.addf %309, %311 : vector<24x32xf32>
    %313 = vector.broadcast %9 : vector<1x32xf32> to vector<24x32xf32>
    %314 = arith.addf %312, %313 : vector<24x32xf32>
    %cst_195 = arith.constant 0.000000e+00 : f32
    %315 = vector.broadcast %cst_195 : f32 to vector<24x32xf32>
    %316 = arith.cmpf ogt, %314, %315 : vector<24x32xf32>
    %cst_196 = arith.constant 0.00999999977 : f32
    %317 = vector.broadcast %cst_196 : f32 to vector<24x32xf32>
    %318 = arith.mulf %317, %314 : vector<24x32xf32>
    %319 = arith.select %316, %314, %318 : vector<24x32xi1>, vector<24x32xf32>
    %cst_197 = arith.constant dense<0.000000e+00> : vector<24x8xf32>
    %320 = tpu.matmul %319, %10, %cst_197 {dimension_numbers = #tpu.dot_dimension_numbers<[1], [0], [0], [1], [0, 0, 1, 1], [], []>} : vector<24x32xf32>, vector<32x8xf32>, vector<24x8xf32> -> vector<24x8xf32>
    %321 = vector.broadcast %11 : vector<1x8xf32> to vector<24x8xf32>
    %322 = arith.addf %320, %321 : vector<24x8xf32>
    %cst_198 = arith.constant dense<0.000000e+00> : vector<16x8xf32>
    %323 = tpu.matmul %69, %307, %cst_198 {dimension_numbers = #tpu.dot_dimension_numbers<[1], [0], [0], [1], [0, 0, 1, 1], [], []>} : vector<16x24xf32>, vector<24x8xf32>, vector<16x8xf32> -> vector<16x8xf32>
    %cst_199 = arith.constant dense<0.000000e+00> : vector<16x8xf32>
    %324 = tpu.matmul %65, %322, %cst_199 {dimension_numbers = #tpu.dot_dimension_numbers<[1], [0], [0], [1], [0, 0, 1, 1], [], []>} : vector<16x24xf32>, vector<24x8xf32>, vector<16x8xf32> -> vector<16x8xf32>
    %325 = arith.addf %323, %324 : vector<16x8xf32>
    %326 = vector.broadcast %74 : vector<16x1xf32> to vector<16x8xf32>
    %327 = arith.divf %325, %326 : vector<16x8xf32>
    %328 = arith.addf %220, %327 : vector<16x8xf32>
    %cst_200 = arith.constant dense<0.000000e+00> : vector<24x8xf32>
    %329 = tpu.matmul %56, %328, %cst_200 {dimension_numbers = #tpu.dot_dimension_numbers<[1], [0], [0], [1], [0, 0, 1, 1], [], []>} : vector<24x16xf32>, vector<16x8xf32>, vector<24x8xf32> -> vector<24x8xf32>
    %cst_201 = arith.constant dense<0.000000e+00> : vector<24x8xf32>
    %330 = tpu.matmul %60, %328, %cst_201 {dimension_numbers = #tpu.dot_dimension_numbers<[1], [0], [0], [1], [0, 0, 1, 1], [], []>} : vector<24x16xf32>, vector<16x8xf32>, vector<24x8xf32> -> vector<24x8xf32>
    %331 = vector.extract_strided_slice %36 {offsets = [0, 0], sizes = [8, 32], strides = [1, 1]} : vector<16x32xf32> to vector<8x32xf32>
    %cst_202 = arith.constant dense<0.000000e+00> : vector<24x32xf32>
    %332 = tpu.matmul %329, %331, %cst_202 {dimension_numbers = #tpu.dot_dimension_numbers<[1], [0], [0], [1], [0, 0, 1, 1], [], []>} : vector<24x8xf32>, vector<8x32xf32>, vector<24x32xf32> -> vector<24x32xf32>
    %333 = vector.extract_strided_slice %36 {offsets = [8, 0], sizes = [8, 32], strides = [1, 1]} : vector<16x32xf32> to vector<8x32xf32>
    %cst_203 = arith.constant dense<0.000000e+00> : vector<24x32xf32>
    %334 = tpu.matmul %330, %333, %cst_203 {dimension_numbers = #tpu.dot_dimension_numbers<[1], [0], [0], [1], [0, 0, 1, 1], [], []>} : vector<24x8xf32>, vector<8x32xf32>, vector<24x32xf32> -> vector<24x32xf32>
    %335 = arith.addf %332, %334 : vector<24x32xf32>
    %336 = vector.broadcast %37 : vector<1x32xf32> to vector<24x32xf32>
    %337 = arith.addf %335, %336 : vector<24x32xf32>
    %cst_204 = arith.constant 0.000000e+00 : f32
    %338 = vector.broadcast %cst_204 : f32 to vector<24x32xf32>
    %339 = arith.cmpf ogt, %337, %338 : vector<24x32xf32>
    %cst_205 = arith.constant 0.00999999977 : f32
    %340 = vector.broadcast %cst_205 : f32 to vector<24x32xf32>
    %341 = arith.mulf %340, %337 : vector<24x32xf32>
    %342 = arith.select %339, %337, %341 : vector<24x32xi1>, vector<24x32xf32>
    %cst_206 = arith.constant dense<0.000000e+00> : vector<24x8xf32>
    %343 = tpu.matmul %342, %38, %cst_206 {dimension_numbers = #tpu.dot_dimension_numbers<[1], [0], [0], [1], [0, 0, 1, 1], [], []>} : vector<24x32xf32>, vector<32x8xf32>, vector<24x8xf32> -> vector<24x8xf32>
    %344 = vector.broadcast %39 : vector<1x8xf32> to vector<24x8xf32>
    %345 = arith.addf %343, %344 : vector<24x8xf32>
    %346 = vector.extract_strided_slice %36 {offsets = [0, 0], sizes = [8, 32], strides = [1, 1]} : vector<16x32xf32> to vector<8x32xf32>
    %cst_207 = arith.constant dense<0.000000e+00> : vector<24x32xf32>
    %347 = tpu.matmul %330, %346, %cst_207 {dimension_numbers = #tpu.dot_dimension_numbers<[1], [0], [0], [1], [0, 0, 1, 1], [], []>} : vector<24x8xf32>, vector<8x32xf32>, vector<24x32xf32> -> vector<24x32xf32>
    %348 = vector.extract_strided_slice %36 {offsets = [8, 0], sizes = [8, 32], strides = [1, 1]} : vector<16x32xf32> to vector<8x32xf32>
    %cst_208 = arith.constant dense<0.000000e+00> : vector<24x32xf32>
    %349 = tpu.matmul %329, %348, %cst_208 {dimension_numbers = #tpu.dot_dimension_numbers<[1], [0], [0], [1], [0, 0, 1, 1], [], []>} : vector<24x8xf32>, vector<8x32xf32>, vector<24x32xf32> -> vector<24x32xf32>
    %350 = arith.addf %347, %349 : vector<24x32xf32>
    %351 = vector.broadcast %37 : vector<1x32xf32> to vector<24x32xf32>
    %352 = arith.addf %350, %351 : vector<24x32xf32>
    %cst_209 = arith.constant 0.000000e+00 : f32
    %353 = vector.broadcast %cst_209 : f32 to vector<24x32xf32>
    %354 = arith.cmpf ogt, %352, %353 : vector<24x32xf32>
    %cst_210 = arith.constant 0.00999999977 : f32
    %355 = vector.broadcast %cst_210 : f32 to vector<24x32xf32>
    %356 = arith.mulf %355, %352 : vector<24x32xf32>
    %357 = arith.select %354, %352, %356 : vector<24x32xi1>, vector<24x32xf32>
    %cst_211 = arith.constant dense<0.000000e+00> : vector<24x8xf32>
    %358 = tpu.matmul %357, %38, %cst_211 {dimension_numbers = #tpu.dot_dimension_numbers<[1], [0], [0], [1], [0, 0, 1, 1], [], []>} : vector<24x32xf32>, vector<32x8xf32>, vector<24x8xf32> -> vector<24x8xf32>
    %359 = vector.broadcast %39 : vector<1x8xf32> to vector<24x8xf32>
    %360 = arith.addf %358, %359 : vector<24x8xf32>
    %361 = arith.subf %345, %360 : vector<24x8xf32>
    %362 = arith.mulf %361, %361 : vector<24x8xf32>
    %cst_212 = arith.constant dense<0.000000e+00> : vector<24xf32>
    %363 = vector.multi_reduction <add>, %362, %cst_212 [1] : vector<24x8xf32> to vector<24xf32>
    %364 = vector.shape_cast %363 : vector<24xf32> to vector<24x1xf32>
    %cst_213 = arith.constant dense<0.000000e+00> : vector<1xf32>
    %365 = vector.multi_reduction <add>, %364, %cst_213 [0] : vector<24x1xf32> to vector<1xf32>
    %366 = vector.shape_cast %365 : vector<1xf32> to vector<1x1xf32>
    %cst_214 = arith.constant 0.00520833349 : f32
    %367 = vector.broadcast %cst_214 : f32 to vector<1x1xf32>
    %368 = arith.mulf %366, %367 : vector<1x1xf32>
    %369 = arith.addf %345, %360 : vector<24x8xf32>
    %cst_215 = arith.constant 5.000000e-01 : f32
    %370 = vector.broadcast %cst_215 : f32 to vector<24x8xf32>
    %371 = arith.mulf %370, %369 : vector<24x8xf32>
    %cst_216 = arith.constant dense<0.000000e+00> : vector<24x16xf32>
    %372 = tpu.matmul %290, %40, %cst_216 {dimension_numbers = #tpu.dot_dimension_numbers<[1], [0], [0], [1], [0, 0, 1, 1], [], []>} : vector<24x8xf32>, vector<8x16xf32>, vector<24x16xf32> -> vector<24x16xf32>
    %373 = vector.broadcast %41 : vector<1x16xf32> to vector<24x16xf32>
    %374 = arith.addf %372, %373 : vector<24x16xf32>
    %cst_217 = arith.constant 0.000000e+00 : f32
    %375 = vector.broadcast %cst_217 : f32 to vector<24x16xf32>
    %376 = arith.cmpf ogt, %374, %375 : vector<24x16xf32>
    %cst_218 = arith.constant 0.00999999977 : f32
    %377 = vector.broadcast %cst_218 : f32 to vector<24x16xf32>
    %378 = arith.mulf %377, %374 : vector<24x16xf32>
    %379 = arith.select %376, %374, %378 : vector<24x16xi1>, vector<24x16xf32>
    %cst_219 = arith.constant dense<0.000000e+00> : vector<24x8xf32>
    %380 = tpu.matmul %379, %42, %cst_219 {dimension_numbers = #tpu.dot_dimension_numbers<[1], [0], [0], [1], [0, 0, 1, 1], [], []>} : vector<24x16xf32>, vector<16x8xf32>, vector<24x8xf32> -> vector<24x8xf32>
    %381 = vector.broadcast %43 : vector<1x8xf32> to vector<24x8xf32>
    %382 = arith.addf %380, %381 : vector<24x8xf32>
    %383 = vector.extract_strided_slice %44 {offsets = [0, 0], sizes = [8, 32], strides = [1, 1]} : vector<16x32xf32> to vector<8x32xf32>
    %cst_220 = arith.constant dense<0.000000e+00> : vector<24x32xf32>
    %384 = tpu.matmul %371, %383, %cst_220 {dimension_numbers = #tpu.dot_dimension_numbers<[1], [0], [0], [1], [0, 0, 1, 1], [], []>} : vector<24x8xf32>, vector<8x32xf32>, vector<24x32xf32> -> vector<24x32xf32>
    %385 = vector.extract_strided_slice %44 {offsets = [8, 0], sizes = [8, 32], strides = [1, 1]} : vector<16x32xf32> to vector<8x32xf32>
    %cst_221 = arith.constant dense<0.000000e+00> : vector<24x32xf32>
    %386 = tpu.matmul %382, %385, %cst_221 {dimension_numbers = #tpu.dot_dimension_numbers<[1], [0], [0], [1], [0, 0, 1, 1], [], []>} : vector<24x8xf32>, vector<8x32xf32>, vector<24x32xf32> -> vector<24x32xf32>
    %387 = arith.addf %384, %386 : vector<24x32xf32>
    %388 = vector.broadcast %45 : vector<1x32xf32> to vector<24x32xf32>
    %389 = arith.addf %387, %388 : vector<24x32xf32>
    %cst_222 = arith.constant 0.000000e+00 : f32
    %390 = vector.broadcast %cst_222 : f32 to vector<24x32xf32>
    %391 = arith.cmpf ogt, %389, %390 : vector<24x32xf32>
    %cst_223 = arith.constant 0.00999999977 : f32
    %392 = vector.broadcast %cst_223 : f32 to vector<24x32xf32>
    %393 = arith.mulf %392, %389 : vector<24x32xf32>
    %394 = arith.select %391, %389, %393 : vector<24x32xi1>, vector<24x32xf32>
    %cst_224 = arith.constant dense<0.000000e+00> : vector<24x8xf32>
    %395 = tpu.matmul %394, %46, %cst_224 {dimension_numbers = #tpu.dot_dimension_numbers<[1], [0], [0], [1], [0, 0, 1, 1], [], []>} : vector<24x32xf32>, vector<32x8xf32>, vector<24x8xf32> -> vector<24x8xf32>
    %396 = vector.broadcast %47 : vector<1x8xf32> to vector<24x8xf32>
    %397 = arith.addf %395, %396 : vector<24x8xf32>
    %c0_225 = arith.constant 0 : index
    %c0_226 = arith.constant 0 : index
    %398 = vector.load %arg54[%c0_225, %c0_226] : memref<24x8xf32, #tpu.memory_space<vmem>>, vector<24x8xf32>
    tpu.vector_store %arg54[%c0_225, %c0_226], %397 {strides = array<i32>} : memref<24x8xf32, #tpu.memory_space<vmem>>, vector<24x8xf32>,
    %399 = arith.addf %153, %260 : vector<1x1xf32>
    %400 = arith.addf %399, %368 : vector<1x1xf32>
    %cst_227 = arith.constant 0.333333343 : f32
    %401 = vector.broadcast %cst_227 : f32 to vector<1x1xf32>
    %402 = arith.mulf %400, %401 : vector<1x1xf32>
    %c0_228 = arith.constant 0 : index
    %c0_229 = arith.constant 0 : index
    %403 = vector.load %arg55[%c0_228, %c0_229] : memref<1x1xf32, #tpu.memory_space<vmem>>, vector<1x1xf32>
    tpu.vector_store %arg55[%c0_228, %c0_229], %402 {strides = array<i32>} : memref<1x1xf32, #tpu.memory_space<vmem>>, vector<1x1xf32>,
    return
  }
}

</mosaic_0001>

<llo_original>
// kernel: gcnn_forward.1
$region0: #{gcnn_forward.1}
  #allocation0 [shape = 'u32[]', space=smem, size = 0x4, offset = 0x4, fixed_abs, tag = 'smem constant byte address 0x4 - core index']
  #allocation1 [shape = 'u32[72,128]{1,0:T(1,128)}', space=vmem, size = 0x9000, scoped, tag = 'internal scratch']
  %s0 = inlined_call_operand.smem [shape: u32[56], index: -1, kind: input, shape index: {}]
  %s1 = sld [smem:[%s0]]
  %s2 = scalar_lea.smem %s0, 1
  %s3 = sld [smem:[%s2]]
  %s4 = scalar_lea.smem %s0, 2
  %s5 = sld [smem:[%s4]]
  %s6 = scalar_lea.smem %s0, 3
  %s7 = sld [smem:[%s6]]
  %s8 = scalar_lea.smem %s0, 4
  %s9 = sld [smem:[%s8]]
  %s10 = scalar_lea.smem %s0, 5
  %s11 = sld [smem:[%s10]]
  %s12 = scalar_lea.smem %s0, 6
  %s13 = sld [smem:[%s12]]
  %s14 = scalar_lea.smem %s0, 7
  %s15 = sld [smem:[%s14]]
  %s16 = scalar_lea.smem %s0, 8
  %s17 = sld [smem:[%s16]]
  %s18 = scalar_lea.smem %s0, 9
  %s19 = sld [smem:[%s18]]
  %s20 = scalar_lea.smem %s0, 10
  %s21 = sld [smem:[%s20]]
  %s22 = scalar_lea.smem %s0, 11
  %s23 = sld [smem:[%s22]]
  %s24 = scalar_lea.smem %s0, 12
  %s25 = sld [smem:[%s24]]
  %s26 = scalar_lea.smem %s0, 13
  %s27 = sld [smem:[%s26]]
  %s28 = scalar_lea.smem %s0, 14
  %s29 = sld [smem:[%s28]]
  %s30 = scalar_lea.smem %s0, 15
  %s31 = sld [smem:[%s30]]
  %s32 = scalar_lea.smem %s0, 16
  %s33 = sld [smem:[%s32]]
  %s34 = scalar_lea.smem %s0, 17
  %s35 = sld [smem:[%s34]]
  %s36 = scalar_lea.smem %s0, 18
  %s37 = sld [smem:[%s36]]
  %s38 = scalar_lea.smem %s0, 19
  %s39 = sld [smem:[%s38]]
  %s40 = scalar_lea.smem %s0, 20
  %s41 = sld [smem:[%s40]]
  %s42 = scalar_lea.smem %s0, 21
  %s43 = sld [smem:[%s42]]
  %s44 = scalar_lea.smem %s0, 22
  %s45 = sld [smem:[%s44]]
  %s46 = scalar_lea.smem %s0, 23
  %s47 = sld [smem:[%s46]]
  %s48 = scalar_lea.smem %s0, 24
  %s49 = sld [smem:[%s48]]
  %s50 = scalar_lea.smem %s0, 25
  %s51 = sld [smem:[%s50]]
  %s52 = scalar_lea.smem %s0, 26
  %s53 = sld [smem:[%s52]]
  %s54 = scalar_lea.smem %s0, 27
  %s55 = sld [smem:[%s54]]
  %s56 = scalar_lea.smem %s0, 28
  %s57 = sld [smem:[%s56]]
  %s58 = scalar_lea.smem %s0, 29
  %s59 = sld [smem:[%s58]]
  %s60 = scalar_lea.smem %s0, 30
  %s61 = sld [smem:[%s60]]
  %s62 = scalar_lea.smem %s0, 31
  %s63 = sld [smem:[%s62]]
  %s64 = scalar_lea.smem %s0, 32
  %s65 = sld [smem:[%s64]]
  %s66 = scalar_lea.smem %s0, 33
  %s67 = sld [smem:[%s66]]
  %s68 = scalar_lea.smem %s0, 34
  %s69 = sld [smem:[%s68]]
  %s70 = scalar_lea.smem %s0, 35
  %s71 = sld [smem:[%s70]]
  %s72 = scalar_lea.smem %s0, 36
  %s73 = sld [smem:[%s72]]
  %s74 = scalar_lea.smem %s0, 37
  %s75 = sld [smem:[%s74]]
  %s76 = scalar_lea.smem %s0, 38
  %s77 = sld [smem:[%s76]]
  %s78 = scalar_lea.smem %s0, 39
  %s79 = sld [smem:[%s78]]
  %s80 = scalar_lea.smem %s0, 40
  %s81 = sld [smem:[%s80]]
  %s82 = scalar_lea.smem %s0, 41
  %s83 = sld [smem:[%s82]]
  %s84 = scalar_lea.smem %s0, 42
  %s85 = sld [smem:[%s84]]
  %s86 = scalar_lea.smem %s0, 43
  %s87 = sld [smem:[%s86]]
  %s88 = scalar_lea.smem %s0, 44
  %s89 = sld [smem:[%s88]]
  %s90 = scalar_lea.smem %s0, 45
  %s91 = sld [smem:[%s90]]
  %s92 = scalar_lea.smem %s0, 46
  %s93 = sld [smem:[%s92]]
  %s94 = scalar_lea.smem %s0, 47
  %s95 = sld [smem:[%s94]]
  %s96 = scalar_lea.smem %s0, 48
  %s97 = sld [smem:[%s96]]
  %s98 = scalar_lea.smem %s0, 49
  %s99 = sld [smem:[%s98]]
  %s100 = scalar_lea.smem %s0, 50
  %s101 = sld [smem:[%s100]]
  %s102 = scalar_lea.smem %s0, 51
  %s103 = sld [smem:[%s102]]
  %s104 = scalar_lea.smem %s0, 52
  %s105 = sld [smem:[%s104]]
  %s106 = scalar_lea.smem %s0, 53
  %s107 = sld [smem:[%s106]]
  %s108 = scalar_lea.smem %s0, 54
  %s109 = sld [smem:[%s108]]
  %s110 = scalar_lea.smem %s0, 55
  %s111 = sld [smem:[%s110]]
  %112 = xla_tuple %s109, %s111
  %s113 = sld [smem:[#allocation0]]
  $region306: #{gcnn_forward.1} parent=0
    _
  %s115 = ssub.s32 1, %s113
  %s116 = scalar_select 0, %s115, %s113
  $region1: #{gcnn_forward.1} parent=0
    #allocation2 [shape = 'u8[8192]{0}', space=vmem, size = 0x2000, scoped, tag = 'input window, operand 6, single buffered']
    #allocation3 [shape = 's32[1]{0}', space=sflag, size = 0x4, scoped, tag = 'scoped memory for gcnn_forward.1']
    #allocation4 [shape = 's32[1]{0}', space=sflag, size = 0x4, scoped, tag = 'scoped memory for gcnn_forward.1']
    #allocation5 [shape = 'u8[16384]{0}', space=vmem, size = 0x4000, scoped, tag = 'input window, operand 8, single buffered']
    #allocation6 [shape = 's32[1]{0}', space=sflag, size = 0x4, scoped, tag = 'scoped memory for gcnn_forward.1']
    #allocation7 [shape = 'u8[8192]{0}', space=vmem, size = 0x2000, scoped, tag = 'input window, operand 10, single buffered']
    #allocation8 [shape = 'u8[16384]{0}', space=vmem, size = 0x4000, scoped, tag = 'input window, operand 12, single buffered']
    #allocation9 [shape = 's32[1]{0}', space=sflag, size = 0x4, scoped, tag = 'scoped memory for gcnn_forward.1']
    #allocation10 [shape = 'u8[8192]{0}', space=vmem, size = 0x2000, scoped, tag = 'input window, operand 14, single buffered']
    #allocation11 [shape = 'u8[16384]{0}', space=vmem, size = 0x4000, scoped, tag = 'input window, operand 16, single buffered']
    #allocation12 [shape = 's32[1]{0}', space=sflag, size = 0x4, scoped, tag = 'scoped memory for gcnn_forward.1']
    #allocation13 [shape = 'u8[8192]{0}', space=vmem, size = 0x2000, scoped, tag = 'input window, operand 18, single buffered']
    #allocation14 [shape = 'u8[16384]{0}', space=vmem, size = 0x4000, scoped, tag = 'input window, operand 20, single buffered']
    #allocation15 [shape = 's32[1]{0}', space=sflag, size = 0x4, scoped, tag = 'scoped memory for gcnn_forward.1']
    #allocation16 [shape = 'u8[8192]{0}', space=vmem, size = 0x2000, scoped, tag = 'input window, operand 24, single buffered']
    #allocation17 [shape = 'u8[8192]{0}', space=vmem, size = 0x2000, scoped, tag = 'input window, operand 26, single buffered']
    #allocation18 [shape = 's32[1]{0}', space=sflag, size = 0x4, scoped, tag = 'scoped memory for gcnn_forward.1']
    #allocation19 [shape = 'u8[16384]{0}', space=vmem, size = 0x4000, scoped, tag = 'input window, operand 28, single buffered']
    #allocation20 [shape = 'u8[8192]{0}', space=vmem, size = 0x2000, scoped, tag = 'input window, operand 30, single buffered']
    #allocation21 [shape = 's32[1]{0}', space=sflag, size = 0x4, scoped, tag = 'scoped memory for gcnn_forward.1']
    #allocation22 [shape = 'u8[16384]{0}', space=vmem, size = 0x4000, scoped, tag = 'input window, operand 32, single buffered']
    #allocation23 [shape = 'u8[4096]{0}', space=vmem, size = 0x1000, scoped, tag = 'input window, operand 34, single buffered']
    #allocation24 [shape = 's32[1]{0}', space=sflag, size = 0x4, scoped, tag = 'scoped memory for gcnn_forward.1']
    #allocation25 [shape = 'u8[8192]{0}', space=vmem, size = 0x2000, scoped, tag = 'input window, operand 36, single buffered']
    #allocation26 [shape = 'u8[8192]{0}', space=vmem, size = 0x2000, scoped, tag = 'input window, operand 38, single buffered']
    #allocation27 [shape = 's32[1]{0}', space=sflag, size = 0x4, scoped, tag = 'scoped memory for gcnn_forward.1']
    #allocation28 [shape = 'u8[8192]{0}', space=vmem, size = 0x2000, scoped, tag = 'input window, operand 42, single buffered']
    #allocation29 [shape = 'u8[8192]{0}', space=vmem, size = 0x2000, scoped, tag = 'input window, operand 48, single buffered']
    #allocation30 [shape = 's32[1]{0}', space=sflag, size = 0x4, scoped, tag = 'scoped memory for gcnn_forward.1']
    #allocation31 [shape = 'u8[512]{0}', space=vmem, size = 0x400, scoped, tag = 'output window, operand 1, single buffered']
    %117 = vsyncpa [#allocation3], 0
    %118 = vsyncpa [#allocation6], 0
    %119 = vsyncpa [#allocation9], 0
    %120 = vsyncpa [#allocation12], 0
    %121 = vsyncpa [#allocation15], 0
    %122 = vsyncpa [#allocation18], 0
    %123 = vsyncpa [#allocation21], 0
    %124 = vsyncpa [#allocation24], 0
    %125 = vsyncpa [#allocation27], 0
    %126 = vsyncpa [#allocation30], 0
    %127 = vsyncpa [#allocation4], 0
    // Predicated region
    $region2: #{gcnn_forward.1} parent=1 // pred_check
      _
    $region3: #{gcnn_forward.1} parent=1 // pred_check_branch
      %129 = sbr.rel (0) target = $region5
    $region4: #{gcnn_forward.1} parent=1 // pred_region
      _
    $region5: #{gcnn_forward.1} parent=1 // pred_fallthru
      _
    // Predicated region
    $region6: #{gcnn_forward.1} parent=1 // pred_check
      _
    $region7: #{gcnn_forward.1} parent=1 // pred_check_branch
      %131 = sbr.rel (0) target = $region9
    $region8: #{gcnn_forward.1} parent=1 // pred_region
      _
    $region9: #{gcnn_forward.1} parent=1 // pred_fallthru
      _
    // Predicated region
    $region10: #{gcnn_forward.1} parent=1 // pred_check
      _
    $region11: #{gcnn_forward.1} parent=1 // pred_check_branch
      %133 = sbr.rel (0) target = $region13
    $region12: #{gcnn_forward.1} parent=1 // pred_region
      _
    $region13: #{gcnn_forward.1} parent=1 // pred_fallthru
      _
    // Predicated region
    $region14: #{gcnn_forward.1} parent=1 // pred_check
      _
    $region15: #{gcnn_forward.1} parent=1 // pred_check_branch
      %135 = sbr.rel (0) target = $region17
    $region16: #{gcnn_forward.1} parent=1 // pred_region
      _
    $region17: #{gcnn_forward.1} parent=1 // pred_fallthru
      _
    // Predicated region
    $region18: #{gcnn_forward.1} parent=1 // pred_check
      _
    $region19: #{gcnn_forward.1} parent=1 // pred_check_branch
      %137 = sbr.rel (0) target = $region21
    $region20: #{gcnn_forward.1} parent=1 // pred_region
      _
    $region21: #{gcnn_forward.1} parent=1 // pred_fallthru
      _
    // Predicated region
    $region22: #{gcnn_forward.1} parent=1 // pred_check
      _
    $region23: #{gcnn_forward.1} parent=1 // pred_check_branch
      %139 = sbr.rel (0) target = $region25
    $region24: #{gcnn_forward.1} parent=1 // pred_region
      _
    $region25: #{gcnn_forward.1} parent=1 // pred_fallthru
      _
    // Predicated region
    $region26: #{gcnn_forward.1} parent=1 // pred_check
      _
    $region27: #{gcnn_forward.1} parent=1 // pred_check_branch
      %141 = sbr.rel (0) target = $region29
    $region28: #{gcnn_forward.1} parent=1 // pred_region
      %143 = vsyncadd [#allocation3], 0
      %s144 = sshll.u32 %s13, 4
      %s145 = int_to_ptr.hbm [resolvable:$true] %s144
      %s146 = sshll.u32 [#allocation2], 4
      %s147 = int_to_ptr.vmem [resolvable:$true] %s146
      %152 = dma.hbm_to_vmem [thread:$0]  %s145, 256, %s147, [#allocation3], 128, 128, 8
    $region29: #{gcnn_forward.1} parent=1 // pred_fallthru
      _
    // Predicated region
    $region30: #{gcnn_forward.1} parent=1 // pred_check
      _
    $region31: #{gcnn_forward.1} parent=1 // pred_check_branch
      %154 = sbr.rel (0) target = $region33
    $region32: #{gcnn_forward.1} parent=1 // pred_region
      _
    $region33: #{gcnn_forward.1} parent=1 // pred_fallthru
      _
    // Predicated region
    $region34: #{gcnn_forward.1} parent=1 // pred_check
      _
    $region35: #{gcnn_forward.1} parent=1 // pred_check_branch
      %156 = sbr.rel (0) target = $region37
    $region36: #{gcnn_forward.1} parent=1 // pred_region
      %158 = vsyncadd [#allocation6], 0
      %s159 = sshll.u32 %s17, 4
      %s160 = int_to_ptr.hbm [resolvable:$true] %s159
      %s161 = sshll.u32 [#allocation5], 4
      %s162 = int_to_ptr.vmem [resolvable:$true] %s161
      %167 = dma.hbm_to_vmem [thread:$0]  %s160, 512, %s162, [#allocation6], 128, 128, 8
    $region37: #{gcnn_forward.1} parent=1 // pred_fallthru
      _
    // Predicated region
    $region38: #{gcnn_forward.1} parent=1 // pred_check
      _
    $region39: #{gcnn_forward.1} parent=1 // pred_check_branch
      %169 = sbr.rel (0) target = $region41
    $region40: #{gcnn_forward.1} parent=1 // pred_region
      _
    $region41: #{gcnn_forward.1} parent=1 // pred_fallthru
      _
    // Predicated region
    $region42: #{gcnn_forward.1} parent=1 // pred_check
      _
    $region43: #{gcnn_forward.1} parent=1 // pred_check_branch
      %171 = sbr.rel (0) target = $region45
    $region44: #{gcnn_forward.1} parent=1 // pred_region
      %173 = vsyncadd [#allocation6], 0
      %s174 = sshll.u32 %s21, 4
      %s175 = int_to_ptr.hbm [resolvable:$true] %s174
      %s176 = sshll.u32 [#allocation7], 4
      %s177 = int_to_ptr.vmem [resolvable:$true] %s176
      %182 = dma.hbm_to_vmem [thread:$0]  %s175, 256, %s177, [#allocation6], 128, 128, 8
    $region45: #{gcnn_forward.1} parent=1 // pred_fallthru
      _
    // Predicated region
    $region46: #{gcnn_forward.1} parent=1 // pred_check
      _
    $region47: #{gcnn_forward.1} parent=1 // pred_check_branch
      %184 = sbr.rel (0) target = $region49
    $region48: #{gcnn_forward.1} parent=1 // pred_region
      _
    $region49: #{gcnn_forward.1} parent=1 // pred_fallthru
      _
    // Predicated region
    $region50: #{gcnn_forward.1} parent=1 // pred_check
      _
    $region51: #{gcnn_forward.1} parent=1 // pred_check_branch
      %186 = sbr.rel (0) target = $region53
    $region52: #{gcnn_forward.1} parent=1 // pred_region
      %188 = vsyncadd [#allocation9], 0
      %s189 = sshll.u32 %s25, 4
      %s190 = int_to_ptr.hbm [resolvable:$true] %s189
      %s191 = sshll.u32 [#allocation8], 4
      %s192 = int_to_ptr.vmem [resolvable:$true] %s191
      %197 = dma.hbm_to_vmem [thread:$0]  %s190, 512, %s192, [#allocation9], 128, 128, 8
    $region53: #{gcnn_forward.1} parent=1 // pred_fallthru
      _
    // Predicated region
    $region54: #{gcnn_forward.1} parent=1 // pred_check
      _
    $region55: #{gcnn_forward.1} parent=1 // pred_check_branch
      %199 = sbr.rel (0) target = $region57
    $region56: #{gcnn_forward.1} parent=1 // pred_region
      _
    $region57: #{gcnn_forward.1} parent=1 // pred_fallthru
      _
    // Predicated region
    $region58: #{gcnn_forward.1} parent=1 // pred_check
      _
    $region59: #{gcnn_forward.1} parent=1 // pred_check_branch
      %201 = sbr.rel (0) target = $region61
    $region60: #{gcnn_forward.1} parent=1 // pred_region
      %203 = vsyncadd [#allocation9], 0
      %s204 = sshll.u32 %s29, 4
      %s205 = int_to_ptr.hbm [resolvable:$true] %s204
      %s206 = sshll.u32 [#allocation10], 4
      %s207 = int_to_ptr.vmem [resolvable:$true] %s206
      %212 = dma.hbm_to_vmem [thread:$0]  %s205, 256, %s207, [#allocation9], 128, 128, 8
    $region61: #{gcnn_forward.1} parent=1 // pred_fallthru
      _
    // Predicated region
    $region62: #{gcnn_forward.1} parent=1 // pred_check
      _
    $region63: #{gcnn_forward.1} parent=1 // pred_check_branch
      %214 = sbr.rel (0) target = $region65
    $region64: #{gcnn_forward.1} parent=1 // pred_region
      _
    $region65: #{gcnn_forward.1} parent=1 // pred_fallthru
      _
    // Predicated region
    $region66: #{gcnn_forward.1} parent=1 // pred_check
      _
    $region67: #{gcnn_forward.1} parent=1 // pred_check_branch
      %216 = sbr.rel (0) target = $region69
    $region68: #{gcnn_forward.1} parent=1 // pred_region
      %218 = vsyncadd [#allocation12], 0
      %s219 = sshll.u32 %s33, 4
      %s220 = int_to_ptr.hbm [resolvable:$true] %s219
      %s221 = sshll.u32 [#allocation11], 4
      %s222 = int_to_ptr.vmem [resolvable:$true] %s221
      %227 = dma.hbm_to_vmem [thread:$0]  %s220, 512, %s222, [#allocation12], 128, 128, 8
    $region69: #{gcnn_forward.1} parent=1 // pred_fallthru
      _
    // Predicated region
    $region70: #{gcnn_forward.1} parent=1 // pred_check
      _
    $region71: #{gcnn_forward.1} parent=1 // pred_check_branch
      %229 = sbr.rel (0) target = $region73
    $region72: #{gcnn_forward.1} parent=1 // pred_region
      _
    $region73: #{gcnn_forward.1} parent=1 // pred_fallthru
      _
    // Predicated region
    $region74: #{gcnn_forward.1} parent=1 // pred_check
      _
    $region75: #{gcnn_forward.1} parent=1 // pred_check_branch
      %231 = sbr.rel (0) target = $region77
    $region76: #{gcnn_forward.1} parent=1 // pred_region
      %233 = vsyncadd [#allocation12], 0
      %s234 = sshll.u32 %s37, 4
      %s235 = int_to_ptr.hbm [resolvable:$true] %s234
      %s236 = sshll.u32 [#allocation13], 4
      %s237 = int_to_ptr.vmem [resolvable:$true] %s236
      %242 = dma.hbm_to_vmem [thread:$0]  %s235, 256, %s237, [#allocation12], 128, 128, 8
    $region77: #{gcnn_forward.1} parent=1 // pred_fallthru
      _
    // Predicated region
    $region78: #{gcnn_forward.1} parent=1 // pred_check
      _
    $region79: #{gcnn_forward.1} parent=1 // pred_check_branch
      %244 = sbr.rel (0) target = $region81
    $region80: #{gcnn_forward.1} parent=1 // pred_region
      _
    $region81: #{gcnn_forward.1} parent=1 // pred_fallthru
      _
    // Predicated region
    $region82: #{gcnn_forward.1} parent=1 // pred_check
      _
    $region83: #{gcnn_forward.1} parent=1 // pred_check_branch
      %246 = sbr.rel (0) target = $region85
    $region84: #{gcnn_forward.1} parent=1 // pred_region
      %248 = vsyncadd [#allocation15], 0
      %s249 = sshll.u32 %s41, 4
      %s250 = int_to_ptr.hbm [resolvable:$true] %s249
      %s251 = sshll.u32 [#allocation14], 4
      %s252 = int_to_ptr.vmem [resolvable:$true] %s251
      %257 = dma.hbm_to_vmem [thread:$0]  %s250, 512, %s252, [#allocation15], 128, 128, 8
    $region85: #{gcnn_forward.1} parent=1 // pred_fallthru
      _
    // Predicated region
    $region86: #{gcnn_forward.1} parent=1 // pred_check
      _
    $region87: #{gcnn_forward.1} parent=1 // pred_check_branch
      %259 = sbr.rel (0) target = $region89
    $region88: #{gcnn_forward.1} parent=1 // pred_region
      _
    $region89: #{gcnn_forward.1} parent=1 // pred_fallthru
      _
    // Predicated region
    $region90: #{gcnn_forward.1} parent=1 // pred_check
      _
    $region91: #{gcnn_forward.1} parent=1 // pred_check_branch
      %261 = sbr.rel (0) target = $region93
    $region92: #{gcnn_forward.1} parent=1 // pred_region
      _
    $region93: #{gcnn_forward.1} parent=1 // pred_fallthru
      _
    // Predicated region
    $region94: #{gcnn_forward.1} parent=1 // pred_check
      _
    $region95: #{gcnn_forward.1} parent=1 // pred_check_branch
      %263 = sbr.rel (0) target = $region97
    $region96: #{gcnn_forward.1} parent=1 // pred_region
      _
    $region97: #{gcnn_forward.1} parent=1 // pred_fallthru
      _
    // Predicated region
    $region98: #{gcnn_forward.1} parent=1 // pred_check
      _
    $region99: #{gcnn_forward.1} parent=1 // pred_check_branch
      %265 = sbr.rel (0) target = $region101
    $region100: #{gcnn_forward.1} parent=1 // pred_region
      %267 = vsyncadd [#allocation15], 0
      %s268 = sshll.u32 %s49, 4
      %s269 = int_to_ptr.hbm [resolvable:$true] %s268
      %s270 = sshll.u32 [#allocation16], 4
      %s271 = int_to_ptr.vmem [resolvable:$true] %s270
      %276 = dma.hbm_to_vmem [thread:$0]  %s269, 256, %s271, [#allocation15], 128, 128, 8
    $region101: #{gcnn_forward.1} parent=1 // pred_fallthru
      _
    // Predicated region
    $region102: #{gcnn_forward.1} parent=1 // pred_check
      _
    $region103: #{gcnn_forward.1} parent=1 // pred_check_branch
      %278 = sbr.rel (0) target = $region105
    $region104: #{gcnn_forward.1} parent=1 // pred_region
      _
    $region105: #{gcnn_forward.1} parent=1 // pred_fallthru
      _
    // Predicated region
    $region106: #{gcnn_forward.1} parent=1 // pred_check
      _
    $region107: #{gcnn_forward.1} parent=1 // pred_check_branch
      %280 = sbr.rel (0) target = $region109
    $region108: #{gcnn_forward.1} parent=1 // pred_region
      %282 = vsyncadd [#allocation18], 0
      %s283 = sshll.u32 %s53, 4
      %s284 = int_to_ptr.hbm [resolvable:$true] %s283
      %s285 = sshll.u32 [#allocation17], 4
      %s286 = int_to_ptr.vmem [resolvable:$true] %s285
      %291 = dma.hbm_to_vmem [thread:$0]  %s284, 256, %s286, [#allocation18], 128, 128, 8
    $region109: #{gcnn_forward.1} parent=1 // pred_fallthru
      _
    // Predicated region
    $region110: #{gcnn_forward.1} parent=1 // pred_check
      _
    $region111: #{gcnn_forward.1} parent=1 // pred_check_branch
      %293 = sbr.rel (0) target = $region113
    $region112: #{gcnn_forward.1} parent=1 // pred_region
      _
    $region113: #{gcnn_forward.1} parent=1 // pred_fallthru
      _
    // Predicated region
    $region114: #{gcnn_forward.1} parent=1 // pred_check
      _
    $region115: #{gcnn_forward.1} parent=1 // pred_check_branch
      %295 = sbr.rel (0) target = $region117
    $region116: #{gcnn_forward.1} parent=1 // pred_region
      %297 = vsyncadd [#allocation18], 0
      %s298 = sshll.u32 %s57, 4
      %s299 = int_to_ptr.hbm [resolvable:$true] %s298
      %s300 = sshll.u32 [#allocation19], 4
      %s301 = int_to_ptr.vmem [resolvable:$true] %s300
      %306 = dma.hbm_to_vmem [thread:$0]  %s299, 512, %s301, [#allocation18], 128, 128, 8
    $region117: #{gcnn_forward.1} parent=1 // pred_fallthru
      _
    // Predicated region
    $region118: #{gcnn_forward.1} parent=1 // pred_check
      _
    $region119: #{gcnn_forward.1} parent=1 // pred_check_branch
      %308 = sbr.rel (0) target = $region121
    $region120: #{gcnn_forward.1} parent=1 // pred_region
      _
    $region121: #{gcnn_forward.1} parent=1 // pred_fallthru
      _
    // Predicated region
    $region122: #{gcnn_forward.1} parent=1 // pred_check
      _
    $region123: #{gcnn_forward.1} parent=1 // pred_check_branch
      %310 = sbr.rel (0) target = $region125
    $region124: #{gcnn_forward.1} parent=1 // pred_region
      %312 = vsyncadd [#allocation21], 0
      %s313 = sshll.u32 %s61, 4
      %s314 = int_to_ptr.hbm [resolvable:$true] %s313
      %s315 = sshll.u32 [#allocation20], 4
      %s316 = int_to_ptr.vmem [resolvable:$true] %s315
      %321 = dma.hbm_to_vmem [thread:$0]  %s314, 256, %s316, [#allocation21], 128, 128, 8
    $region125: #{gcnn_forward.1} parent=1 // pred_fallthru
      _
    // Predicated region
    $region126: #{gcnn_forward.1} parent=1 // pred_check
      _
    $region127: #{gcnn_forward.1} parent=1 // pred_check_branch
      %323 = sbr.rel (0) target = $region129
    $region128: #{gcnn_forward.1} parent=1 // pred_region
      _
    $region129: #{gcnn_forward.1} parent=1 // pred_fallthru
      _
    // Predicated region
    $region130: #{gcnn_forward.1} parent=1 // pred_check
      _
    $region131: #{gcnn_forward.1} parent=1 // pred_check_branch
      %325 = sbr.rel (0) target = $region133
    $region132: #{gcnn_forward.1} parent=1 // pred_region
      %327 = vsyncadd [#allocation21], 0
      %s328 = sshll.u32 %s65, 4
      %s329 = int_to_ptr.hbm [resolvable:$true] %s328
      %s330 = sshll.u32 [#allocation22], 4
      %s331 = int_to_ptr.vmem [resolvable:$true] %s330
      %336 = dma.hbm_to_vmem [thread:$0]  %s329, 512, %s331, [#allocation21], 128, 128, 8
    $region133: #{gcnn_forward.1} parent=1 // pred_fallthru
      _
    // Predicated region
    $region134: #{gcnn_forward.1} parent=1 // pred_check
      _
    $region135: #{gcnn_forward.1} parent=1 // pred_check_branch
      %338 = sbr.rel (0) target = $region137
    $region136: #{gcnn_forward.1} parent=1 // pred_region
      _
    $region137: #{gcnn_forward.1} parent=1 // pred_fallthru
      _
    // Predicated region
    $region138: #{gcnn_forward.1} parent=1 // pred_check
      _
    $region139: #{gcnn_forward.1} parent=1 // pred_check_branch
      %340 = sbr.rel (0) target = $region141
    $region140: #{gcnn_forward.1} parent=1 // pred_region
      %342 = vsyncadd [#allocation24], 0
      %s344 = sshll.u32 %s69, 4
      %s345 = int_to_ptr.hbm [resolvable:$true] %s344
      %s346 = sshll.u32 [#allocation23], 4
      %s347 = int_to_ptr.vmem [resolvable:$true] %s346
      %349 = dma.hbm_to_vmem [thread:$0]  %s345, 128, %s347, [#allocation24]
    $region141: #{gcnn_forward.1} parent=1 // pred_fallthru
      _
    // Predicated region
    $region142: #{gcnn_forward.1} parent=1 // pred_check
      _
    $region143: #{gcnn_forward.1} parent=1 // pred_check_branch
      %351 = sbr.rel (0) target = $region145
    $region144: #{gcnn_forward.1} parent=1 // pred_region
      _
    $region145: #{gcnn_forward.1} parent=1 // pred_fallthru
      _
    // Predicated region
    $region146: #{gcnn_forward.1} parent=1 // pred_check
      _
    $region147: #{gcnn_forward.1} parent=1 // pred_check_branch
      %353 = sbr.rel (0) target = $region149
    $region148: #{gcnn_forward.1} parent=1 // pred_region
      %355 = vsyncadd [#allocation24], 0
      %s356 = sshll.u32 %s73, 4
      %s357 = int_to_ptr.hbm [resolvable:$true] %s356
      %s358 = sshll.u32 [#allocation25], 4
      %s359 = int_to_ptr.vmem [resolvable:$true] %s358
      %364 = dma.hbm_to_vmem [thread:$0]  %s357, 256, %s359, [#allocation24], 128, 128, 8
    $region149: #{gcnn_forward.1} parent=1 // pred_fallthru
      _
    // Predicated region
    $region150: #{gcnn_forward.1} parent=1 // pred_check
      _
    $region151: #{gcnn_forward.1} parent=1 // pred_check_branch
      %366 = sbr.rel (0) target = $region153
    $region152: #{gcnn_forward.1} parent=1 // pred_region
      _
    $region153: #{gcnn_forward.1} parent=1 // pred_fallthru
      _
    // Predicated region
    $region154: #{gcnn_forward.1} parent=1 // pred_check
      _
    $region155: #{gcnn_forward.1} parent=1 // pred_check_branch
      %368 = sbr.rel (0) target = $region157
    $region156: #{gcnn_forward.1} parent=1 // pred_region
      %370 = vsyncadd [#allocation27], 0
      %s371 = sshll.u32 %s77, 4
      %s372 = int_to_ptr.hbm [resolvable:$true] %s371
      %s373 = sshll.u32 [#allocation26], 4
      %s374 = int_to_ptr.vmem [resolvable:$true] %s373
      %379 = dma.hbm_to_vmem [thread:$0]  %s372, 256, %s374, [#allocation27], 128, 128, 8
    $region157: #{gcnn_forward.1} parent=1 // pred_fallthru
      _
    // Predicated region
    $region158: #{gcnn_forward.1} parent=1 // pred_check
      _
    $region159: #{gcnn_forward.1} parent=1 // pred_check_branch
      %381 = sbr.rel (0) target = $region161
    $region160: #{gcnn_forward.1} parent=1 // pred_region
      _
    $region161: #{gcnn_forward.1} parent=1 // pred_fallthru
      _
    // Predicated region
    $region162: #{gcnn_forward.1} parent=1 // pred_check
      _
    $region163: #{gcnn_forward.1} parent=1 // pred_check_branch
      %383 = sbr.rel (0) target = $region165
    $region164: #{gcnn_forward.1} parent=1 // pred_region
      _
    $region165: #{gcnn_forward.1} parent=1 // pred_fallthru
      _
    // Predicated region
    $region166: #{gcnn_forward.1} parent=1 // pred_check
      _
    $region167: #{gcnn_forward.1} parent=1 // pred_check_branch
      %385 = sbr.rel (0) target = $region169
    $region168: #{gcnn_forward.1} parent=1 // pred_region
      _
    $region169: #{gcnn_forward.1} parent=1 // pred_fallthru
      _
    // Predicated region
    $region170: #{gcnn_forward.1} parent=1 // pred_check
      _
    $region171: #{gcnn_forward.1} parent=1 // pred_check_branch
      %387 = sbr.rel (0) target = $region173
    $region172: #{gcnn_forward.1} parent=1 // pred_region
      %389 = vsyncadd [#allocation27], 0
      %s390 = sshll.u32 %s85, 4
      %s391 = int_to_ptr.hbm [resolvable:$true] %s390
      %s392 = sshll.u32 [#allocation28], 4
      %s393 = int_to_ptr.vmem [resolvable:$true] %s392
      %398 = dma.hbm_to_vmem [thread:$0]  %s391, 256, %s393, [#allocation27], 128, 128, 8
    $region173: #{gcnn_forward.1} parent=1 // pred_fallthru
      _
    // Predicated region
    $region174: #{gcnn_forward.1} parent=1 // pred_check
      _
    $region175: #{gcnn_forward.1} parent=1 // pred_check_branch
      %400 = sbr.rel (0) target = $region177
    $region176: #{gcnn_forward.1} parent=1 // pred_region
      _
    $region177: #{gcnn_forward.1} parent=1 // pred_fallthru
      _
    // Predicated region
    $region178: #{gcnn_forward.1} parent=1 // pred_check
      _
    $region179: #{gcnn_forward.1} parent=1 // pred_check_branch
      %402 = sbr.rel (0) target = $region181
    $region180: #{gcnn_forward.1} parent=1 // pred_region
      _
    $region181: #{gcnn_forward.1} parent=1 // pred_fallthru
      _
    // Predicated region
    $region182: #{gcnn_forward.1} parent=1 // pred_check
      _
    $region183: #{gcnn_forward.1} parent=1 // pred_check_branch
      %404 = sbr.rel (0) target = $region185
    $region184: #{gcnn_forward.1} parent=1 // pred_region
      _
    $region185: #{gcnn_forward.1} parent=1 // pred_fallthru
      _
    // Predicated region
    $region186: #{gcnn_forward.1} parent=1 // pred_check
      _
    $region187: #{gcnn_forward.1} parent=1 // pred_check_branch
      %406 = sbr.rel (0) target = $region189
    $region188: #{gcnn_forward.1} parent=1 // pred_region
      _
    $region189: #{gcnn_forward.1} parent=1 // pred_fallthru
      _
    // Predicated region
    $region190: #{gcnn_forward.1} parent=1 // pred_check
      _
    $region191: #{gcnn_forward.1} parent=1 // pred_check_branch
      %408 = sbr.rel (0) target = $region193
    $region192: #{gcnn_forward.1} parent=1 // pred_region
      _
    $region193: #{gcnn_forward.1} parent=1 // pred_fallthru
      _
    // Predicated region
    $region194: #{gcnn_forward.1} parent=1 // pred_check
      _
    $region195: #{gcnn_forward.1} parent=1 // pred_check_branch
      %410 = sbr.rel (0) target = $region197
    $region196: #{gcnn_forward.1} parent=1 // pred_region
      %412 = vsyncadd [#allocation30], 0
      %s413 = sshll.u32 %s97, 4
      %s414 = int_to_ptr.hbm [resolvable:$true] %s413
      %s415 = sshll.u32 [#allocation29], 4
      %s416 = int_to_ptr.vmem [resolvable:$true] %s415
      %421 = dma.hbm_to_vmem [thread:$0]  %s414, 256, %s416, [#allocation30], 128, 128, 8
    $region197: #{gcnn_forward.1} parent=1 // pred_fallthru
      _
    // Predicated region
    $region198: #{gcnn_forward.1} parent=1 // pred_check
      _
    $region199: #{gcnn_forward.1} parent=1 // pred_check_branch
      %423 = sbr.rel (0) target = $region201
    $region200: #{gcnn_forward.1} parent=1 // pred_region
      _
    $region201: #{gcnn_forward.1} parent=1 // pred_fallthru
      _
    // Predicated region
    $region202: #{gcnn_forward.1} parent=1 // pred_check
      _
    $region203: #{gcnn_forward.1} parent=1 // pred_check_branch
      %425 = sbr.rel (0) target = $region205
    $region204: #{gcnn_forward.1} parent=1 // pred_region
      _
    $region205: #{gcnn_forward.1} parent=1 // pred_fallthru
      _
    // Predicated region
    $region206: #{gcnn_forward.1} parent=1 // pred_check
      _
    $region207: #{gcnn_forward.1} parent=1 // pred_check_branch
      %427 = sbr.rel (0) target = $region209
    $region208: #{gcnn_forward.1} parent=1 // pred_region
      _
    $region209: #{gcnn_forward.1} parent=1 // pred_fallthru
      _
    // Predicated region
    $region210: #{gcnn_forward.1} parent=1 // pred_check
      _
    $region211: #{gcnn_forward.1} parent=1 // pred_check_branch
      %429 = sbr.rel (0) target = $region213
    $region212: #{gcnn_forward.1} parent=1 // pred_region
      _
    $region213: #{gcnn_forward.1} parent=1 // pred_fallthru
      _
    // Predicated region
    $region214: #{gcnn_forward.1} parent=1 // pred_check
      _
    $region215: #{gcnn_forward.1} parent=1 // pred_check_branch
      %431 = sbr.rel (0) target = $region217
    $region216: #{gcnn_forward.1} parent=1 // pred_region
      _
    $region217: #{gcnn_forward.1} parent=1 // pred_fallthru
      _
    // Predicated region
    $region218: #{gcnn_forward.1} parent=1 // pred_check
      _
    $region219: #{gcnn_forward.1} parent=1 // pred_check_branch
      %433 = sbr.rel (0) target = $region221
    $region220: #{gcnn_forward.1} parent=1 // pred_region
      %435 = dma.done [#allocation3], 256
    $region221: #{gcnn_forward.1} parent=1 // pred_fallthru
      _
    // Predicated region
    $region222: #{gcnn_forward.1} parent=1 // pred_check
      _
    $region223: #{gcnn_forward.1} parent=1 // pred_check_branch
      %437 = sbr.rel (0) target = $region225
    $region224: #{gcnn_forward.1} parent=1 // pred_region
      %439 = dma.done [#allocation6], 512
    $region225: #{gcnn_forward.1} parent=1 // pred_fallthru
      _
    // Predicated region
    $region226: #{gcnn_forward.1} parent=1 // pred_check
      _
    $region227: #{gcnn_forward.1} parent=1 // pred_check_branch
      %441 = sbr.rel (0) target = $region229
    $region228: #{gcnn_forward.1} parent=1 // pred_region
      %443 = dma.done [#allocation6], 256
    $region229: #{gcnn_forward.1} parent=1 // pred_fallthru
      _
    // Predicated region
    $region230: #{gcnn_forward.1} parent=1 // pred_check
      _
    $region231: #{gcnn_forward.1} parent=1 // pred_check_branch
      %445 = sbr.rel (0) target = $region233
    $region232: #{gcnn_forward.1} parent=1 // pred_region
      %447 = dma.done [#allocation9], 512
    $region233: #{gcnn_forward.1} parent=1 // pred_fallthru
      _
    // Predicated region
    $region234: #{gcnn_forward.1} parent=1 // pred_check
      _
    $region235: #{gcnn_forward.1} parent=1 // pred_check_branch
      %449 = sbr.rel (0) target = $region237
    $region236: #{gcnn_forward.1} parent=1 // pred_region
      %451 = dma.done [#allocation9], 256
    $region237: #{gcnn_forward.1} parent=1 // pred_fallthru
      _
    // Predicated region
    $region238: #{gcnn_forward.1} parent=1 // pred_check
      _
    $region239: #{gcnn_forward.1} parent=1 // pred_check_branch
      %453 = sbr.rel (0) target = $region241
    $region240: #{gcnn_forward.1} parent=1 // pred_region
      %455 = dma.done [#allocation12], 512
    $region241: #{gcnn_forward.1} parent=1 // pred_fallthru
      _
    // Predicated region
    $region242: #{gcnn_forward.1} parent=1 // pred_check
      _
    $region243: #{gcnn_forward.1} parent=1 // pred_check_branch
      %457 = sbr.rel (0) target = $region245
    $region244: #{gcnn_forward.1} parent=1 // pred_region
      %459 = dma.done [#allocation12], 256
    $region245: #{gcnn_forward.1} parent=1 // pred_fallthru
      _
    // Predicated region
    $region246: #{gcnn_forward.1} parent=1 // pred_check
      _
    $region247: #{gcnn_forward.1} parent=1 // pred_check_branch
      %461 = sbr.rel (0) target = $region249
    $region248: #{gcnn_forward.1} parent=1 // pred_region
      %463 = dma.done [#allocation15], 512
    $region249: #{gcnn_forward.1} parent=1 // pred_fallthru
      _
    // Predicated region
    $region250: #{gcnn_forward.1} parent=1 // pred_check
      _
    $region251: #{gcnn_forward.1} parent=1 // pred_check_branch
      %465 = sbr.rel (0) target = $region253
    $region252: #{gcnn_forward.1} parent=1 // pred_region
      %467 = dma.done [#allocation15], 256
    $region253: #{gcnn_forward.1} parent=1 // pred_fallthru
      _
    // Predicated region
    $region254: #{gcnn_forward.1} parent=1 // pred_check
      _
    $region255: #{gcnn_forward.1} parent=1 // pred_check_branch
      %469 = sbr.rel (0) target = $region257
    $region256: #{gcnn_forward.1} parent=1 // pred_region
      %471 = dma.done [#allocation18], 256
    $region257: #{gcnn_forward.1} parent=1 // pred_fallthru
      _
    // Predicated region
    $region258: #{gcnn_forward.1} parent=1 // pred_check
      _
    $region259: #{gcnn_forward.1} parent=1 // pred_check_branch
      %473 = sbr.rel (0) target = $region261
    $region260: #{gcnn_forward.1} parent=1 // pred_region
      %475 = dma.done [#allocation18], 512
    $region261: #{gcnn_forward.1} parent=1 // pred_fallthru
      _
    // Predicated region
    $region262: #{gcnn_forward.1} parent=1 // pred_check
      _
    $region263: #{gcnn_forward.1} parent=1 // pred_check_branch
      %477 = sbr.rel (0) target = $region265
    $region264: #{gcnn_forward.1} parent=1 // pred_region
      %479 = dma.done [#allocation21], 256
    $region265: #{gcnn_forward.1} parent=1 // pred_fallthru
      _
    // Predicated region
    $region266: #{gcnn_forward.1} parent=1 // pred_check
      _
    $region267: #{gcnn_forward.1} parent=1 // pred_check_branch
      %481 = sbr.rel (0) target = $region269
    $region268: #{gcnn_forward.1} parent=1 // pred_region
      %483 = dma.done [#allocation21], 512
    $region269: #{gcnn_forward.1} parent=1 // pred_fallthru
      _
    // Predicated region
    $region270: #{gcnn_forward.1} parent=1 // pred_check
      _
    $region271: #{gcnn_forward.1} parent=1 // pred_check_branch
      %485 = sbr.rel (0) target = $region273
    $region272: #{gcnn_forward.1} parent=1 // pred_region
      %487 = dma.done [#allocation24], 128
    $region273: #{gcnn_forward.1} parent=1 // pred_fallthru
      _
    // Predicated region
    $region274: #{gcnn_forward.1} parent=1 // pred_check
      _
    $region275: #{gcnn_forward.1} parent=1 // pred_check_branch
      %489 = sbr.rel (0) target = $region277
    $region276: #{gcnn_forward.1} parent=1 // pred_region
      %491 = dma.done [#allocation24], 256
    $region277: #{gcnn_forward.1} parent=1 // pred_fallthru
      _
    // Predicated region
    $region278: #{gcnn_forward.1} parent=1 // pred_check
      _
    $region279: #{gcnn_forward.1} parent=1 // pred_check_branch
      %493 = sbr.rel (0) target = $region281
    $region280: #{gcnn_forward.1} parent=1 // pred_region
      %495 = dma.done [#allocation27], 256
    $region281: #{gcnn_forward.1} parent=1 // pred_fallthru
      _
    // Predicated region
    $region282: #{gcnn_forward.1} parent=1 // pred_check
      _
    $region283: #{gcnn_forward.1} parent=1 // pred_check_branch
      %497 = sbr.rel (0) target = $region285
    $region284: #{gcnn_forward.1} parent=1 // pred_region
      %499 = dma.done [#allocation27], 256
    $region285: #{gcnn_forward.1} parent=1 // pred_fallthru
      _
    // Predicated region
    $region286: #{gcnn_forward.1} parent=1 // pred_check
      _
    $region287: #{gcnn_forward.1} parent=1 // pred_check_branch
      %501 = sbr.rel (0) target = $region289
    $region288: #{gcnn_forward.1} parent=1 // pred_region
      %503 = dma.done [#allocation30], 256
    $region289: #{gcnn_forward.1} parent=1 // pred_fallthru
      _
    %v504 = vld [vmem:[#allocation2] sm:$0xff]
    %v505 = vld [vmem:[#allocation2 + $0x8] sm:$0xff]
    %v506 = vld [vmem:[%s15] sm:$0x1]
    %v507 = vld [vmem:[#allocation5] sm:$0xff]
    %v508 = vld [vmem:[#allocation5 + $0x8] sm:$0xff]
    %v509 = vld [vmem:[#allocation5 + $0x10] sm:$0xff]
    %v510 = vld [vmem:[#allocation5 + $0x18] sm:$0xff]
    %v511 = vld [vmem:[%s19] sm:$0x1]
    %v512 = vld [vmem:[#allocation7] sm:$0xff]
    %v513 = vld [vmem:[#allocation7 + $0x8] sm:$0xff]
    %v514 = vld [vmem:[%s23] sm:$0x1]
    %v515 = vld [vmem:[#allocation8] sm:$0xff]
    %v516 = vld [vmem:[#allocation8 + $0x8] sm:$0xff]
    %v517 = vld [vmem:[#allocation8 + $0x10] sm:$0xff]
    %v518 = vld [vmem:[#allocation8 + $0x18] sm:$0xff]
    %v519 = vld [vmem:[%s27] sm:$0x1]
    %v520 = vld [vmem:[#allocation10] sm:$0xff]
    %v521 = vld [vmem:[#allocation10 + $0x8] sm:$0xff]
    %v522 = vld [vmem:[%s31] sm:$0x1]
    %v523 = vld [vmem:[#allocation11] sm:$0xff]
    %v524 = vld [vmem:[#allocation11 + $0x8] sm:$0xff]
    %v525 = vld [vmem:[#allocation11 + $0x10] sm:$0xff]
    %v526 = vld [vmem:[#allocation11 + $0x18] sm:$0xff]
    %v527 = vld [vmem:[%s35] sm:$0x1]
    %v528 = vld [vmem:[#allocation13] sm:$0xff]
    %v529 = vld [vmem:[#allocation13 + $0x8] sm:$0xff]
    %v530 = vld [vmem:[%s39] sm:$0x1]
    %v531 = vld [vmem:[#allocation14] sm:$0xff]
    %v532 = vld [vmem:[#allocation14 + $0x8] sm:$0xff]
    %v533 = vld [vmem:[#allocation14 + $0x10] sm:$0xff]
    %v534 = vld [vmem:[#allocation14 + $0x18] sm:$0xff]
    %v535 = vld [vmem:[%s43] sm:$0x1]
    %v536 = vld [vmem:[%s45] sm:$0x1]
    %v537 = vld [vmem:[%s47] sm:$0x1]
    %v538 = vld [vmem:[#allocation16] sm:$0xff]
    %v539 = vld [vmem:[#allocation16 + $0x8] sm:$0xff]
    %v540 = vld [vmem:[%s51] sm:$0x1]
    %v541 = vld [vmem:[#allocation17] sm:$0xff]
    %v542 = vld [vmem:[#allocation17 + $0x8] sm:$0xff]
    %v543 = vld [vmem:[%s55] sm:$0x1]
    %v544 = vld [vmem:[#allocation19] sm:$0xff]
    %v545 = vld [vmem:[#allocation19 + $0x8] sm:$0xff]
    %v546 = vld [vmem:[#allocation19 + $0x10] sm:$0xff]
    %v547 = vld [vmem:[#allocation19 + $0x18] sm:$0xff]
    %v548 = vld [vmem:[%s59] sm:$0x1]
    %v549 = vld [vmem:[#allocation20] sm:$0xff]
    %v550 = vld [vmem:[#allocation20 + $0x8] sm:$0xff]
    %v551 = vld [vmem:[%s63] sm:$0x1]
    %v552 = vld [vmem:[#allocation22] sm:$0xff]
    %v553 = vld [vmem:[#allocation22 + $0x8] sm:$0xff]
    %v554 = vld [vmem:[#allocation22 + $0x10] sm:$0xff]
    %v555 = vld [vmem:[#allocation22 + $0x18] sm:$0xff]
    %v556 = vld [vmem:[%s67] sm:$0x1]
    %v557 = vld [vmem:[#allocation23] sm:$0xff]
    %v558 = vld [vmem:[%s71] sm:$0x1]
    %v559 = vld [vmem:[#allocation25] sm:$0xff]
    %v560 = vld [vmem:[#allocation25 + $0x8] sm:$0xff]
    %v561 = vld [vmem:[%s75] sm:$0x1]
    %v562 = vld [vmem:[#allocation26] sm:$0xff]
    %v563 = vld [vmem:[#allocation26 + $0x8] sm:$0xff]
    %v564 = vld [vmem:[%s79] sm:$0x1]
    %v565 = vld [vmem:[%s81] sm:$0xff]
    %v566 = vld [vmem:[%s81 + $0x8] sm:$0xff]
    %v567 = vld [vmem:[%s81 + $0x10] sm:$0xff]
    %v568 = vld [vmem:[%s81 + $0x18] sm:$0xff]
    %v569 = vld [vmem:[%s83] sm:$0x1]
    %v570 = vld [vmem:[#allocation28] sm:$0xff]
    %v571 = vld [vmem:[#allocation28 + $0x8] sm:$0xff]
    %v572 = vld [vmem:[%s87] sm:$0x1]
    %v573 = vld [vmem:[%s89] sm:$0xff]
    %v574 = vld [vmem:[%s89 + $0x8] sm:$0xff]
    %v575 = vld [vmem:[%s89 + $0x10] sm:$0xff]
    %v576 = vld [vmem:[%s89 + $0x18] sm:$0xff]
    %v577 = vld [vmem:[%s91] sm:$0x1]
    %v578 = vld [vmem:[%s93] sm:$0xff]
    %v579 = vld [vmem:[%s95] sm:$0x1]
    %v580 = vld [vmem:[#allocation29] sm:$0xff]
    %v581 = vld [vmem:[#allocation29 + $0x8] sm:$0xff]
    %v582 = vld [vmem:[%s99] sm:$0x1]
    %v583 = vld [vmem:[%s101] sm:$0xff]
    %v584 = vld [vmem:[%s101 + $0x8] sm:$0xff]
    %v585 = vld [vmem:[%s103] sm:$0x1]
    %v586 = vld [vmem:[%s105] sm:$0xff]
    %v587 = vld [vmem:[%s105 + $0x8] sm:$0xff]
    %v588 = vld [vmem:[%s105 + $0x10] sm:$0xff]
    %v589 = vld [vmem:[%s105 + $0x18] sm:$0xff]
    %v590 = vld [vmem:[%s107] sm:$0x1]
    %v591 = vld [vmem:[%s1] sm:$0xff]
    %v592 = vld [vmem:[%s1 + $0x8] sm:$0xff]
    %v593 = vld [vmem:[%s1 + $0x10] sm:$0xff]
    %v594 = vld [vmem:[%s3] sm:$0xff]
    %v595 = vld [vmem:[%s3 + $0x8] sm:$0xff]
    %v596 = vld [vmem:[%s3 + $0x10] sm:$0xff]
    %v597 = vld [vmem:[%s5] sm:$0x1]
    %v598 = vld [vmem:[%s7] sm:$0x1]
    %v599 = vlaneseq
    %v600 = vand.u32 %v599, 127
    %601 = vset.pattern.permute.xlu0 0
    %602 = vperm.xlu0 %601, %v591
    %v603 = vpop.permute.xlu0 %602
    %604 = vset.pattern.permute.xlu0 0
    %605 = vperm.xlu0 %604, %v592
    %v606 = vpop.permute.xlu0 %605
    %607 = vset.pattern.permute.xlu0 0
    %608 = vperm.xlu0 %607, %v593
    %v609 = vpop.permute.xlu0 %608
    %vm610 = vcmp.eq.s32.totalorder %v603, %v600
    %vm611 = vcmp.eq.s32.totalorder %v606, %v600
    %vm612 = vcmp.eq.s32.totalorder %v609, %v600
    %v613 = vsel %vm610, 1, 0
    %v614 = vsel %vm611, 1, 0
    %v615 = vsel %vm612, 1, 0
    %v616 = vcvt.s32.f32 %v613
    %v617 = vcvt.s32.f32 %v614
    %v618 = vcvt.s32.f32 %v615
    %619 = vset.pattern.permute.xlu0 0
    %620 = vperm.xlu0 %619, %v594
    %v621 = vpop.permute.xlu0 %620
    %622 = vset.pattern.permute.xlu0 0
    %623 = vperm.xlu0 %622, %v595
    %v624 = vpop.permute.xlu0 %623
    %625 = vset.pattern.permute.xlu0 0
    %626 = vperm.xlu0 %625, %v596
    %v627 = vpop.permute.xlu0 %626
    %vm628 = vcmp.eq.s32.totalorder %v621, %v600
    %vm629 = vcmp.eq.s32.totalorder %v624, %v600
    %vm630 = vcmp.eq.s32.totalorder %v627, %v600
    %v631 = vsel %vm628, 1, 0
    %v632 = vsel %vm629, 1, 0
    %v633 = vsel %vm630, 1, 0
    %v634 = vcvt.s32.f32 %v631
    %v635 = vcvt.s32.f32 %v632
    %v636 = vcvt.s32.f32 %v633
    %v637 = vlaneseq
    %v638 = vshrl.u32 %v637, 7
    %v639 = vadd.s32 %v638, 8
    %v640 = vperm.slane %v597, 0
    %vm641 = vcmp.eq.s32.totalorder %v638, %v640
    %vm642 = vcmp.eq.s32.totalorder %v639, %v640
    %v643 = vsel %vm641, 1, 0
    %v644 = vsel %vm642, 1, 0
    %v645 = vcvt.s32.f32 %v643
    %v646 = vcvt.s32.f32 %v644
    %v647 = vperm.slane %v598, 0
    %vm648 = vcmp.eq.s32.totalorder %v638, %v647
    %vm649 = vcmp.eq.s32.totalorder %v639, %v647
    %v650 = vsel %vm648, 1, 0
    %v651 = vsel %vm649, 1, 0
    %v652 = vcvt.s32.f32 %v650
    %v653 = vcvt.s32.f32 %v651
    %v654 = vadd.f32 %v645, %v652
    %v655 = vadd.f32 %v646, %v653
    %vm656 = vcmask 195584
    %v657 = vsel %vm656, %v654, 0.0
    %658 = vadd.xlane.f32.xlu0 %v657
    %v659 = vpop.xlane.xlu0 %658
    %v660 = vsel %vm656, %v655, 0.0
    %661 = vadd.xlane.f32.xlu0 %v660
    %v662 = vpop.xlane.xlu0 %661
    %v663 = vmax.f32 %v659, 1.0
    %v664 = vmax.f32 %v662, 1.0
    %v665 = vld [vmem:[%s9] sm:$0xff]
    %v666 = vld [vmem:[%s9 + $0x8] sm:$0xff]
    %vm667 = vcmask 130048
    %v669 = vsel %vm667, %v616, 0
    %v672 = vsel %vm667, %v617, 0
    %v675 = vsel %vm667, %v618, 0
    %677 = vmatpush.msra.mxu0 0.0
    %678 = vmatpush.msra.mxu0 0.0
    %679 = vmatpush.msra.mxu0 0.0
    %680 = vmatpush.msra.mxu0 0.0
    %681 = vmatpush.msra.mxu0 0.0
    %682 = vmatpush.msra.mxu0 0.0
    %683 = vmatpush.msra.mxu0 0.0
    %684 = vmatpush.msra.mxu0 0.0
    %685 = vmatpush.msra.mxu0 0.0
    %686 = vmatpush.msra.mxu0 0.0
    %687 = vmatpush.msra.mxu0 0.0
    %688 = vmatpush.msra.mxu0 0.0
    %689 = vmatpush.msra.mxu0 0.0
    %690 = vmatpush.msra.mxu0 0.0
    %691 = vmatpush.msra.mxu0 %v666
    %692 = vmatpush.msra.mxu0 %v665
    %693 = vmatmul.f32.gmra.mxu0 %v669
    %v694 = vpop.f32.mrf.mxu0
    %v695 = vadd.f32 0.0, %v694
    %696 = vmatmul.f32.gmra.mxu0 %v672
    %v697 = vpop.f32.mrf.mxu0
    %v698 = vadd.f32 0.0, %v697
    %699 = vmatmul.f32.gmra.mxu0 %v675
    %v700 = vpop.f32.mrf.mxu0
    %v701 = vadd.f32 0.0, %v700
    %702 = vdwg.mxu0
    %v704 = vsel %vm667, %v634, 0
    %v707 = vsel %vm667, %v635, 0
    %v710 = vsel %vm667, %v636, 0
    %712 = vmatpush.msra.mxu0 0.0
    %713 = vmatpush.msra.mxu0 0.0
    %714 = vmatpush.msra.mxu0 0.0
    %715 = vmatpush.msra.mxu0 0.0
    %716 = vmatpush.msra.mxu0 0.0
    %717 = vmatpush.msra.mxu0 0.0
    %718 = vmatpush.msra.mxu0 0.0
    %719 = vmatpush.msra.mxu0 0.0
    %720 = vmatpush.msra.mxu0 0.0
    %721 = vmatpush.msra.mxu0 0.0
    %722 = vmatpush.msra.mxu0 0.0
    %723 = vmatpush.msra.mxu0 0.0
    %724 = vmatpush.msra.mxu0 0.0
    %725 = vmatpush.msra.mxu0 0.0
    %726 = vmatpush.msra.mxu0 %v666
    %727 = vmatpush.msra.mxu0 %v665
    %728 = vmatmul.f32.gmra.mxu0 %v704
    %v729 = vpop.f32.mrf.mxu0
    %v730 = vadd.f32 0.0, %v729
    %731 = vmatmul.f32.gmra.mxu0 %v707
    %v732 = vpop.f32.mrf.mxu0
    %v733 = vadd.f32 0.0, %v732
    %734 = vmatmul.f32.gmra.mxu0 %v710
    %v735 = vpop.f32.mrf.mxu0
    %v736 = vadd.f32 0.0, %v735
    %737 = vdwg.mxu0
    %vm738 = vcmask 64512
    %v740 = vsel %vm738, %v695, 0
    %v743 = vsel %vm738, %v698, 0
    %v746 = vsel %vm738, %v701, 0
    %748 = vmatpush.msra.mxu0 0.0
    %749 = vmatpush.msra.mxu0 0.0
    %750 = vmatpush.msra.mxu0 0.0
    %751 = vmatpush.msra.mxu0 0.0
    %752 = vmatpush.msra.mxu0 0.0
    %753 = vmatpush.msra.mxu0 0.0
    %754 = vmatpush.msra.mxu0 0.0
    %755 = vmatpush.msra.mxu0 0.0
    %756 = vmatpush.msra.mxu0 0.0
    %757 = vmatpush.msra.mxu0 0.0
    %758 = vmatpush.msra.mxu0 0.0
    %759 = vmatpush.msra.mxu0 0.0
    %760 = vmatpush.msra.mxu0 0.0
    %761 = vmatpush.msra.mxu0 0.0
    %762 = vmatpush.msra.mxu0 0.0
    %763 = vmatpush.msra.mxu0 %v505
    %764 = vmatmul.f32.gmra.mxu0 %v740
    %v765 = vpop.f32.mrf.mxu0
    %v766 = vadd.f32 0.0, %v765
    %767 = vmatmul.f32.gmra.mxu0 %v743
    %v768 = vpop.f32.mrf.mxu0
    %v769 = vadd.f32 0.0, %v768
    %770 = vmatmul.f32.gmra.mxu0 %v746
    %v771 = vpop.f32.mrf.mxu0
    %v772 = vadd.f32 0.0, %v771
    %773 = vdwg.mxu0
    %v775 = vsel %vm738, %v730, 0
    %v778 = vsel %vm738, %v733, 0
    %v781 = vsel %vm738, %v736, 0
    %783 = vmatpush.msra.mxu0 0.0
    %784 = vmatpush.msra.mxu0 0.0
    %785 = vmatpush.msra.mxu0 0.0
    %786 = vmatpush.msra.mxu0 0.0
    %787 = vmatpush.msra.mxu0 0.0
    %788 = vmatpush.msra.mxu0 0.0
    %789 = vmatpush.msra.mxu0 0.0
    %790 = vmatpush.msra.mxu0 0.0
    %791 = vmatpush.msra.mxu0 0.0
    %792 = vmatpush.msra.mxu0 0.0
    %793 = vmatpush.msra.mxu0 0.0
    %794 = vmatpush.msra.mxu0 0.0
    %795 = vmatpush.msra.mxu0 0.0
    %796 = vmatpush.msra.mxu0 0.0
    %797 = vmatpush.msra.mxu0 0.0
    %798 = vmatpush.msra.mxu0 %v504
    %799 = vmatmul.f32.gmra.mxu0 %v775
    %v800 = vpop.f32.mrf.mxu0
    %v801 = vadd.f32 %v766, %v800
    %802 = vmatmul.f32.gmra.mxu0 %v778
    %v803 = vpop.f32.mrf.mxu0
    %v804 = vadd.f32 %v769, %v803
    %805 = vmatmul.f32.gmra.mxu0 %v781
    %v806 = vpop.f32.mrf.mxu0
    %v807 = vadd.f32 %v772, %v806
    %808 = vdwg.mxu0
    %v810 = vperm.slane %v506, 0
    %v812 = vadd.f32 %v801, %v810
    %v813 = vadd.f32 %v804, %v810
    %v814 = vadd.f32 %v807, %v810
    %vm815 = vcmp.gt.f32.partialorder %v812, 0.0
    %vm816 = vcmp.gt.f32.partialorder %v813, 0.0
    %vm817 = vcmp.gt.f32.partialorder %v814, 0.0
    %v818 = vmul.f32 %v812, 0.01
    %v819 = vmul.f32 %v813, 0.01
    %v820 = vmul.f32 %v814, 0.01
    %v821 = vsel %vm815, %v812, %v818
    %v822 = vsel %vm816, %v813, %v819
    %v823 = vsel %vm817, %v814, %v820
    %v825 = vperm.slane %v511, 0
    %vm827 = vcmask 261120
    %v829 = vsel %vm827, %v821, 0
    %v832 = vsel %vm827, %v822, 0
    %v835 = vsel %vm827, %v823, 0
    %837 = vmatpush.msra.mxu0 0.0
    %838 = vmatpush.msra.mxu0 0.0
    %839 = vmatpush.msra.mxu0 0.0
    %840 = vmatpush.msra.mxu0 0.0
    %841 = vmatpush.msra.mxu0 0.0
    %842 = vmatpush.msra.mxu0 0.0
    %843 = vmatpush.msra.mxu0 0.0
    %844 = vmatpush.msra.mxu0 0.0
    %845 = vmatpush.msra.mxu0 0.0
    %846 = vmatpush.msra.mxu0 0.0
    %847 = vmatpush.msra.mxu0 0.0
    %848 = vmatpush.msra.mxu0 0.0
    %849 = vmatpush.msra.mxu0 %v510
    %850 = vmatpush.msra.mxu0 %v509
    %851 = vmatpush.msra.mxu0 %v508
    %852 = vmatpush.msra.mxu0 %v507
    %853 = vmatmul.f32.gmra.mxu0 %v829
    %v854 = vpop.f32.mrf.mxu0
    %v855 = vadd.f32 %v825, %v854
    %856 = vmatmul.f32.gmra.mxu0 %v832
    %v857 = vpop.f32.mrf.mxu0
    %v858 = vadd.f32 %v825, %v857
    %859 = vmatmul.f32.gmra.mxu0 %v835
    %v860 = vpop.f32.mrf.mxu0
    %v861 = vadd.f32 %v825, %v860
    %862 = vdwg.mxu0
    %863 = vmatpush.msra.mxu0 0.0
    %864 = vmatpush.msra.mxu0 0.0
    %865 = vmatpush.msra.mxu0 0.0
    %866 = vmatpush.msra.mxu0 0.0
    %867 = vmatpush.msra.mxu0 0.0
    %868 = vmatpush.msra.mxu0 0.0
    %869 = vmatpush.msra.mxu0 0.0
    %870 = vmatpush.msra.mxu0 0.0
    %871 = vmatpush.msra.mxu0 0.0
    %872 = vmatpush.msra.mxu0 0.0
    %873 = vmatpush.msra.mxu0 0.0
    %874 = vmatpush.msra.mxu0 0.0
    %875 = vmatpush.msra.mxu0 0.0
    %876 = vmatpush.msra.mxu0 0.0
    %877 = vmatpush.msra.mxu0 0.0
    %878 = vmatpush.msra.mxu0 %v505
    %879 = vmatmul.f32.gmra.mxu0 %v775
    %v880 = vpop.f32.mrf.mxu0
    %v881 = vadd.f32 0.0, %v880
    %882 = vmatmul.f32.gmra.mxu0 %v778
    %v883 = vpop.f32.mrf.mxu0
    %v884 = vadd.f32 0.0, %v883
    %885 = vmatmul.f32.gmra.mxu0 %v781
    %v886 = vpop.f32.mrf.mxu0
    %v887 = vadd.f32 0.0, %v886
    %888 = vdwg.mxu0
    %889 = vmatpush.msra.mxu0 0.0
    %890 = vmatpush.msra.mxu0 0.0
    %891 = vmatpush.msra.mxu0 0.0
    %892 = vmatpush.msra.mxu0 0.0
    %893 = vmatpush.msra.mxu0 0.0
    %894 = vmatpush.msra.mxu0 0.0
    %895 = vmatpush.msra.mxu0 0.0
    %896 = vmatpush.msra.mxu0 0.0
    %897 = vmatpush.msra.mxu0 0.0
    %898 = vmatpush.msra.mxu0 0.0
    %899 = vmatpush.msra.mxu0 0.0
    %900 = vmatpush.msra.mxu0 0.0
    %901 = vmatpush.msra.mxu0 0.0
    %902 = vmatpush.msra.mxu0 0.0
    %903 = vmatpush.msra.mxu0 0.0
    %904 = vmatpush.msra.mxu0 %v504
    %905 = vmatmul.f32.gmra.mxu0 %v740
    %v906 = vpop.f32.mrf.mxu0
    %v907 = vadd.f32 %v881, %v906
    %908 = vmatmul.f32.gmra.mxu0 %v743
    %v909 = vpop.f32.mrf.mxu0
    %v910 = vadd.f32 %v884, %v909
    %911 = vmatmul.f32.gmra.mxu0 %v746
    %v912 = vpop.f32.mrf.mxu0
    %v913 = vadd.f32 %v887, %v912
    %914 = vdwg.mxu0
    %v915 = vadd.f32 %v907, %v810
    %v916 = vadd.f32 %v910, %v810
    %v917 = vadd.f32 %v913, %v810
    %vm918 = vcmp.gt.f32.partialorder %v915, 0.0
    %vm919 = vcmp.gt.f32.partialorder %v916, 0.0
    %vm920 = vcmp.gt.f32.partialorder %v917, 0.0
    %v921 = vmul.f32 %v915, 0.01
    %v922 = vmul.f32 %v916, 0.01
    %v923 = vmul.f32 %v917, 0.01
    %v924 = vsel %vm918, %v915, %v921
    %v925 = vsel %vm919, %v916, %v922
    %v926 = vsel %vm920, %v917, %v923
    %v928 = vsel %vm827, %v924, 0
    %v931 = vsel %vm827, %v925, 0
    %v934 = vsel %vm827, %v926, 0
    %936 = vmatpush.msra.mxu0 0.0
    %937 = vmatpush.msra.mxu0 0.0
    %938 = vmatpush.msra.mxu0 0.0
    %939 = vmatpush.msra.mxu0 0.0
    %940 = vmatpush.msra.mxu0 0.0
    %941 = vmatpush.msra.mxu0 0.0
    %942 = vmatpush.msra.mxu0 0.0
    %943 = vmatpush.msra.mxu0 0.0
    %944 = vmatpush.msra.mxu0 0.0
    %945 = vmatpush.msra.mxu0 0.0
    %946 = vmatpush.msra.mxu0 0.0
    %947 = vmatpush.msra.mxu0 0.0
    %948 = vmatpush.msra.mxu0 %v510
    %949 = vmatpush.msra.mxu0 %v509
    %950 = vmatpush.msra.mxu0 %v508
    %951 = vmatpush.msra.mxu0 %v507
    %952 = vmatmul.f32.gmra.mxu0 %v928
    %v953 = vpop.f32.mrf.mxu0
    %v954 = vadd.f32 %v825, %v953
    %955 = vmatmul.f32.gmra.mxu0 %v931
    %v956 = vpop.f32.mrf.mxu0
    %v957 = vadd.f32 %v825, %v956
    %958 = vmatmul.f32.gmra.mxu0 %v934
    %v959 = vpop.f32.mrf.mxu0
    %v960 = vadd.f32 %v825, %v959
    %961 = vdwg.mxu0
    %v963 = vsel %vm656, %v645, 0
    %v966 = vsel %vm656, %v646, 0
    %968 = vmatpush.msra.mxu0 0.0
    %969 = vmatpush.msra.mxu0 0.0
    %970 = vmatpush.msra.mxu0 0.0
    %971 = vmatpush.msra.mxu0 0.0
    %972 = vmatpush.msra.mxu0 0.0
    %973 = vmatpush.msra.mxu0 0.0
    %974 = vmatpush.msra.mxu0 0.0
    %975 = vmatpush.msra.mxu0 0.0
    %976 = vmatpush.msra.mxu0 0.0
    %977 = vmatpush.msra.mxu0 0.0
    %978 = vmatpush.msra.mxu0 0.0
    %979 = vmatpush.msra.mxu0 0.0
    %980 = vmatpush.msra.mxu0 0.0
    %981 = vmatpush.msra.mxu0 %v960
    %982 = vmatpush.msra.mxu0 %v957
    %983 = vmatpush.msra.mxu0 %v954
    %984 = vmatmul.f32.gmra.mxu0 %v963
    %v985 = vpop.f32.mrf.mxu0
    %v986 = vadd.f32 0.0, %v985
    %987 = vmatmul.f32.gmra.mxu0 %v966
    %v988 = vpop.f32.mrf.mxu0
    %v989 = vadd.f32 0.0, %v988
    %990 = vdwg.mxu0
    %v992 = vsel %vm656, %v652, 0
    %v995 = vsel %vm656, %v653, 0
    %997 = vmatpush.msra.mxu0 0.0
    %998 = vmatpush.msra.mxu0 0.0
    %999 = vmatpush.msra.mxu0 0.0
    %1000 = vmatpush.msra.mxu0 0.0
    %1001 = vmatpush.msra.mxu0 0.0
    %1002 = vmatpush.msra.mxu0 0.0
    %1003 = vmatpush.msra.mxu0 0.0
    %1004 = vmatpush.msra.mxu0 0.0
    %1005 = vmatpush.msra.mxu0 0.0
    %1006 = vmatpush.msra.mxu0 0.0
    %1007 = vmatpush.msra.mxu0 0.0
    %1008 = vmatpush.msra.mxu0 0.0
    %1009 = vmatpush.msra.mxu0 0.0
    %1010 = vmatpush.msra.mxu0 %v861
    %1011 = vmatpush.msra.mxu0 %v858
    %1012 = vmatpush.msra.mxu0 %v855
    %1013 = vmatmul.f32.gmra.mxu0 %v992
    %v1014 = vpop.f32.mrf.mxu0
    %v1015 = vadd.f32 %v986, %v1014
    %1016 = vmatmul.f32.gmra.mxu0 %v995
    %v1017 = vpop.f32.mrf.mxu0
    %v1018 = vadd.f32 %v989, %v1017
    %1019 = vdwg.mxu0
    %v1020 = vrcp.pop %v663
    %v1021 = vmul.f32 %v663, %v1020
    %v1022 = vsub.f32 1.0, %v1021
    %v1023 = vmul.f32 %v1020, %v1022
    %v1024 = vadd.f32 %v1020, %v1023
    %vm1025 = vweird.f32 %v663
    %vm1026 = vweird.f32 %v1020
    %vm1027 = vmor %vm1025, %vm1026
    %v1028 = vsel %vm1027, %v1020, %v1024
    %v1029 = vand.u32 2147483647, %v663
    %vm1030 = vcmp.eq.f32.partialorder %v1029, 8.507059e+37
    %v1031 = vand.u32 %v663, 2147483648
    %v1032 = vor.u32 1.1754944e-38, %v1031
    %v1033 = vsel %vm1030, %v1032, %v1028
    %v1034 = vmul.f32 %v1015, %v1033
    %v1035 = vrcp.pop %v664
    %v1036 = vmul.f32 %v664, %v1035
    %v1037 = vsub.f32 1.0, %v1036
    %v1038 = vmul.f32 %v1035, %v1037
    %v1039 = vadd.f32 %v1035, %v1038
    %vm1040 = vweird.f32 %v664
    %vm1041 = vweird.f32 %v1035
    %vm1042 = vmor %vm1040, %vm1041
    %v1043 = vsel %vm1042, %v1035, %v1039
    %v1044 = vand.u32 2147483647, %v664
    %vm1045 = vcmp.eq.f32.partialorder %v1044, 8.507059e+37
    %v1046 = vand.u32 %v664, 2147483648
    %v1047 = vor.u32 1.1754944e-38, %v1046
    %v1048 = vsel %vm1045, %v1047, %v1043
    %v1049 = vmul.f32 %v1018, %v1048
    %v1050 = vld [vmem:[%s11] sm:$0xff]
    %v1051 = vld [vmem:[%s11 + $0x8] sm:$0xff]
    %v1052 = vld [vmem:[%s11 + $0x10] sm:$0xff]
    %1053 = vmatpush.msra.mxu0 0.0
    %1054 = vmatpush.msra.mxu0 0.0
    %1055 = vmatpush.msra.mxu0 0.0
    %1056 = vmatpush.msra.mxu0 0.0
    %1057 = vmatpush.msra.mxu0 0.0
    %1058 = vmatpush.msra.mxu0 0.0
    %1059 = vmatpush.msra.mxu0 0.0
    %1060 = vmatpush.msra.mxu0 0.0
    %1061 = vmatpush.msra.mxu0 0.0
    %1062 = vmatpush.msra.mxu0 0.0
    %1063 = vmatpush.msra.mxu0 0.0
    %1064 = vmatpush.msra.mxu0 0.0
    %1065 = vmatpush.msra.mxu0 0.0
    %1066 = vmatpush.msra.mxu0 0.0
    %1067 = vmatpush.msra.mxu0 %v1049
    %1068 = vmatpush.msra.mxu0 %v1034
    %1069 = vmatmul.f32.gmra.mxu0 %v669
    %v1070 = vpop.f32.mrf.mxu0
    %v1071 = vadd.f32 0.0, %v1070
    %1072 = vmatmul.f32.gmra.mxu0 %v672
    %v1073 = vpop.f32.mrf.mxu0
    %v1074 = vadd.f32 0.0, %v1073
    %1075 = vmatmul.f32.gmra.mxu0 %v675
    %v1076 = vpop.f32.mrf.mxu0
    %v1077 = vadd.f32 0.0, %v1076
    %1078 = vdwg.mxu0
    %1079 = vmatpush.msra.mxu0 0.0
    %1080 = vmatpush.msra.mxu0 0.0
    %1081 = vmatpush.msra.mxu0 0.0
    %1082 = vmatpush.msra.mxu0 0.0
    %1083 = vmatpush.msra.mxu0 0.0
    %1084 = vmatpush.msra.mxu0 0.0
    %1085 = vmatpush.msra.mxu0 0.0
    %1086 = vmatpush.msra.mxu0 0.0
    %1087 = vmatpush.msra.mxu0 0.0
    %1088 = vmatpush.msra.mxu0 0.0
    %1089 = vmatpush.msra.mxu0 0.0
    %1090 = vmatpush.msra.mxu0 0.0
    %1091 = vmatpush.msra.mxu0 0.0
    %1092 = vmatpush.msra.mxu0 0.0
    %1093 = vmatpush.msra.mxu0 %v1049
    %1094 = vmatpush.msra.mxu0 %v1034
    %1095 = vmatmul.f32.gmra.mxu0 %v704
    %v1096 = vpop.f32.mrf.mxu0
    %v1097 = vadd.f32 0.0, %v1096
    %1098 = vmatmul.f32.gmra.mxu0 %v707
    %v1099 = vpop.f32.mrf.mxu0
    %v1100 = vadd.f32 0.0, %v1099
    %1101 = vmatmul.f32.gmra.mxu0 %v710
    %v1102 = vpop.f32.mrf.mxu0
    %v1103 = vadd.f32 0.0, %v1102
    %1104 = vdwg.mxu0
    %v1106 = vsel %vm738, %v1097, 0
    %v1109 = vsel %vm738, %v1100, 0
    %v1112 = vsel %vm738, %v1103, 0
    %1114 = vmatpush.msra.mxu0 0.0
    %1115 = vmatpush.msra.mxu0 0.0
    %1116 = vmatpush.msra.mxu0 0.0
    %1117 = vmatpush.msra.mxu0 0.0
    %1118 = vmatpush.msra.mxu0 0.0
    %1119 = vmatpush.msra.mxu0 0.0
    %1120 = vmatpush.msra.mxu0 0.0
    %1121 = vmatpush.msra.mxu0 0.0
    %1122 = vmatpush.msra.mxu0 0.0
    %1123 = vmatpush.msra.mxu0 0.0
    %1124 = vmatpush.msra.mxu0 0.0
    %1125 = vmatpush.msra.mxu0 0.0
    %1126 = vmatpush.msra.mxu0 0.0
    %1127 = vmatpush.msra.mxu0 0.0
    %1128 = vmatpush.msra.mxu0 0.0
    %1129 = vmatpush.msra.mxu0 %v529
    %1130 = vmatmul.f32.gmra.mxu0 %v1106
    %v1131 = vpop.f32.mrf.mxu0
    %v1132 = vadd.f32 0.0, %v1131
    %1133 = vmatmul.f32.gmra.mxu0 %v1109
    %v1134 = vpop.f32.mrf.mxu0
    %v1135 = vadd.f32 0.0, %v1134
    %1136 = vmatmul.f32.gmra.mxu0 %v1112
    %v1137 = vpop.f32.mrf.mxu0
    %v1138 = vadd.f32 0.0, %v1137
    %1139 = vdwg.mxu0
    %v1141 = vsel %vm738, %v1071, 0
    %v1144 = vsel %vm738, %v1074, 0
    %v1147 = vsel %vm738, %v1077, 0
    %1149 = vmatpush.msra.mxu0 0.0
    %1150 = vmatpush.msra.mxu0 0.0
    %1151 = vmatpush.msra.mxu0 0.0
    %1152 = vmatpush.msra.mxu0 0.0
    %1153 = vmatpush.msra.mxu0 0.0
    %1154 = vmatpush.msra.mxu0 0.0
    %1155 = vmatpush.msra.mxu0 0.0
    %1156 = vmatpush.msra.mxu0 0.0
    %1157 = vmatpush.msra.mxu0 0.0
    %1158 = vmatpush.msra.mxu0 0.0
    %1159 = vmatpush.msra.mxu0 0.0
    %1160 = vmatpush.msra.mxu0 0.0
    %1161 = vmatpush.msra.mxu0 0.0
    %1162 = vmatpush.msra.mxu0 0.0
    %1163 = vmatpush.msra.mxu0 0.0
    %1164 = vmatpush.msra.mxu0 %v528
    %1165 = vmatmul.f32.gmra.mxu0 %v1141
    %v1166 = vpop.f32.mrf.mxu0
    %v1167 = vadd.f32 %v1132, %v1166
    %1168 = vmatmul.f32.gmra.mxu0 %v1144
    %v1169 = vpop.f32.mrf.mxu0
    %v1170 = vadd.f32 %v1135, %v1169
    %1171 = vmatmul.f32.gmra.mxu0 %v1147
    %v1172 = vpop.f32.mrf.mxu0
    %v1173 = vadd.f32 %v1138, %v1172
    %1174 = vdwg.mxu0
    %v1176 = vperm.slane %v530, 0
    %v1178 = vadd.f32 %v1167, %v1176
    %v1179 = vadd.f32 %v1170, %v1176
    %v1180 = vadd.f32 %v1173, %v1176
    %vm1181 = vcmp.gt.f32.partialorder %v1178, 0.0
    %vm1182 = vcmp.gt.f32.partialorder %v1179, 0.0
    %vm1183 = vcmp.gt.f32.partialorder %v1180, 0.0
    %v1184 = vmul.f32 %v1178, 0.01
    %v1185 = vmul.f32 %v1179, 0.01
    %v1186 = vmul.f32 %v1180, 0.01
    %v1187 = vsel %vm1181, %v1178, %v1184
    %v1188 = vsel %vm1182, %v1179, %v1185
    %v1189 = vsel %vm1183, %v1180, %v1186
    %v1191 = vperm.slane %v535, 0
    %v1194 = vsel %vm827, %v1187, 0
    %v1197 = vsel %vm827, %v1188, 0
    %v1200 = vsel %vm827, %v1189, 0
    %1202 = vmatpush.msra.mxu0 0.0
    %1203 = vmatpush.msra.mxu0 0.0
    %1204 = vmatpush.msra.mxu0 0.0
    %1205 = vmatpush.msra.mxu0 0.0
    %1206 = vmatpush.msra.mxu0 0.0
    %1207 = vmatpush.msra.mxu0 0.0
    %1208 = vmatpush.msra.mxu0 0.0
    %1209 = vmatpush.msra.mxu0 0.0
    %1210 = vmatpush.msra.mxu0 0.0
    %1211 = vmatpush.msra.mxu0 0.0
    %1212 = vmatpush.msra.mxu0 0.0
    %1213 = vmatpush.msra.mxu0 0.0
    %1214 = vmatpush.msra.mxu0 %v534
    %1215 = vmatpush.msra.mxu0 %v533
    %1216 = vmatpush.msra.mxu0 %v532
    %1217 = vmatpush.msra.mxu0 %v531
    %1218 = vmatmul.f32.gmra.mxu0 %v1194
    %v1219 = vpop.f32.mrf.mxu0
    %v1220 = vadd.f32 %v1191, %v1219
    %1221 = vmatmul.f32.gmra.mxu0 %v1197
    %v1222 = vpop.f32.mrf.mxu0
    %v1223 = vadd.f32 %v1191, %v1222
    %1224 = vmatmul.f32.gmra.mxu0 %v1200
    %v1225 = vpop.f32.mrf.mxu0
    %v1226 = vadd.f32 %v1191, %v1225
    %1227 = vdwg.mxu0
    %1228 = vmatpush.msra.mxu0 0.0
    %1229 = vmatpush.msra.mxu0 0.0
    %1230 = vmatpush.msra.mxu0 0.0
    %1231 = vmatpush.msra.mxu0 0.0
    %1232 = vmatpush.msra.mxu0 0.0
    %1233 = vmatpush.msra.mxu0 0.0
    %1234 = vmatpush.msra.mxu0 0.0
    %1235 = vmatpush.msra.mxu0 0.0
    %1236 = vmatpush.msra.mxu0 0.0
    %1237 = vmatpush.msra.mxu0 0.0
    %1238 = vmatpush.msra.mxu0 0.0
    %1239 = vmatpush.msra.mxu0 0.0
    %1240 = vmatpush.msra.mxu0 0.0
    %1241 = vmatpush.msra.mxu0 0.0
    %1242 = vmatpush.msra.mxu0 0.0
    %1243 = vmatpush.msra.mxu0 %v529
    %1244 = vmatmul.f32.gmra.mxu0 %v1141
    %v1245 = vpop.f32.mrf.mxu0
    %v1246 = vadd.f32 0.0, %v1245
    %1247 = vmatmul.f32.gmra.mxu0 %v1144
    %v1248 = vpop.f32.mrf.mxu0
    %v1249 = vadd.f32 0.0, %v1248
    %1250 = vmatmul.f32.gmra.mxu0 %v1147
    %v1251 = vpop.f32.mrf.mxu0
    %v1252 = vadd.f32 0.0, %v1251
    %1253 = vdwg.mxu0
    %1254 = vmatpush.msra.mxu0 0.0
    %1255 = vmatpush.msra.mxu0 0.0
    %1256 = vmatpush.msra.mxu0 0.0
    %1257 = vmatpush.msra.mxu0 0.0
    %1258 = vmatpush.msra.mxu0 0.0
    %1259 = vmatpush.msra.mxu0 0.0
    %1260 = vmatpush.msra.mxu0 0.0
    %1261 = vmatpush.msra.mxu0 0.0
    %1262 = vmatpush.msra.mxu0 0.0
    %1263 = vmatpush.msra.mxu0 0.0
    %1264 = vmatpush.msra.mxu0 0.0
    %1265 = vmatpush.msra.mxu0 0.0
    %1266 = vmatpush.msra.mxu0 0.0
    %1267 = vmatpush.msra.mxu0 0.0
    %1268 = vmatpush.msra.mxu0 0.0
    %1269 = vmatpush.msra.mxu0 %v528
    %1270 = vmatmul.f32.gmra.mxu0 %v1106
    %v1271 = vpop.f32.mrf.mxu0
    %v1272 = vadd.f32 %v1246, %v1271
    %1273 = vmatmul.f32.gmra.mxu0 %v1109
    %v1274 = vpop.f32.mrf.mxu0
    %v1275 = vadd.f32 %v1249, %v1274
    %1276 = vmatmul.f32.gmra.mxu0 %v1112
    %v1277 = vpop.f32.mrf.mxu0
    %v1278 = vadd.f32 %v1252, %v1277
    %1279 = vdwg.mxu0
    %v1280 = vadd.f32 %v1272, %v1176
    %v1281 = vadd.f32 %v1275, %v1176
    %v1282 = vadd.f32 %v1278, %v1176
    %vm1283 = vcmp.gt.f32.partialorder %v1280, 0.0
    %vm1284 = vcmp.gt.f32.partialorder %v1281, 0.0
    %vm1285 = vcmp.gt.f32.partialorder %v1282, 0.0
    %v1286 = vmul.f32 %v1280, 0.01
    %v1287 = vmul.f32 %v1281, 0.01
    %v1288 = vmul.f32 %v1282, 0.01
    %v1289 = vsel %vm1283, %v1280, %v1286
    %v1290 = vsel %vm1284, %v1281, %v1287
    %v1291 = vsel %vm1285, %v1282, %v1288
    %v1293 = vsel %vm827, %v1289, 0
    %v1296 = vsel %vm827, %v1290, 0
    %v1299 = vsel %vm827, %v1291, 0
    %1301 = vmatpush.msra.mxu0 0.0
    %1302 = vmatpush.msra.mxu0 0.0
    %1303 = vmatpush.msra.mxu0 0.0
    %1304 = vmatpush.msra.mxu0 0.0
    %1305 = vmatpush.msra.mxu0 0.0
    %1306 = vmatpush.msra.mxu0 0.0
    %1307 = vmatpush.msra.mxu0 0.0
    %1308 = vmatpush.msra.mxu0 0.0
    %1309 = vmatpush.msra.mxu0 0.0
    %1310 = vmatpush.msra.mxu0 0.0
    %1311 = vmatpush.msra.mxu0 0.0
    %1312 = vmatpush.msra.mxu0 0.0
    %1313 = vmatpush.msra.mxu0 %v534
    %1314 = vmatpush.msra.mxu0 %v533
    %1315 = vmatpush.msra.mxu0 %v532
    %1316 = vmatpush.msra.mxu0 %v531
    %1317 = vmatmul.f32.gmra.mxu0 %v1293
    %v1318 = vpop.f32.mrf.mxu0
    %v1319 = vadd.f32 %v1191, %v1318
    %1320 = vmatmul.f32.gmra.mxu0 %v1296
    %v1321 = vpop.f32.mrf.mxu0
    %v1322 = vadd.f32 %v1191, %v1321
    %1323 = vmatmul.f32.gmra.mxu0 %v1299
    %v1324 = vpop.f32.mrf.mxu0
    %v1325 = vadd.f32 %v1191, %v1324
    %1326 = vdwg.mxu0
    %v1327 = vsub.f32 %v1220, %v1319
    %v1328 = vsub.f32 %v1223, %v1322
    %v1329 = vsub.f32 %v1226, %v1325
    %v1330 = vmul.f32 %v1327, %v1327
    %v1331 = vmul.f32 %v1328, %v1328
    %v1332 = vmul.f32 %v1329, %v1329
    %v1333 = vsel %vm738, %v1330, 0.0
    %1334 = vadd.xlane.f32.xlu0 %v1333
    %v1335 = vpop.xlane.xlu0 %1334
    %v1336 = vsel %vm738, %v1331, 0.0
    %1337 = vadd.xlane.f32.xlu0 %v1336
    %v1338 = vpop.xlane.xlu0 %1337
    %v1339 = vsel %vm738, %v1332, 0.0
    %1340 = vadd.xlane.f32.xlu0 %v1339
    %v1341 = vpop.xlane.xlu0 %1340
    %v1342 = vadd.f32 %v1335, %v1338
    %v1343 = vadd.f32 %v1342, %v1341
    %v1344 = vrot.slane %v1343, 4
    %v1345 = vadd.f32 %v1343, %v1344
    %v1346 = vrot.slane %v1345, 2
    %v1347 = vadd.f32 %v1345, %v1346
    %v1348 = vrot.slane %v1347, 1
    %v1349 = vadd.f32 %v1347, %v1348
    %v1350 = vmul.f32 %v1349, 0.0052083335
    %v1351 = vadd.f32 %v1220, %v1319
    %v1352 = vadd.f32 %v1223, %v1322
    %v1353 = vadd.f32 %v1226, %v1325
    %v1354 = vmul.f32 %v1351, 0.5
    %v1355 = vmul.f32 %v1352, 0.5
    %v1356 = vmul.f32 %v1353, 0.5
    %v1358 = vperm.slane %v537, 0
    %vm1360 = vcmask 7168
    %v1362 = vsel %vm1360, %v1050, 0
    %v1365 = vsel %vm1360, %v1051, 0
    %v1368 = vsel %vm1360, %v1052, 0
    %vm1370 = vcmask 1040384
    %v1372 = vsel %vm1370, %v536, 0
    %1374 = vmatpush.msra.mxu0 0.0
    %1375 = vmatpush.msra.mxu0 0.0
    %1376 = vmatpush.msra.mxu0 0.0
    %1377 = vmatpush.msra.mxu0 0.0
    %1378 = vmatpush.msra.mxu0 0.0
    %1379 = vmatpush.msra.mxu0 0.0
    %1380 = vmatpush.msra.mxu0 0.0
    %1381 = vmatpush.msra.mxu0 0.0
    %1382 = vmatpush.msra.mxu0 0.0
    %1383 = vmatpush.msra.mxu0 0.0
    %1384 = vmatpush.msra.mxu0 0.0
    %1385 = vmatpush.msra.mxu0 0.0
    %1386 = vmatpush.msra.mxu0 0.0
    %1387 = vmatpush.msra.mxu0 0.0
    %1388 = vmatpush.msra.mxu0 0.0
    %1389 = vmatpush.msra.mxu0 %v1372
    %1390 = vmatmul.f32.gmra.mxu0 %v1362
    %v1391 = vpop.f32.mrf.mxu0
    %v1392 = vadd.f32 %v1358, %v1391
    %1393 = vmatmul.f32.gmra.mxu0 %v1365
    %v1394 = vpop.f32.mrf.mxu0
    %v1395 = vadd.f32 %v1358, %v1394
    %1396 = vmatmul.f32.gmra.mxu0 %v1368
    %v1397 = vpop.f32.mrf.mxu0
    %v1398 = vadd.f32 %v1358, %v1397
    %1399 = vdwg.mxu0
    %vm1400 = vcmp.gt.f32.partialorder %v1392, 0.0
    %vm1401 = vcmp.gt.f32.partialorder %v1395, 0.0
    %vm1402 = vcmp.gt.f32.partialorder %v1398, 0.0
    %v1403 = vmul.f32 %v1392, 0.01
    %v1404 = vmul.f32 %v1395, 0.01
    %v1405 = vmul.f32 %v1398, 0.01
    %v1406 = vsel %vm1400, %v1392, %v1403
    %v1407 = vsel %vm1401, %v1395, %v1404
    %v1408 = vsel %vm1402, %v1398, %v1405
    %v1410 = vperm.slane %v540, 0
    %v1413 = vsel %vm667, %v1406, 0
    %v1416 = vsel %vm667, %v1407, 0
    %v1419 = vsel %vm667, %v1408, 0
    %1421 = vmatpush.msra.mxu0 0.0
    %1422 = vmatpush.msra.mxu0 0.0
    %1423 = vmatpush.msra.mxu0 0.0
    %1424 = vmatpush.msra.mxu0 0.0
    %1425 = vmatpush.msra.mxu0 0.0
    %1426 = vmatpush.msra.mxu0 0.0
    %1427 = vmatpush.msra.mxu0 0.0
    %1428 = vmatpush.msra.mxu0 0.0
    %1429 = vmatpush.msra.mxu0 0.0
    %1430 = vmatpush.msra.mxu0 0.0
    %1431 = vmatpush.msra.mxu0 0.0
    %1432 = vmatpush.msra.mxu0 0.0
    %1433 = vmatpush.msra.mxu0 0.0
    %1434 = vmatpush.msra.mxu0 0.0
    %1435 = vmatpush.msra.mxu0 %v539
    %1436 = vmatpush.msra.mxu0 %v538
    %1437 = vmatmul.f32.gmra.mxu0 %v1413
    %v1438 = vpop.f32.mrf.mxu0
    %v1439 = vadd.f32 %v1410, %v1438
    %1440 = vmatmul.f32.gmra.mxu0 %v1416
    %v1441 = vpop.f32.mrf.mxu0
    %v1442 = vadd.f32 %v1410, %v1441
    %1443 = vmatmul.f32.gmra.mxu0 %v1419
    %v1444 = vpop.f32.mrf.mxu0
    %v1445 = vadd.f32 %v1410, %v1444
    %1446 = vdwg.mxu0
    %v1448 = vsel %vm738, %v1439, 0
    %v1451 = vsel %vm738, %v1442, 0
    %v1454 = vsel %vm738, %v1445, 0
    %1456 = vmatpush.msra.mxu0 0.0
    %1457 = vmatpush.msra.mxu0 0.0
    %1458 = vmatpush.msra.mxu0 0.0
    %1459 = vmatpush.msra.mxu0 0.0
    %1460 = vmatpush.msra.mxu0 0.0
    %1461 = vmatpush.msra.mxu0 0.0
    %1462 = vmatpush.msra.mxu0 0.0
    %1463 = vmatpush.msra.mxu0 0.0
    %1464 = vmatpush.msra.mxu0 0.0
    %1465 = vmatpush.msra.mxu0 0.0
    %1466 = vmatpush.msra.mxu0 0.0
    %1467 = vmatpush.msra.mxu0 0.0
    %1468 = vmatpush.msra.mxu0 0.0
    %1469 = vmatpush.msra.mxu0 0.0
    %1470 = vmatpush.msra.mxu0 0.0
    %1471 = vmatpush.msra.mxu0 %v542
    %1472 = vmatmul.f32.gmra.mxu0 %v1448
    %v1473 = vpop.f32.mrf.mxu0
    %v1474 = vadd.f32 0.0, %v1473
    %1475 = vmatmul.f32.gmra.mxu0 %v1451
    %v1476 = vpop.f32.mrf.mxu0
    %v1477 = vadd.f32 0.0, %v1476
    %1478 = vmatmul.f32.gmra.mxu0 %v1454
    %v1479 = vpop.f32.mrf.mxu0
    %v1480 = vadd.f32 0.0, %v1479
    %1481 = vdwg.mxu0
    %v1483 = vsel %vm738, %v1354, 0
    %v1486 = vsel %vm738, %v1355, 0
    %v1489 = vsel %vm738, %v1356, 0
    %1491 = vmatpush.msra.mxu0 0.0
    %1492 = vmatpush.msra.mxu0 0.0
    %1493 = vmatpush.msra.mxu0 0.0
    %1494 = vmatpush.msra.mxu0 0.0
    %1495 = vmatpush.msra.mxu0 0.0
    %1496 = vmatpush.msra.mxu0 0.0
    %1497 = vmatpush.msra.mxu0 0.0
    %1498 = vmatpush.msra.mxu0 0.0
    %1499 = vmatpush.msra.mxu0 0.0
    %1500 = vmatpush.msra.mxu0 0.0
    %1501 = vmatpush.msra.mxu0 0.0
    %1502 = vmatpush.msra.mxu0 0.0
    %1503 = vmatpush.msra.mxu0 0.0
    %1504 = vmatpush.msra.mxu0 0.0
    %1505 = vmatpush.msra.mxu0 0.0
    %1506 = vmatpush.msra.mxu0 %v541
    %1507 = vmatmul.f32.gmra.mxu0 %v1483
    %v1508 = vpop.f32.mrf.mxu0
    %v1509 = vadd.f32 %v1474, %v1508
    %1510 = vmatmul.f32.gmra.mxu0 %v1486
    %v1511 = vpop.f32.mrf.mxu0
    %v1512 = vadd.f32 %v1477, %v1511
    %1513 = vmatmul.f32.gmra.mxu0 %v1489
    %v1514 = vpop.f32.mrf.mxu0
    %v1515 = vadd.f32 %v1480, %v1514
    %1516 = vdwg.mxu0
    %v1518 = vperm.slane %v543, 0
    %v1520 = vadd.f32 %v1509, %v1518
    %v1521 = vadd.f32 %v1512, %v1518
    %v1522 = vadd.f32 %v1515, %v1518
    %vm1523 = vcmp.gt.f32.partialorder %v1520, 0.0
    %vm1524 = vcmp.gt.f32.partialorder %v1521, 0.0
    %vm1525 = vcmp.gt.f32.partialorder %v1522, 0.0
    %v1526 = vmul.f32 %v1520, 0.01
    %v1527 = vmul.f32 %v1521, 0.01
    %v1528 = vmul.f32 %v1522, 0.01
    %v1529 = vsel %vm1523, %v1520, %v1526
    %v1530 = vsel %vm1524, %v1521, %v1527
    %v1531 = vsel %vm1525, %v1522, %v1528
    %v1533 = vperm.slane %v548, 0
    %v1536 = vsel %vm827, %v1529, 0
    %v1539 = vsel %vm827, %v1530, 0
    %v1542 = vsel %vm827, %v1531, 0
    %1544 = vmatpush.msra.mxu0 0.0
    %1545 = vmatpush.msra.mxu0 0.0
    %1546 = vmatpush.msra.mxu0 0.0
    %1547 = vmatpush.msra.mxu0 0.0
    %1548 = vmatpush.msra.mxu0 0.0
    %1549 = vmatpush.msra.mxu0 0.0
    %1550 = vmatpush.msra.mxu0 0.0
    %1551 = vmatpush.msra.mxu0 0.0
    %1552 = vmatpush.msra.mxu0 0.0
    %1553 = vmatpush.msra.mxu0 0.0
    %1554 = vmatpush.msra.mxu0 0.0
    %1555 = vmatpush.msra.mxu0 0.0
    %1556 = vmatpush.msra.mxu0 %v547
    %1557 = vmatpush.msra.mxu0 %v546
    %1558 = vmatpush.msra.mxu0 %v545
    %1559 = vmatpush.msra.mxu0 %v544
    %1560 = vmatmul.f32.gmra.mxu0 %v1536
    %v1561 = vpop.f32.mrf.mxu0
    %v1562 = vadd.f32 %v1533, %v1561
    %1563 = vmatmul.f32.gmra.mxu0 %v1539
    %v1564 = vpop.f32.mrf.mxu0
    %v1565 = vadd.f32 %v1533, %v1564
    %1566 = vmatmul.f32.gmra.mxu0 %v1542
    %v1567 = vpop.f32.mrf.mxu0
    %v1568 = vadd.f32 %v1533, %v1567
    %1569 = vdwg.mxu0
    %1570 = vmatpush.msra.mxu0 0.0
    %1571 = vmatpush.msra.mxu0 0.0
    %1572 = vmatpush.msra.mxu0 0.0
    %1573 = vmatpush.msra.mxu0 0.0
    %1574 = vmatpush.msra.mxu0 0.0
    %1575 = vmatpush.msra.mxu0 0.0
    %1576 = vmatpush.msra.mxu0 0.0
    %1577 = vmatpush.msra.mxu0 0.0
    %1578 = vmatpush.msra.mxu0 0.0
    %1579 = vmatpush.msra.mxu0 0.0
    %1580 = vmatpush.msra.mxu0 0.0
    %1581 = vmatpush.msra.mxu0 0.0
    %1582 = vmatpush.msra.mxu0 0.0
    %1583 = vmatpush.msra.mxu0 0.0
    %1584 = vmatpush.msra.mxu0 0.0
    %1585 = vmatpush.msra.mxu0 %v513
    %1586 = vmatmul.f32.gmra.mxu0 %v1141
    %v1587 = vpop.f32.mrf.mxu0
    %v1588 = vadd.f32 0.0, %v1587
    %1589 = vmatmul.f32.gmra.mxu0 %v1144
    %v1590 = vpop.f32.mrf.mxu0
    %v1591 = vadd.f32 0.0, %v1590
    %1592 = vmatmul.f32.gmra.mxu0 %v1147
    %v1593 = vpop.f32.mrf.mxu0
    %v1594 = vadd.f32 0.0, %v1593
    %1595 = vdwg.mxu0
    %1596 = vmatpush.msra.mxu0 0.0
    %1597 = vmatpush.msra.mxu0 0.0
    %1598 = vmatpush.msra.mxu0 0.0
    %1599 = vmatpush.msra.mxu0 0.0
    %1600 = vmatpush.msra.mxu0 0.0
    %1601 = vmatpush.msra.mxu0 0.0
    %1602 = vmatpush.msra.mxu0 0.0
    %1603 = vmatpush.msra.mxu0 0.0
    %1604 = vmatpush.msra.mxu0 0.0
    %1605 = vmatpush.msra.mxu0 0.0
    %1606 = vmatpush.msra.mxu0 0.0
    %1607 = vmatpush.msra.mxu0 0.0
    %1608 = vmatpush.msra.mxu0 0.0
    %1609 = vmatpush.msra.mxu0 0.0
    %1610 = vmatpush.msra.mxu0 0.0
    %1611 = vmatpush.msra.mxu0 %v512
    %1612 = vmatmul.f32.gmra.mxu0 %v1106
    %v1613 = vpop.f32.mrf.mxu0
    %v1614 = vadd.f32 %v1588, %v1613
    %1615 = vmatmul.f32.gmra.mxu0 %v1109
    %v1616 = vpop.f32.mrf.mxu0
    %v1617 = vadd.f32 %v1591, %v1616
    %1618 = vmatmul.f32.gmra.mxu0 %v1112
    %v1619 = vpop.f32.mrf.mxu0
    %v1620 = vadd.f32 %v1594, %v1619
    %1621 = vdwg.mxu0
    %v1623 = vperm.slane %v514, 0
    %v1625 = vadd.f32 %v1614, %v1623
    %v1626 = vadd.f32 %v1617, %v1623
    %v1627 = vadd.f32 %v1620, %v1623
    %vm1628 = vcmp.gt.f32.partialorder %v1625, 0.0
    %vm1629 = vcmp.gt.f32.partialorder %v1626, 0.0
    %vm1630 = vcmp.gt.f32.partialorder %v1627, 0.0
    %v1631 = vmul.f32 %v1625, 0.01
    %v1632 = vmul.f32 %v1626, 0.01
    %v1633 = vmul.f32 %v1627, 0.01
    %v1634 = vsel %vm1628, %v1625, %v1631
    %v1635 = vsel %vm1629, %v1626, %v1632
    %v1636 = vsel %vm1630, %v1627, %v1633
    %v1638 = vperm.slane %v519, 0
    %v1641 = vsel %vm827, %v1634, 0
    %v1644 = vsel %vm827, %v1635, 0
    %v1647 = vsel %vm827, %v1636, 0
    %1649 = vmatpush.msra.mxu0 0.0
    %1650 = vmatpush.msra.mxu0 0.0
    %1651 = vmatpush.msra.mxu0 0.0
    %1652 = vmatpush.msra.mxu0 0.0
    %1653 = vmatpush.msra.mxu0 0.0
    %1654 = vmatpush.msra.mxu0 0.0
    %1655 = vmatpush.msra.mxu0 0.0
    %1656 = vmatpush.msra.mxu0 0.0
    %1657 = vmatpush.msra.mxu0 0.0
    %1658 = vmatpush.msra.mxu0 0.0
    %1659 = vmatpush.msra.mxu0 0.0
    %1660 = vmatpush.msra.mxu0 0.0
    %1661 = vmatpush.msra.mxu0 %v518
    %1662 = vmatpush.msra.mxu0 %v517
    %1663 = vmatpush.msra.mxu0 %v516
    %1664 = vmatpush.msra.mxu0 %v515
    %1665 = vmatmul.f32.gmra.mxu0 %v1641
    %v1666 = vpop.f32.mrf.mxu0
    %v1667 = vadd.f32 %v1638, %v1666
    %1668 = vmatmul.f32.gmra.mxu0 %v1644
    %v1669 = vpop.f32.mrf.mxu0
    %v1670 = vadd.f32 %v1638, %v1669
    %1671 = vmatmul.f32.gmra.mxu0 %v1647
    %v1672 = vpop.f32.mrf.mxu0
    %v1673 = vadd.f32 %v1638, %v1672
    %1674 = vdwg.mxu0
    %1675 = vmatpush.msra.mxu0 0.0
    %1676 = vmatpush.msra.mxu0 0.0
    %1677 = vmatpush.msra.mxu0 0.0
    %1678 = vmatpush.msra.mxu0 0.0
    %1679 = vmatpush.msra.mxu0 0.0
    %1680 = vmatpush.msra.mxu0 0.0
    %1681 = vmatpush.msra.mxu0 0.0
    %1682 = vmatpush.msra.mxu0 0.0
    %1683 = vmatpush.msra.mxu0 0.0
    %1684 = vmatpush.msra.mxu0 0.0
    %1685 = vmatpush.msra.mxu0 0.0
    %1686 = vmatpush.msra.mxu0 0.0
    %1687 = vmatpush.msra.mxu0 0.0
    %1688 = vmatpush.msra.mxu0 0.0
    %1689 = vmatpush.msra.mxu0 0.0
    %1690 = vmatpush.msra.mxu0 %v513
    %1691 = vmatmul.f32.gmra.mxu0 %v1106
    %v1692 = vpop.f32.mrf.mxu0
    %v1693 = vadd.f32 0.0, %v1692
    %1694 = vmatmul.f32.gmra.mxu0 %v1109
    %v1695 = vpop.f32.mrf.mxu0
    %v1696 = vadd.f32 0.0, %v1695
    %1697 = vmatmul.f32.gmra.mxu0 %v1112
    %v1698 = vpop.f32.mrf.mxu0
    %v1699 = vadd.f32 0.0, %v1698
    %1700 = vdwg.mxu0
    %1701 = vmatpush.msra.mxu0 0.0
    %1702 = vmatpush.msra.mxu0 0.0
    %1703 = vmatpush.msra.mxu0 0.0
    %1704 = vmatpush.msra.mxu0 0.0
    %1705 = vmatpush.msra.mxu0 0.0
    %1706 = vmatpush.msra.mxu0 0.0
    %1707 = vmatpush.msra.mxu0 0.0
    %1708 = vmatpush.msra.mxu0 0.0
    %1709 = vmatpush.msra.mxu0 0.0
    %1710 = vmatpush.msra.mxu0 0.0
    %1711 = vmatpush.msra.mxu0 0.0
    %1712 = vmatpush.msra.mxu0 0.0
    %1713 = vmatpush.msra.mxu0 0.0
    %1714 = vmatpush.msra.mxu0 0.0
    %1715 = vmatpush.msra.mxu0 0.0
    %1716 = vmatpush.msra.mxu0 %v512
    %1717 = vmatmul.f32.gmra.mxu0 %v1141
    %v1718 = vpop.f32.mrf.mxu0
    %v1719 = vadd.f32 %v1693, %v1718
    %1720 = vmatmul.f32.gmra.mxu0 %v1144
    %v1721 = vpop.f32.mrf.mxu0
    %v1722 = vadd.f32 %v1696, %v1721
    %1723 = vmatmul.f32.gmra.mxu0 %v1147
    %v1724 = vpop.f32.mrf.mxu0
    %v1725 = vadd.f32 %v1699, %v1724
    %1726 = vdwg.mxu0
    %v1727 = vadd.f32 %v1719, %v1623
    %v1728 = vadd.f32 %v1722, %v1623
    %v1729 = vadd.f32 %v1725, %v1623
    %vm1730 = vcmp.gt.f32.partialorder %v1727, 0.0
    %vm1731 = vcmp.gt.f32.partialorder %v1728, 0.0
    %vm1732 = vcmp.gt.f32.partialorder %v1729, 0.0
    %v1733 = vmul.f32 %v1727, 0.01
    %v1734 = vmul.f32 %v1728, 0.01
    %v1735 = vmul.f32 %v1729, 0.01
    %v1736 = vsel %vm1730, %v1727, %v1733
    %v1737 = vsel %vm1731, %v1728, %v1734
    %v1738 = vsel %vm1732, %v1729, %v1735
    %v1740 = vsel %vm827, %v1736, 0
    %v1743 = vsel %vm827, %v1737, 0
    %v1746 = vsel %vm827, %v1738, 0
    %1748 = vmatpush.msra.mxu0 0.0
    %1749 = vmatpush.msra.mxu0 0.0
    %1750 = vmatpush.msra.mxu0 0.0
    %1751 = vmatpush.msra.mxu0 0.0
    %1752 = vmatpush.msra.mxu0 0.0
    %1753 = vmatpush.msra.mxu0 0.0
    %1754 = vmatpush.msra.mxu0 0.0
    %1755 = vmatpush.msra.mxu0 0.0
    %1756 = vmatpush.msra.mxu0 0.0
    %1757 = vmatpush.msra.mxu0 0.0
    %1758 = vmatpush.msra.mxu0 0.0
    %1759 = vmatpush.msra.mxu0 0.0
    %1760 = vmatpush.msra.mxu0 %v518
    %1761 = vmatpush.msra.mxu0 %v517
    %1762 = vmatpush.msra.mxu0 %v516
    %1763 = vmatpush.msra.mxu0 %v515
    %1764 = vmatmul.f32.gmra.mxu0 %v1740
    %v1765 = vpop.f32.mrf.mxu0
    %v1766 = vadd.f32 %v1638, %v1765
    %1767 = vmatmul.f32.gmra.mxu0 %v1743
    %v1768 = vpop.f32.mrf.mxu0
    %v1769 = vadd.f32 %v1638, %v1768
    %1770 = vmatmul.f32.gmra.mxu0 %v1746
    %v1771 = vpop.f32.mrf.mxu0
    %v1772 = vadd.f32 %v1638, %v1771
    %1773 = vdwg.mxu0
    %1774 = vmatpush.msra.mxu0 0.0
    %1775 = vmatpush.msra.mxu0 0.0
    %1776 = vmatpush.msra.mxu0 0.0
    %1777 = vmatpush.msra.mxu0 0.0
    %1778 = vmatpush.msra.mxu0 0.0
    %1779 = vmatpush.msra.mxu0 0.0
    %1780 = vmatpush.msra.mxu0 0.0
    %1781 = vmatpush.msra.mxu0 0.0
    %1782 = vmatpush.msra.mxu0 0.0
    %1783 = vmatpush.msra.mxu0 0.0
    %1784 = vmatpush.msra.mxu0 0.0
    %1785 = vmatpush.msra.mxu0 0.0
    %1786 = vmatpush.msra.mxu0 0.0
    %1787 = vmatpush.msra.mxu0 %v1772
    %1788 = vmatpush.msra.mxu0 %v1769
    %1789 = vmatpush.msra.mxu0 %v1766
    %1790 = vmatmul.f32.gmra.mxu0 %v963
    %v1791 = vpop.f32.mrf.mxu0
    %v1792 = vadd.f32 0.0, %v1791
    %1793 = vmatmul.f32.gmra.mxu0 %v966
    %v1794 = vpop.f32.mrf.mxu0
    %v1795 = vadd.f32 0.0, %v1794
    %1796 = vdwg.mxu0
    %1797 = vmatpush.msra.mxu0 0.0
    %1798 = vmatpush.msra.mxu0 0.0
    %1799 = vmatpush.msra.mxu0 0.0
    %1800 = vmatpush.msra.mxu0 0.0
    %1801 = vmatpush.msra.mxu0 0.0
    %1802 = vmatpush.msra.mxu0 0.0
    %1803 = vmatpush.msra.mxu0 0.0
    %1804 = vmatpush.msra.mxu0 0.0
    %1805 = vmatpush.msra.mxu0 0.0
    %1806 = vmatpush.msra.mxu0 0.0
    %1807 = vmatpush.msra.mxu0 0.0
    %1808 = vmatpush.msra.mxu0 0.0
    %1809 = vmatpush.msra.mxu0 0.0
    %1810 = vmatpush.msra.mxu0 %v1673
    %1811 = vmatpush.msra.mxu0 %v1670
    %1812 = vmatpush.msra.mxu0 %v1667
    %1813 = vmatmul.f32.gmra.mxu0 %v992
    %v1814 = vpop.f32.mrf.mxu0
    %v1815 = vadd.f32 %v1792, %v1814
    %1816 = vmatmul.f32.gmra.mxu0 %v995
    %v1817 = vpop.f32.mrf.mxu0
    %v1818 = vadd.f32 %v1795, %v1817
    %1819 = vdwg.mxu0
    %v1820 = vmul.f32 %v1815, %v1033
    %v1821 = vmul.f32 %v1818, %v1048
    %v1822 = vadd.f32 %v1034, %v1820
    %v1823 = vadd.f32 %v1049, %v1821
    %1824 = vmatpush.msra.mxu0 0.0
    %1825 = vmatpush.msra.mxu0 0.0
    %1826 = vmatpush.msra.mxu0 0.0
    %1827 = vmatpush.msra.mxu0 0.0
    %1828 = vmatpush.msra.mxu0 0.0
    %1829 = vmatpush.msra.mxu0 0.0
    %1830 = vmatpush.msra.mxu0 0.0
    %1831 = vmatpush.msra.mxu0 0.0
    %1832 = vmatpush.msra.mxu0 0.0
    %1833 = vmatpush.msra.mxu0 0.0
    %1834 = vmatpush.msra.mxu0 0.0
    %1835 = vmatpush.msra.mxu0 0.0
    %1836 = vmatpush.msra.mxu0 0.0
    %1837 = vmatpush.msra.mxu0 0.0
    %1838 = vmatpush.msra.mxu0 %v1823
    %1839 = vmatpush.msra.mxu0 %v1822
    %1840 = vmatmul.f32.gmra.mxu0 %v669
    %v1841 = vpop.f32.mrf.mxu0
    %v1842 = vadd.f32 0.0, %v1841
    %1843 = vmatmul.f32.gmra.mxu0 %v672
    %v1844 = vpop.f32.mrf.mxu0
    %v1845 = vadd.f32 0.0, %v1844
    %1846 = vmatmul.f32.gmra.mxu0 %v675
    %v1847 = vpop.f32.mrf.mxu0
    %v1848 = vadd.f32 0.0, %v1847
    %1849 = vdwg.mxu0
    %1850 = vmatpush.msra.mxu0 0.0
    %1851 = vmatpush.msra.mxu0 0.0
    %1852 = vmatpush.msra.mxu0 0.0
    %1853 = vmatpush.msra.mxu0 0.0
    %1854 = vmatpush.msra.mxu0 0.0
    %1855 = vmatpush.msra.mxu0 0.0
    %1856 = vmatpush.msra.mxu0 0.0
    %1857 = vmatpush.msra.mxu0 0.0
    %1858 = vmatpush.msra.mxu0 0.0
    %1859 = vmatpush.msra.mxu0 0.0
    %1860 = vmatpush.msra.mxu0 0.0
    %1861 = vmatpush.msra.mxu0 0.0
    %1862 = vmatpush.msra.mxu0 0.0
    %1863 = vmatpush.msra.mxu0 0.0
    %1864 = vmatpush.msra.mxu0 %v1823
    %1865 = vmatpush.msra.mxu0 %v1822
    %1866 = vmatmul.f32.gmra.mxu0 %v704
    %v1867 = vpop.f32.mrf.mxu0
    %v1868 = vadd.f32 0.0, %v1867
    %1869 = vmatmul.f32.gmra.mxu0 %v707
    %v1870 = vpop.f32.mrf.mxu0
    %v1871 = vadd.f32 0.0, %v1870
    %1872 = vmatmul.f32.gmra.mxu0 %v710
    %v1873 = vpop.f32.mrf.mxu0
    %v1874 = vadd.f32 0.0, %v1873
    %1875 = vdwg.mxu0
    %v1877 = vsel %vm738, %v1868, 0
    %v1880 = vsel %vm738, %v1871, 0
    %v1883 = vsel %vm738, %v1874, 0
    %1885 = vmatpush.msra.mxu0 0.0
    %1886 = vmatpush.msra.mxu0 0.0
    %1887 = vmatpush.msra.mxu0 0.0
    %1888 = vmatpush.msra.mxu0 0.0
    %1889 = vmatpush.msra.mxu0 0.0
    %1890 = vmatpush.msra.mxu0 0.0
    %1891 = vmatpush.msra.mxu0 0.0
    %1892 = vmatpush.msra.mxu0 0.0
    %1893 = vmatpush.msra.mxu0 0.0
    %1894 = vmatpush.msra.mxu0 0.0
    %1895 = vmatpush.msra.mxu0 0.0
    %1896 = vmatpush.msra.mxu0 0.0
    %1897 = vmatpush.msra.mxu0 0.0
    %1898 = vmatpush.msra.mxu0 0.0
    %1899 = vmatpush.msra.mxu0 0.0
    %1900 = vmatpush.msra.mxu0 %v550
    %1901 = vmatmul.f32.gmra.mxu0 %v1877
    %v1902 = vpop.f32.mrf.mxu0
    %v1903 = vadd.f32 0.0, %v1902
    %1904 = vmatmul.f32.gmra.mxu0 %v1880
    %v1905 = vpop.f32.mrf.mxu0
    %v1906 = vadd.f32 0.0, %v1905
    %1907 = vmatmul.f32.gmra.mxu0 %v1883
    %v1908 = vpop.f32.mrf.mxu0
    %v1909 = vadd.f32 0.0, %v1908
    %1910 = vdwg.mxu0
    %v1912 = vsel %vm738, %v1842, 0
    %v1915 = vsel %vm738, %v1845, 0
    %v1918 = vsel %vm738, %v1848, 0
    %1920 = vmatpush.msra.mxu0 0.0
    %1921 = vmatpush.msra.mxu0 0.0
    %1922 = vmatpush.msra.mxu0 0.0
    %1923 = vmatpush.msra.mxu0 0.0
    %1924 = vmatpush.msra.mxu0 0.0
    %1925 = vmatpush.msra.mxu0 0.0
    %1926 = vmatpush.msra.mxu0 0.0
    %1927 = vmatpush.msra.mxu0 0.0
    %1928 = vmatpush.msra.mxu0 0.0
    %1929 = vmatpush.msra.mxu0 0.0
    %1930 = vmatpush.msra.mxu0 0.0
    %1931 = vmatpush.msra.mxu0 0.0
    %1932 = vmatpush.msra.mxu0 0.0
    %1933 = vmatpush.msra.mxu0 0.0
    %1934 = vmatpush.msra.mxu0 0.0
    %1935 = vmatpush.msra.mxu0 %v549
    %1936 = vmatmul.f32.gmra.mxu0 %v1912
    %v1937 = vpop.f32.mrf.mxu0
    %v1938 = vadd.f32 %v1903, %v1937
    %1939 = vmatmul.f32.gmra.mxu0 %v1915
    %v1940 = vpop.f32.mrf.mxu0
    %v1941 = vadd.f32 %v1906, %v1940
    %1942 = vmatmul.f32.gmra.mxu0 %v1918
    %v1943 = vpop.f32.mrf.mxu0
    %v1944 = vadd.f32 %v1909, %v1943
    %1945 = vdwg.mxu0
    %v1947 = vperm.slane %v551, 0
    %v1949 = vadd.f32 %v1938, %v1947
    %v1950 = vadd.f32 %v1941, %v1947
    %v1951 = vadd.f32 %v1944, %v1947
    %vm1952 = vcmp.gt.f32.partialorder %v1949, 0.0
    %vm1953 = vcmp.gt.f32.partialorder %v1950, 0.0
    %vm1954 = vcmp.gt.f32.partialorder %v1951, 0.0
    %v1955 = vmul.f32 %v1949, 0.01
    %v1956 = vmul.f32 %v1950, 0.01
    %v1957 = vmul.f32 %v1951, 0.01
    %v1958 = vsel %vm1952, %v1949, %v1955
    %v1959 = vsel %vm1953, %v1950, %v1956
    %v1960 = vsel %vm1954, %v1951, %v1957
    %v1962 = vperm.slane %v556, 0
    %v1965 = vsel %vm827, %v1958, 0
    %v1968 = vsel %vm827, %v1959, 0
    %v1971 = vsel %vm827, %v1960, 0
    %1973 = vmatpush.msra.mxu0 0.0
    %1974 = vmatpush.msra.mxu0 0.0
    %1975 = vmatpush.msra.mxu0 0.0
    %1976 = vmatpush.msra.mxu0 0.0
    %1977 = vmatpush.msra.mxu0 0.0
    %1978 = vmatpush.msra.mxu0 0.0
    %1979 = vmatpush.msra.mxu0 0.0
    %1980 = vmatpush.msra.mxu0 0.0
    %1981 = vmatpush.msra.mxu0 0.0
    %1982 = vmatpush.msra.mxu0 0.0
    %1983 = vmatpush.msra.mxu0 0.0
    %1984 = vmatpush.msra.mxu0 0.0
    %1985 = vmatpush.msra.mxu0 %v555
    %1986 = vmatpush.msra.mxu0 %v554
    %1987 = vmatpush.msra.mxu0 %v553
    %1988 = vmatpush.msra.mxu0 %v552
    %1989 = vmatmul.f32.gmra.mxu0 %v1965
    %v1990 = vpop.f32.mrf.mxu0
    %v1991 = vadd.f32 %v1962, %v1990
    %1992 = vmatmul.f32.gmra.mxu0 %v1968
    %v1993 = vpop.f32.mrf.mxu0
    %v1994 = vadd.f32 %v1962, %v1993
    %1995 = vmatmul.f32.gmra.mxu0 %v1971
    %v1996 = vpop.f32.mrf.mxu0
    %v1997 = vadd.f32 %v1962, %v1996
    %1998 = vdwg.mxu0
    %1999 = vmatpush.msra.mxu0 0.0
    %2000 = vmatpush.msra.mxu0 0.0
    %2001 = vmatpush.msra.mxu0 0.0
    %2002 = vmatpush.msra.mxu0 0.0
    %2003 = vmatpush.msra.mxu0 0.0
    %2004 = vmatpush.msra.mxu0 0.0
    %2005 = vmatpush.msra.mxu0 0.0
    %2006 = vmatpush.msra.mxu0 0.0
    %2007 = vmatpush.msra.mxu0 0.0
    %2008 = vmatpush.msra.mxu0 0.0
    %2009 = vmatpush.msra.mxu0 0.0
    %2010 = vmatpush.msra.mxu0 0.0
    %2011 = vmatpush.msra.mxu0 0.0
    %2012 = vmatpush.msra.mxu0 0.0
    %2013 = vmatpush.msra.mxu0 0.0
    %2014 = vmatpush.msra.mxu0 %v550
    %2015 = vmatmul.f32.gmra.mxu0 %v1912
    %v2016 = vpop.f32.mrf.mxu0
    %v2017 = vadd.f32 0.0, %v2016
    %2018 = vmatmul.f32.gmra.mxu0 %v1915
    %v2019 = vpop.f32.mrf.mxu0
    %v2020 = vadd.f32 0.0, %v2019
    %2021 = vmatmul.f32.gmra.mxu0 %v1918
    %v2022 = vpop.f32.mrf.mxu0
    %v2023 = vadd.f32 0.0, %v2022
    %2024 = vdwg.mxu0
    %2025 = vmatpush.msra.mxu0 0.0
    %2026 = vmatpush.msra.mxu0 0.0
    %2027 = vmatpush.msra.mxu0 0.0
    %2028 = vmatpush.msra.mxu0 0.0
    %2029 = vmatpush.msra.mxu0 0.0
    %2030 = vmatpush.msra.mxu0 0.0
    %2031 = vmatpush.msra.mxu0 0.0
    %2032 = vmatpush.msra.mxu0 0.0
    %2033 = vmatpush.msra.mxu0 0.0
    %2034 = vmatpush.msra.mxu0 0.0
    %2035 = vmatpush.msra.mxu0 0.0
    %2036 = vmatpush.msra.mxu0 0.0
    %2037 = vmatpush.msra.mxu0 0.0
    %2038 = vmatpush.msra.mxu0 0.0
    %2039 = vmatpush.msra.mxu0 0.0
    %2040 = vmatpush.msra.mxu0 %v549
    %2041 = vmatmul.f32.gmra.mxu0 %v1877
    %v2042 = vpop.f32.mrf.mxu0
    %v2043 = vadd.f32 %v2017, %v2042
    %2044 = vmatmul.f32.gmra.mxu0 %v1880
    %v2045 = vpop.f32.mrf.mxu0
    %v2046 = vadd.f32 %v2020, %v2045
    %2047 = vmatmul.f32.gmra.mxu0 %v1883
    %v2048 = vpop.f32.mrf.mxu0
    %v2049 = vadd.f32 %v2023, %v2048
    %2050 = vdwg.mxu0
    %v2051 = vadd.f32 %v2043, %v1947
    %v2052 = vadd.f32 %v2046, %v1947
    %v2053 = vadd.f32 %v2049, %v1947
    %vm2054 = vcmp.gt.f32.partialorder %v2051, 0.0
    %vm2055 = vcmp.gt.f32.partialorder %v2052, 0.0
    %vm2056 = vcmp.gt.f32.partialorder %v2053, 0.0
    %v2057 = vmul.f32 %v2051, 0.01
    %v2058 = vmul.f32 %v2052, 0.01
    %v2059 = vmul.f32 %v2053, 0.01
    %v2060 = vsel %vm2054, %v2051, %v2057
    %v2061 = vsel %vm2055, %v2052, %v2058
    %v2062 = vsel %vm2056, %v2053, %v2059
    %v2064 = vsel %vm827, %v2060, 0
    %v2067 = vsel %vm827, %v2061, 0
    %v2070 = vsel %vm827, %v2062, 0
    %2072 = vmatpush.msra.mxu0 0.0
    %2073 = vmatpush.msra.mxu0 0.0
    %2074 = vmatpush.msra.mxu0 0.0
    %2075 = vmatpush.msra.mxu0 0.0
    %2076 = vmatpush.msra.mxu0 0.0
    %2077 = vmatpush.msra.mxu0 0.0
    %2078 = vmatpush.msra.mxu0 0.0
    %2079 = vmatpush.msra.mxu0 0.0
    %2080 = vmatpush.msra.mxu0 0.0
    %2081 = vmatpush.msra.mxu0 0.0
    %2082 = vmatpush.msra.mxu0 0.0
    %2083 = vmatpush.msra.mxu0 0.0
    %2084 = vmatpush.msra.mxu0 %v555
    %2085 = vmatpush.msra.mxu0 %v554
    %2086 = vmatpush.msra.mxu0 %v553
    %2087 = vmatpush.msra.mxu0 %v552
    %2088 = vmatmul.f32.gmra.mxu0 %v2064
    %v2089 = vpop.f32.mrf.mxu0
    %v2090 = vadd.f32 %v1962, %v2089
    %2091 = vmatmul.f32.gmra.mxu0 %v2067
    %v2092 = vpop.f32.mrf.mxu0
    %v2093 = vadd.f32 %v1962, %v2092
    %2094 = vmatmul.f32.gmra.mxu0 %v2070
    %v2095 = vpop.f32.mrf.mxu0
    %v2096 = vadd.f32 %v1962, %v2095
    %2097 = vdwg.mxu0
    %v2098 = vsub.f32 %v1991, %v2090
    %v2099 = vsub.f32 %v1994, %v2093
    %v2100 = vsub.f32 %v1997, %v2096
    %v2101 = vmul.f32 %v2098, %v2098
    %v2102 = vmul.f32 %v2099, %v2099
    %v2103 = vmul.f32 %v2100, %v2100
    %v2104 = vsel %vm738, %v2101, 0.0
    %2105 = vadd.xlane.f32.xlu0 %v2104
    %v2106 = vpop.xlane.xlu0 %2105
    %v2107 = vsel %vm738, %v2102, 0.0
    %2108 = vadd.xlane.f32.xlu0 %v2107
    %v2109 = vpop.xlane.xlu0 %2108
    %v2110 = vsel %vm738, %v2103, 0.0
    %2111 = vadd.xlane.f32.xlu0 %v2110
    %v2112 = vpop.xlane.xlu0 %2111
    %v2113 = vadd.f32 %v2106, %v2109
    %v2114 = vadd.f32 %v2113, %v2112
    %v2115 = vrot.slane %v2114, 4
    %v2116 = vadd.f32 %v2114, %v2115
    %v2117 = vrot.slane %v2116, 2
    %v2118 = vadd.f32 %v2116, %v2117
    %v2119 = vrot.slane %v2118, 1
    %v2120 = vadd.f32 %v2118, %v2119
    %v2121 = vmul.f32 %v2120, 0.0052083335
    %v2122 = vadd.f32 %v1991, %v2090
    %v2123 = vadd.f32 %v1994, %v2093
    %v2124 = vadd.f32 %v1997, %v2096
    %v2125 = vmul.f32 %v2122, 0.5
    %v2126 = vmul.f32 %v2123, 0.5
    %v2127 = vmul.f32 %v2124, 0.5
    %v2129 = vperm.slane %v558, 0
    %v2132 = vsel %vm738, %v1562, 0
    %v2135 = vsel %vm738, %v1565, 0
    %v2138 = vsel %vm738, %v1568, 0
    %2140 = vmatpush.msra.mxu0 0.0
    %2141 = vmatpush.msra.mxu0 0.0
    %2142 = vmatpush.msra.mxu0 0.0
    %2143 = vmatpush.msra.mxu0 0.0
    %2144 = vmatpush.msra.mxu0 0.0
    %2145 = vmatpush.msra.mxu0 0.0
    %2146 = vmatpush.msra.mxu0 0.0
    %2147 = vmatpush.msra.mxu0 0.0
    %2148 = vmatpush.msra.mxu0 0.0
    %2149 = vmatpush.msra.mxu0 0.0
    %2150 = vmatpush.msra.mxu0 0.0
    %2151 = vmatpush.msra.mxu0 0.0
    %2152 = vmatpush.msra.mxu0 0.0
    %2153 = vmatpush.msra.mxu0 0.0
    %2154 = vmatpush.msra.mxu0 0.0
    %2155 = vmatpush.msra.mxu0 %v557
    %2156 = vmatmul.f32.gmra.mxu0 %v2132
    %v2157 = vpop.f32.mrf.mxu0
    %v2158 = vadd.f32 %v2129, %v2157
    %2159 = vmatmul.f32.gmra.mxu0 %v2135
    %v2160 = vpop.f32.mrf.mxu0
    %v2161 = vadd.f32 %v2129, %v2160
    %2162 = vmatmul.f32.gmra.mxu0 %v2138
    %v2163 = vpop.f32.mrf.mxu0
    %v2164 = vadd.f32 %v2129, %v2163
    %2165 = vdwg.mxu0
    %vm2166 = vcmp.gt.f32.partialorder %v2158, 0.0
    %vm2167 = vcmp.gt.f32.partialorder %v2161, 0.0
    %vm2168 = vcmp.gt.f32.partialorder %v2164, 0.0
    %v2169 = vmul.f32 %v2158, 0.01
    %v2170 = vmul.f32 %v2161, 0.01
    %v2171 = vmul.f32 %v2164, 0.01
    %v2172 = vsel %vm2166, %v2158, %v2169
    %v2173 = vsel %vm2167, %v2161, %v2170
    %v2174 = vsel %vm2168, %v2164, %v2171
    %v2176 = vperm.slane %v561, 0
    %v2179 = vsel %vm667, %v2172, 0
    %v2182 = vsel %vm667, %v2173, 0
    %v2185 = vsel %vm667, %v2174, 0
    %2187 = vmatpush.msra.mxu0 0.0
    %2188 = vmatpush.msra.mxu0 0.0
    %2189 = vmatpush.msra.mxu0 0.0
    %2190 = vmatpush.msra.mxu0 0.0
    %2191 = vmatpush.msra.mxu0 0.0
    %2192 = vmatpush.msra.mxu0 0.0
    %2193 = vmatpush.msra.mxu0 0.0
    %2194 = vmatpush.msra.mxu0 0.0
    %2195 = vmatpush.msra.mxu0 0.0
    %2196 = vmatpush.msra.mxu0 0.0
    %2197 = vmatpush.msra.mxu0 0.0
    %2198 = vmatpush.msra.mxu0 0.0
    %2199 = vmatpush.msra.mxu0 0.0
    %2200 = vmatpush.msra.mxu0 0.0
    %2201 = vmatpush.msra.mxu0 %v560
    %2202 = vmatpush.msra.mxu0 %v559
    %2203 = vmatmul.f32.gmra.mxu0 %v2179
    %v2204 = vpop.f32.mrf.mxu0
    %v2205 = vadd.f32 %v2176, %v2204
    %2206 = vmatmul.f32.gmra.mxu0 %v2182
    %v2207 = vpop.f32.mrf.mxu0
    %v2208 = vadd.f32 %v2176, %v2207
    %2209 = vmatmul.f32.gmra.mxu0 %v2185
    %v2210 = vpop.f32.mrf.mxu0
    %v2211 = vadd.f32 %v2176, %v2210
    %2212 = vdwg.mxu0
    %v2214 = vsel %vm738, %v2205, 0
    %v2217 = vsel %vm738, %v2208, 0
    %v2220 = vsel %vm738, %v2211, 0
    %2222 = vmatpush.msra.mxu0 0.0
    %2223 = vmatpush.msra.mxu0 0.0
    %2224 = vmatpush.msra.mxu0 0.0
    %2225 = vmatpush.msra.mxu0 0.0
    %2226 = vmatpush.msra.mxu0 0.0
    %2227 = vmatpush.msra.mxu0 0.0
    %2228 = vmatpush.msra.mxu0 0.0
    %2229 = vmatpush.msra.mxu0 0.0
    %2230 = vmatpush.msra.mxu0 0.0
    %2231 = vmatpush.msra.mxu0 0.0
    %2232 = vmatpush.msra.mxu0 0.0
    %2233 = vmatpush.msra.mxu0 0.0
    %2234 = vmatpush.msra.mxu0 0.0
    %2235 = vmatpush.msra.mxu0 0.0
    %2236 = vmatpush.msra.mxu0 0.0
    %2237 = vmatpush.msra.mxu0 %v563
    %2238 = vmatmul.f32.gmra.mxu0 %v2214
    %v2239 = vpop.f32.mrf.mxu0
    %v2240 = vadd.f32 0.0, %v2239
    %2241 = vmatmul.f32.gmra.mxu0 %v2217
    %v2242 = vpop.f32.mrf.mxu0
    %v2243 = vadd.f32 0.0, %v2242
    %2244 = vmatmul.f32.gmra.mxu0 %v2220
    %v2245 = vpop.f32.mrf.mxu0
    %v2246 = vadd.f32 0.0, %v2245
    %2247 = vdwg.mxu0
    %v2249 = vsel %vm738, %v2125, 0
    %v2252 = vsel %vm738, %v2126, 0
    %v2255 = vsel %vm738, %v2127, 0
    %2257 = vmatpush.msra.mxu0 0.0
    %2258 = vmatpush.msra.mxu0 0.0
    %2259 = vmatpush.msra.mxu0 0.0
    %2260 = vmatpush.msra.mxu0 0.0
    %2261 = vmatpush.msra.mxu0 0.0
    %2262 = vmatpush.msra.mxu0 0.0
    %2263 = vmatpush.msra.mxu0 0.0
    %2264 = vmatpush.msra.mxu0 0.0
    %2265 = vmatpush.msra.mxu0 0.0
    %2266 = vmatpush.msra.mxu0 0.0
    %2267 = vmatpush.msra.mxu0 0.0
    %2268 = vmatpush.msra.mxu0 0.0
    %2269 = vmatpush.msra.mxu0 0.0
    %2270 = vmatpush.msra.mxu0 0.0
    %2271 = vmatpush.msra.mxu0 0.0
    %2272 = vmatpush.msra.mxu0 %v562
    %2273 = vmatmul.f32.gmra.mxu0 %v2249
    %v2274 = vpop.f32.mrf.mxu0
    %v2275 = vadd.f32 %v2240, %v2274
    %2276 = vmatmul.f32.gmra.mxu0 %v2252
    %v2277 = vpop.f32.mrf.mxu0
    %v2278 = vadd.f32 %v2243, %v2277
    %2279 = vmatmul.f32.gmra.mxu0 %v2255
    %v2280 = vpop.f32.mrf.mxu0
    %v2281 = vadd.f32 %v2246, %v2280
    %2282 = vdwg.mxu0
    %v2284 = vperm.slane %v564, 0
    %v2286 = vadd.f32 %v2275, %v2284
    %v2287 = vadd.f32 %v2278, %v2284
    %v2288 = vadd.f32 %v2281, %v2284
    %vm2289 = vcmp.gt.f32.partialorder %v2286, 0.0
    %vm2290 = vcmp.gt.f32.partialorder %v2287, 0.0
    %vm2291 = vcmp.gt.f32.partialorder %v2288, 0.0
    %v2292 = vmul.f32 %v2286, 0.01
    %v2293 = vmul.f32 %v2287, 0.01
    %v2294 = vmul.f32 %v2288, 0.01
    %v2295 = vsel %vm2289, %v2286, %v2292
    %v2296 = vsel %vm2290, %v2287, %v2293
    %v2297 = vsel %vm2291, %v2288, %v2294
    %v2299 = vperm.slane %v569, 0
    %v2302 = vsel %vm827, %v2295, 0
    %v2305 = vsel %vm827, %v2296, 0
    %v2308 = vsel %vm827, %v2297, 0
    %2310 = vmatpush.msra.mxu0 0.0
    %2311 = vmatpush.msra.mxu0 0.0
    %2312 = vmatpush.msra.mxu0 0.0
    %2313 = vmatpush.msra.mxu0 0.0
    %2314 = vmatpush.msra.mxu0 0.0
    %2315 = vmatpush.msra.mxu0 0.0
    %2316 = vmatpush.msra.mxu0 0.0
    %2317 = vmatpush.msra.mxu0 0.0
    %2318 = vmatpush.msra.mxu0 0.0
    %2319 = vmatpush.msra.mxu0 0.0
    %2320 = vmatpush.msra.mxu0 0.0
    %2321 = vmatpush.msra.mxu0 0.0
    %2322 = vmatpush.msra.mxu0 %v568
    %2323 = vmatpush.msra.mxu0 %v567
    %2324 = vmatpush.msra.mxu0 %v566
    %2325 = vmatpush.msra.mxu0 %v565
    %2326 = vmatmul.f32.gmra.mxu0 %v2302
    %v2327 = vpop.f32.mrf.mxu0
    %v2328 = vadd.f32 %v2299, %v2327
    %2329 = vmatmul.f32.gmra.mxu0 %v2305
    %v2330 = vpop.f32.mrf.mxu0
    %v2331 = vadd.f32 %v2299, %v2330
    %2332 = vmatmul.f32.gmra.mxu0 %v2308
    %v2333 = vpop.f32.mrf.mxu0
    %v2334 = vadd.f32 %v2299, %v2333
    %2335 = vdwg.mxu0
    %v2336 = vadd.f32 %v2328, %v1562
    %v2337 = vadd.f32 %v2331, %v1565
    %v2338 = vadd.f32 %v2334, %v1568
    %2339 = vmatpush.msra.mxu0 0.0
    %2340 = vmatpush.msra.mxu0 0.0
    %2341 = vmatpush.msra.mxu0 0.0
    %2342 = vmatpush.msra.mxu0 0.0
    %2343 = vmatpush.msra.mxu0 0.0
    %2344 = vmatpush.msra.mxu0 0.0
    %2345 = vmatpush.msra.mxu0 0.0
    %2346 = vmatpush.msra.mxu0 0.0
    %2347 = vmatpush.msra.mxu0 0.0
    %2348 = vmatpush.msra.mxu0 0.0
    %2349 = vmatpush.msra.mxu0 0.0
    %2350 = vmatpush.msra.mxu0 0.0
    %2351 = vmatpush.msra.mxu0 0.0
    %2352 = vmatpush.msra.mxu0 0.0
    %2353 = vmatpush.msra.mxu0 0.0
    %2354 = vmatpush.msra.mxu0 %v521
    %2355 = vmatmul.f32.gmra.mxu0 %v1912
    %v2356 = vpop.f32.mrf.mxu0
    %v2357 = vadd.f32 0.0, %v2356
    %2358 = vmatmul.f32.gmra.mxu0 %v1915
    %v2359 = vpop.f32.mrf.mxu0
    %v2360 = vadd.f32 0.0, %v2359
    %2361 = vmatmul.f32.gmra.mxu0 %v1918
    %v2362 = vpop.f32.mrf.mxu0
    %v2363 = vadd.f32 0.0, %v2362
    %2364 = vdwg.mxu0
    %2365 = vmatpush.msra.mxu0 0.0
    %2366 = vmatpush.msra.mxu0 0.0
    %2367 = vmatpush.msra.mxu0 0.0
    %2368 = vmatpush.msra.mxu0 0.0
    %2369 = vmatpush.msra.mxu0 0.0
    %2370 = vmatpush.msra.mxu0 0.0
    %2371 = vmatpush.msra.mxu0 0.0
    %2372 = vmatpush.msra.mxu0 0.0
    %2373 = vmatpush.msra.mxu0 0.0
    %2374 = vmatpush.msra.mxu0 0.0
    %2375 = vmatpush.msra.mxu0 0.0
    %2376 = vmatpush.msra.mxu0 0.0
    %2377 = vmatpush.msra.mxu0 0.0
    %2378 = vmatpush.msra.mxu0 0.0
    %2379 = vmatpush.msra.mxu0 0.0
    %2380 = vmatpush.msra.mxu0 %v520
    %2381 = vmatmul.f32.gmra.mxu0 %v1877
    %v2382 = vpop.f32.mrf.mxu0
    %v2383 = vadd.f32 %v2357, %v2382
    %2384 = vmatmul.f32.gmra.mxu0 %v1880
    %v2385 = vpop.f32.mrf.mxu0
    %v2386 = vadd.f32 %v2360, %v2385
    %2387 = vmatmul.f32.gmra.mxu0 %v1883
    %v2388 = vpop.f32.mrf.mxu0
    %v2389 = vadd.f32 %v2363, %v2388
    %2390 = vdwg.mxu0
    %v2392 = vperm.slane %v522, 0
    %v2394 = vadd.f32 %v2383, %v2392
    %v2395 = vadd.f32 %v2386, %v2392
    %v2396 = vadd.f32 %v2389, %v2392
    %vm2397 = vcmp.gt.f32.partialorder %v2394, 0.0
    %vm2398 = vcmp.gt.f32.partialorder %v2395, 0.0
    %vm2399 = vcmp.gt.f32.partialorder %v2396, 0.0
    %v2400 = vmul.f32 %v2394, 0.01
    %v2401 = vmul.f32 %v2395, 0.01
    %v2402 = vmul.f32 %v2396, 0.01
    %v2403 = vsel %vm2397, %v2394, %v2400
    %v2404 = vsel %vm2398, %v2395, %v2401
    %v2405 = vsel %vm2399, %v2396, %v2402
    %v2407 = vperm.slane %v527, 0
    %v2410 = vsel %vm827, %v2403, 0
    %v2413 = vsel %vm827, %v2404, 0
    %v2416 = vsel %vm827, %v2405, 0
    %2418 = vmatpush.msra.mxu0 0.0
    %2419 = vmatpush.msra.mxu0 0.0
    %2420 = vmatpush.msra.mxu0 0.0
    %2421 = vmatpush.msra.mxu0 0.0
    %2422 = vmatpush.msra.mxu0 0.0
    %2423 = vmatpush.msra.mxu0 0.0
    %2424 = vmatpush.msra.mxu0 0.0
    %2425 = vmatpush.msra.mxu0 0.0
    %2426 = vmatpush.msra.mxu0 0.0
    %2427 = vmatpush.msra.mxu0 0.0
    %2428 = vmatpush.msra.mxu0 0.0
    %2429 = vmatpush.msra.mxu0 0.0
    %2430 = vmatpush.msra.mxu0 %v526
    %2431 = vmatpush.msra.mxu0 %v525
    %2432 = vmatpush.msra.mxu0 %v524
    %2433 = vmatpush.msra.mxu0 %v523
    %2434 = vmatmul.f32.gmra.mxu0 %v2410
    %v2435 = vpop.f32.mrf.mxu0
    %v2436 = vadd.f32 %v2407, %v2435
    %2437 = vmatmul.f32.gmra.mxu0 %v2413
    %v2438 = vpop.f32.mrf.mxu0
    %v2439 = vadd.f32 %v2407, %v2438
    %2440 = vmatmul.f32.gmra.mxu0 %v2416
    %v2441 = vpop.f32.mrf.mxu0
    %v2442 = vadd.f32 %v2407, %v2441
    %2443 = vdwg.mxu0
    %2444 = vmatpush.msra.mxu0 0.0
    %2445 = vmatpush.msra.mxu0 0.0
    %2446 = vmatpush.msra.mxu0 0.0
    %2447 = vmatpush.msra.mxu0 0.0
    %2448 = vmatpush.msra.mxu0 0.0
    %2449 = vmatpush.msra.mxu0 0.0
    %2450 = vmatpush.msra.mxu0 0.0
    %2451 = vmatpush.msra.mxu0 0.0
    %2452 = vmatpush.msra.mxu0 0.0
    %2453 = vmatpush.msra.mxu0 0.0
    %2454 = vmatpush.msra.mxu0 0.0
    %2455 = vmatpush.msra.mxu0 0.0
    %2456 = vmatpush.msra.mxu0 0.0
    %2457 = vmatpush.msra.mxu0 0.0
    %2458 = vmatpush.msra.mxu0 0.0
    %2459 = vmatpush.msra.mxu0 %v521
    %2460 = vmatmul.f32.gmra.mxu0 %v1877
    %v2461 = vpop.f32.mrf.mxu0
    %v2462 = vadd.f32 0.0, %v2461
    %2463 = vmatmul.f32.gmra.mxu0 %v1880
    %v2464 = vpop.f32.mrf.mxu0
    %v2465 = vadd.f32 0.0, %v2464
    %2466 = vmatmul.f32.gmra.mxu0 %v1883
    %v2467 = vpop.f32.mrf.mxu0
    %v2468 = vadd.f32 0.0, %v2467
    %2469 = vdwg.mxu0
    %2470 = vmatpush.msra.mxu0 0.0
    %2471 = vmatpush.msra.mxu0 0.0
    %2472 = vmatpush.msra.mxu0 0.0
    %2473 = vmatpush.msra.mxu0 0.0
    %2474 = vmatpush.msra.mxu0 0.0
    %2475 = vmatpush.msra.mxu0 0.0
    %2476 = vmatpush.msra.mxu0 0.0
    %2477 = vmatpush.msra.mxu0 0.0
    %2478 = vmatpush.msra.mxu0 0.0
    %2479 = vmatpush.msra.mxu0 0.0
    %2480 = vmatpush.msra.mxu0 0.0
    %2481 = vmatpush.msra.mxu0 0.0
    %2482 = vmatpush.msra.mxu0 0.0
    %2483 = vmatpush.msra.mxu0 0.0
    %2484 = vmatpush.msra.mxu0 0.0
    %2485 = vmatpush.msra.mxu0 %v520
    %2486 = vmatmul.f32.gmra.mxu0 %v1912
    %v2487 = vpop.f32.mrf.mxu0
    %v2488 = vadd.f32 %v2462, %v2487
    %2489 = vmatmul.f32.gmra.mxu0 %v1915
    %v2490 = vpop.f32.mrf.mxu0
    %v2491 = vadd.f32 %v2465, %v2490
    %2492 = vmatmul.f32.gmra.mxu0 %v1918
    %v2493 = vpop.f32.mrf.mxu0
    %v2494 = vadd.f32 %v2468, %v2493
    %2495 = vdwg.mxu0
    %v2496 = vadd.f32 %v2488, %v2392
    %v2497 = vadd.f32 %v2491, %v2392
    %v2498 = vadd.f32 %v2494, %v2392
    %vm2499 = vcmp.gt.f32.partialorder %v2496, 0.0
    %vm2500 = vcmp.gt.f32.partialorder %v2497, 0.0
    %vm2501 = vcmp.gt.f32.partialorder %v2498, 0.0
    %v2502 = vmul.f32 %v2496, 0.01
    %v2503 = vmul.f32 %v2497, 0.01
    %v2504 = vmul.f32 %v2498, 0.01
    %v2505 = vsel %vm2499, %v2496, %v2502
    %v2506 = vsel %vm2500, %v2497, %v2503
    %v2507 = vsel %vm2501, %v2498, %v2504
    %v2509 = vsel %vm827, %v2505, 0
    %v2512 = vsel %vm827, %v2506, 0
    %v2515 = vsel %vm827, %v2507, 0
    %2517 = vmatpush.msra.mxu0 0.0
    %2518 = vmatpush.msra.mxu0 0.0
    %2519 = vmatpush.msra.mxu0 0.0
    %2520 = vmatpush.msra.mxu0 0.0
    %2521 = vmatpush.msra.mxu0 0.0
    %2522 = vmatpush.msra.mxu0 0.0
    %2523 = vmatpush.msra.mxu0 0.0
    %2524 = vmatpush.msra.mxu0 0.0
    %2525 = vmatpush.msra.mxu0 0.0
    %2526 = vmatpush.msra.mxu0 0.0
    %2527 = vmatpush.msra.mxu0 0.0
    %2528 = vmatpush.msra.mxu0 0.0
    %2529 = vmatpush.msra.mxu0 %v526
    %2530 = vmatpush.msra.mxu0 %v525
    %2531 = vmatpush.msra.mxu0 %v524
    %2532 = vmatpush.msra.mxu0 %v523
    %2533 = vmatmul.f32.gmra.mxu0 %v2509
    %v2534 = vpop.f32.mrf.mxu0
    %v2535 = vadd.f32 %v2407, %v2534
    %2536 = vmatmul.f32.gmra.mxu0 %v2512
    %v2537 = vpop.f32.mrf.mxu0
    %v2538 = vadd.f32 %v2407, %v2537
    %2539 = vmatmul.f32.gmra.mxu0 %v2515
    %v2540 = vpop.f32.mrf.mxu0
    %v2541 = vadd.f32 %v2407, %v2540
    %2542 = vdwg.mxu0
    %2543 = vmatpush.msra.mxu0 0.0
    %2544 = vmatpush.msra.mxu0 0.0
    %2545 = vmatpush.msra.mxu0 0.0
    %2546 = vmatpush.msra.mxu0 0.0
    %2547 = vmatpush.msra.mxu0 0.0
    %2548 = vmatpush.msra.mxu0 0.0
    %2549 = vmatpush.msra.mxu0 0.0
    %2550 = vmatpush.msra.mxu0 0.0
    %2551 = vmatpush.msra.mxu0 0.0
    %2552 = vmatpush.msra.mxu0 0.0
    %2553 = vmatpush.msra.mxu0 0.0
    %2554 = vmatpush.msra.mxu0 0.0
    %2555 = vmatpush.msra.mxu0 0.0
    %2556 = vmatpush.msra.mxu0 %v2541
    %2557 = vmatpush.msra.mxu0 %v2538
    %2558 = vmatpush.msra.mxu0 %v2535
    %2559 = vmatmul.f32.gmra.mxu0 %v963
    %v2560 = vpop.f32.mrf.mxu0
    %v2561 = vadd.f32 0.0, %v2560
    %2562 = vmatmul.f32.gmra.mxu0 %v966
    %v2563 = vpop.f32.mrf.mxu0
    %v2564 = vadd.f32 0.0, %v2563
    %2565 = vdwg.mxu0
    %2566 = vmatpush.msra.mxu0 0.0
    %2567 = vmatpush.msra.mxu0 0.0
    %2568 = vmatpush.msra.mxu0 0.0
    %2569 = vmatpush.msra.mxu0 0.0
    %2570 = vmatpush.msra.mxu0 0.0
    %2571 = vmatpush.msra.mxu0 0.0
    %2572 = vmatpush.msra.mxu0 0.0
    %2573 = vmatpush.msra.mxu0 0.0
    %2574 = vmatpush.msra.mxu0 0.0
    %2575 = vmatpush.msra.mxu0 0.0
    %2576 = vmatpush.msra.mxu0 0.0
    %2577 = vmatpush.msra.mxu0 0.0
    %2578 = vmatpush.msra.mxu0 0.0
    %2579 = vmatpush.msra.mxu0 %v2442
    %2580 = vmatpush.msra.mxu0 %v2439
    %2581 = vmatpush.msra.mxu0 %v2436
    %2582 = vmatmul.f32.gmra.mxu0 %v992
    %v2583 = vpop.f32.mrf.mxu0
    %v2584 = vadd.f32 %v2561, %v2583
    %2585 = vmatmul.f32.gmra.mxu0 %v995
    %v2586 = vpop.f32.mrf.mxu0
    %v2587 = vadd.f32 %v2564, %v2586
    %2588 = vdwg.mxu0
    %v2589 = vmul.f32 %v2584, %v1033
    %v2590 = vmul.f32 %v2587, %v1048
    %v2591 = vadd.f32 %v1822, %v2589
    %v2592 = vadd.f32 %v1823, %v2590
    %2593 = vmatpush.msra.mxu0 0.0
    %2594 = vmatpush.msra.mxu0 0.0
    %2595 = vmatpush.msra.mxu0 0.0
    %2596 = vmatpush.msra.mxu0 0.0
    %2597 = vmatpush.msra.mxu0 0.0
    %2598 = vmatpush.msra.mxu0 0.0
    %2599 = vmatpush.msra.mxu0 0.0
    %2600 = vmatpush.msra.mxu0 0.0
    %2601 = vmatpush.msra.mxu0 0.0
    %2602 = vmatpush.msra.mxu0 0.0
    %2603 = vmatpush.msra.mxu0 0.0
    %2604 = vmatpush.msra.mxu0 0.0
    %2605 = vmatpush.msra.mxu0 0.0
    %2606 = vmatpush.msra.mxu0 0.0
    %2607 = vmatpush.msra.mxu0 %v2592
    %2608 = vmatpush.msra.mxu0 %v2591
    %2609 = vmatmul.f32.gmra.mxu0 %v669
    %v2610 = vpop.f32.mrf.mxu0
    %v2611 = vadd.f32 0.0, %v2610
    %2612 = vmatmul.f32.gmra.mxu0 %v672
    %v2613 = vpop.f32.mrf.mxu0
    %v2614 = vadd.f32 0.0, %v2613
    %2615 = vmatmul.f32.gmra.mxu0 %v675
    %v2616 = vpop.f32.mrf.mxu0
    %v2617 = vadd.f32 0.0, %v2616
    %2618 = vdwg.mxu0
    %2619 = vmatpush.msra.mxu0 0.0
    %2620 = vmatpush.msra.mxu0 0.0
    %2621 = vmatpush.msra.mxu0 0.0
    %2622 = vmatpush.msra.mxu0 0.0
    %2623 = vmatpush.msra.mxu0 0.0
    %2624 = vmatpush.msra.mxu0 0.0
    %2625 = vmatpush.msra.mxu0 0.0
    %2626 = vmatpush.msra.mxu0 0.0
    %2627 = vmatpush.msra.mxu0 0.0
    %2628 = vmatpush.msra.mxu0 0.0
    %2629 = vmatpush.msra.mxu0 0.0
    %2630 = vmatpush.msra.mxu0 0.0
    %2631 = vmatpush.msra.mxu0 0.0
    %2632 = vmatpush.msra.mxu0 0.0
    %2633 = vmatpush.msra.mxu0 %v2592
    %2634 = vmatpush.msra.mxu0 %v2591
    %2635 = vmatmul.f32.gmra.mxu0 %v704
    %v2636 = vpop.f32.mrf.mxu0
    %v2637 = vadd.f32 0.0, %v2636
    %2638 = vmatmul.f32.gmra.mxu0 %v707
    %v2639 = vpop.f32.mrf.mxu0
    %v2640 = vadd.f32 0.0, %v2639
    %2641 = vmatmul.f32.gmra.mxu0 %v710
    %v2642 = vpop.f32.mrf.mxu0
    %v2643 = vadd.f32 0.0, %v2642
    %2644 = vdwg.mxu0
    %v2646 = vsel %vm738, %v2637, 0
    %v2649 = vsel %vm738, %v2640, 0
    %v2652 = vsel %vm738, %v2643, 0
    %2654 = vmatpush.msra.mxu0 0.0
    %2655 = vmatpush.msra.mxu0 0.0
    %2656 = vmatpush.msra.mxu0 0.0
    %2657 = vmatpush.msra.mxu0 0.0
    %2658 = vmatpush.msra.mxu0 0.0
    %2659 = vmatpush.msra.mxu0 0.0
    %2660 = vmatpush.msra.mxu0 0.0
    %2661 = vmatpush.msra.mxu0 0.0
    %2662 = vmatpush.msra.mxu0 0.0
    %2663 = vmatpush.msra.mxu0 0.0
    %2664 = vmatpush.msra.mxu0 0.0
    %2665 = vmatpush.msra.mxu0 0.0
    %2666 = vmatpush.msra.mxu0 0.0
    %2667 = vmatpush.msra.mxu0 0.0
    %2668 = vmatpush.msra.mxu0 0.0
    %2669 = vmatpush.msra.mxu0 %v571
    %2670 = vmatmul.f32.gmra.mxu0 %v2646
    %v2671 = vpop.f32.mrf.mxu0
    %v2672 = vadd.f32 0.0, %v2671
    %2673 = vmatmul.f32.gmra.mxu0 %v2649
    %v2674 = vpop.f32.mrf.mxu0
    %v2675 = vadd.f32 0.0, %v2674
    %2676 = vmatmul.f32.gmra.mxu0 %v2652
    %v2677 = vpop.f32.mrf.mxu0
    %v2678 = vadd.f32 0.0, %v2677
    %2679 = vdwg.mxu0
    %v2681 = vsel %vm738, %v2611, 0
    %v2684 = vsel %vm738, %v2614, 0
    %v2687 = vsel %vm738, %v2617, 0
    %2689 = vmatpush.msra.mxu0 0.0
    %2690 = vmatpush.msra.mxu0 0.0
    %2691 = vmatpush.msra.mxu0 0.0
    %2692 = vmatpush.msra.mxu0 0.0
    %2693 = vmatpush.msra.mxu0 0.0
    %2694 = vmatpush.msra.mxu0 0.0
    %2695 = vmatpush.msra.mxu0 0.0
    %2696 = vmatpush.msra.mxu0 0.0
    %2697 = vmatpush.msra.mxu0 0.0
    %2698 = vmatpush.msra.mxu0 0.0
    %2699 = vmatpush.msra.mxu0 0.0
    %2700 = vmatpush.msra.mxu0 0.0
    %2701 = vmatpush.msra.mxu0 0.0
    %2702 = vmatpush.msra.mxu0 0.0
    %2703 = vmatpush.msra.mxu0 0.0
    %2704 = vmatpush.msra.mxu0 %v570
    %2705 = vmatmul.f32.gmra.mxu0 %v2681
    %v2706 = vpop.f32.mrf.mxu0
    %v2707 = vadd.f32 %v2672, %v2706
    %2708 = vmatmul.f32.gmra.mxu0 %v2684
    %v2709 = vpop.f32.mrf.mxu0
    %v2710 = vadd.f32 %v2675, %v2709
    %2711 = vmatmul.f32.gmra.mxu0 %v2687
    %v2712 = vpop.f32.mrf.mxu0
    %v2713 = vadd.f32 %v2678, %v2712
    %2714 = vdwg.mxu0
    %v2716 = vperm.slane %v572, 0
    %v2718 = vadd.f32 %v2707, %v2716
    %v2719 = vadd.f32 %v2710, %v2716
    %v2720 = vadd.f32 %v2713, %v2716
    %vm2721 = vcmp.gt.f32.partialorder %v2718, 0.0
    %vm2722 = vcmp.gt.f32.partialorder %v2719, 0.0
    %vm2723 = vcmp.gt.f32.partialorder %v2720, 0.0
    %v2724 = vmul.f32 %v2718, 0.01
    %v2725 = vmul.f32 %v2719, 0.01
    %v2726 = vmul.f32 %v2720, 0.01
    %v2727 = vsel %vm2721, %v2718, %v2724
    %v2728 = vsel %vm2722, %v2719, %v2725
    %v2729 = vsel %vm2723, %v2720, %v2726
    %v2731 = vperm.slane %v577, 0
    %v2734 = vsel %vm827, %v2727, 0
    %v2737 = vsel %vm827, %v2728, 0
    %v2740 = vsel %vm827, %v2729, 0
    %2742 = vmatpush.msra.mxu0 0.0
    %2743 = vmatpush.msra.mxu0 0.0
    %2744 = vmatpush.msra.mxu0 0.0
    %2745 = vmatpush.msra.mxu0 0.0
    %2746 = vmatpush.msra.mxu0 0.0
    %2747 = vmatpush.msra.mxu0 0.0
    %2748 = vmatpush.msra.mxu0 0.0
    %2749 = vmatpush.msra.mxu0 0.0
    %2750 = vmatpush.msra.mxu0 0.0
    %2751 = vmatpush.msra.mxu0 0.0
    %2752 = vmatpush.msra.mxu0 0.0
    %2753 = vmatpush.msra.mxu0 0.0
    %2754 = vmatpush.msra.mxu0 %v576
    %2755 = vmatpush.msra.mxu0 %v575
    %2756 = vmatpush.msra.mxu0 %v574
    %2757 = vmatpush.msra.mxu0 %v573
    %2758 = vmatmul.f32.gmra.mxu0 %v2734
    %v2759 = vpop.f32.mrf.mxu0
    %v2760 = vadd.f32 %v2731, %v2759
    %2761 = vmatmul.f32.gmra.mxu0 %v2737
    %v2762 = vpop.f32.mrf.mxu0
    %v2763 = vadd.f32 %v2731, %v2762
    %2764 = vmatmul.f32.gmra.mxu0 %v2740
    %v2765 = vpop.f32.mrf.mxu0
    %v2766 = vadd.f32 %v2731, %v2765
    %2767 = vdwg.mxu0
    %2768 = vmatpush.msra.mxu0 0.0
    %2769 = vmatpush.msra.mxu0 0.0
    %2770 = vmatpush.msra.mxu0 0.0
    %2771 = vmatpush.msra.mxu0 0.0
    %2772 = vmatpush.msra.mxu0 0.0
    %2773 = vmatpush.msra.mxu0 0.0
    %2774 = vmatpush.msra.mxu0 0.0
    %2775 = vmatpush.msra.mxu0 0.0
    %2776 = vmatpush.msra.mxu0 0.0
    %2777 = vmatpush.msra.mxu0 0.0
    %2778 = vmatpush.msra.mxu0 0.0
    %2779 = vmatpush.msra.mxu0 0.0
    %2780 = vmatpush.msra.mxu0 0.0
    %2781 = vmatpush.msra.mxu0 0.0
    %2782 = vmatpush.msra.mxu0 0.0
    %2783 = vmatpush.msra.mxu0 %v571
    %2784 = vmatmul.f32.gmra.mxu0 %v2681
    %v2785 = vpop.f32.mrf.mxu0
    %v2786 = vadd.f32 0.0, %v2785
    %2787 = vmatmul.f32.gmra.mxu0 %v2684
    %v2788 = vpop.f32.mrf.mxu0
    %v2789 = vadd.f32 0.0, %v2788
    %2790 = vmatmul.f32.gmra.mxu0 %v2687
    %v2791 = vpop.f32.mrf.mxu0
    %v2792 = vadd.f32 0.0, %v2791
    %2793 = vdwg.mxu0
    %2794 = vmatpush.msra.mxu0 0.0
    %2795 = vmatpush.msra.mxu0 0.0
    %2796 = vmatpush.msra.mxu0 0.0
    %2797 = vmatpush.msra.mxu0 0.0
    %2798 = vmatpush.msra.mxu0 0.0
    %2799 = vmatpush.msra.mxu0 0.0
    %2800 = vmatpush.msra.mxu0 0.0
    %2801 = vmatpush.msra.mxu0 0.0
    %2802 = vmatpush.msra.mxu0 0.0
    %2803 = vmatpush.msra.mxu0 0.0
    %2804 = vmatpush.msra.mxu0 0.0
    %2805 = vmatpush.msra.mxu0 0.0
    %2806 = vmatpush.msra.mxu0 0.0
    %2807 = vmatpush.msra.mxu0 0.0
    %2808 = vmatpush.msra.mxu0 0.0
    %2809 = vmatpush.msra.mxu0 %v570
    %2810 = vmatmul.f32.gmra.mxu0 %v2646
    %v2811 = vpop.f32.mrf.mxu0
    %v2812 = vadd.f32 %v2786, %v2811
    %2813 = vmatmul.f32.gmra.mxu0 %v2649
    %v2814 = vpop.f32.mrf.mxu0
    %v2815 = vadd.f32 %v2789, %v2814
    %2816 = vmatmul.f32.gmra.mxu0 %v2652
    %v2817 = vpop.f32.mrf.mxu0
    %v2818 = vadd.f32 %v2792, %v2817
    %2819 = vdwg.mxu0
    %v2820 = vadd.f32 %v2812, %v2716
    %v2821 = vadd.f32 %v2815, %v2716
    %v2822 = vadd.f32 %v2818, %v2716
    %vm2823 = vcmp.gt.f32.partialorder %v2820, 0.0
    %vm2824 = vcmp.gt.f32.partialorder %v2821, 0.0
    %vm2825 = vcmp.gt.f32.partialorder %v2822, 0.0
    %v2826 = vmul.f32 %v2820, 0.01
    %v2827 = vmul.f32 %v2821, 0.01
    %v2828 = vmul.f32 %v2822, 0.01
    %v2829 = vsel %vm2823, %v2820, %v2826
    %v2830 = vsel %vm2824, %v2821, %v2827
    %v2831 = vsel %vm2825, %v2822, %v2828
    %v2833 = vsel %vm827, %v2829, 0
    %v2836 = vsel %vm827, %v2830, 0
    %v2839 = vsel %vm827, %v2831, 0
    %2841 = vmatpush.msra.mxu0 0.0
    %2842 = vmatpush.msra.mxu0 0.0
    %2843 = vmatpush.msra.mxu0 0.0
    %2844 = vmatpush.msra.mxu0 0.0
    %2845 = vmatpush.msra.mxu0 0.0
    %2846 = vmatpush.msra.mxu0 0.0
    %2847 = vmatpush.msra.mxu0 0.0
    %2848 = vmatpush.msra.mxu0 0.0
    %2849 = vmatpush.msra.mxu0 0.0
    %2850 = vmatpush.msra.mxu0 0.0
    %2851 = vmatpush.msra.mxu0 0.0
    %2852 = vmatpush.msra.mxu0 0.0
    %2853 = vmatpush.msra.mxu0 %v576
    %2854 = vmatpush.msra.mxu0 %v575
    %2855 = vmatpush.msra.mxu0 %v574
    %2856 = vmatpush.msra.mxu0 %v573
    %2857 = vmatmul.f32.gmra.mxu0 %v2833
    %v2858 = vpop.f32.mrf.mxu0
    %v2859 = vadd.f32 %v2731, %v2858
    %2860 = vmatmul.f32.gmra.mxu0 %v2836
    %v2861 = vpop.f32.mrf.mxu0
    %v2862 = vadd.f32 %v2731, %v2861
    %2863 = vmatmul.f32.gmra.mxu0 %v2839
    %v2864 = vpop.f32.mrf.mxu0
    %v2865 = vadd.f32 %v2731, %v2864
    %2866 = vdwg.mxu0
    %v2867 = vsub.f32 %v2760, %v2859
    %v2868 = vsub.f32 %v2763, %v2862
    %v2869 = vsub.f32 %v2766, %v2865
    %v2870 = vmul.f32 %v2867, %v2867
    %v2871 = vmul.f32 %v2868, %v2868
    %v2872 = vmul.f32 %v2869, %v2869
    %v2873 = vsel %vm738, %v2870, 0.0
    %2874 = vadd.xlane.f32.xlu0 %v2873
    %v2875 = vpop.xlane.xlu0 %2874
    %v2876 = vsel %vm738, %v2871, 0.0
    %2877 = vadd.xlane.f32.xlu0 %v2876
    %v2878 = vpop.xlane.xlu0 %2877
    %v2879 = vsel %vm738, %v2872, 0.0
    %2880 = vadd.xlane.f32.xlu0 %v2879
    %v2881 = vpop.xlane.xlu0 %2880
    %v2882 = vadd.f32 %v2875, %v2878
    %v2883 = vadd.f32 %v2882, %v2881
    %v2884 = vrot.slane %v2883, 4
    %v2885 = vadd.f32 %v2883, %v2884
    %v2886 = vrot.slane %v2885, 2
    %v2887 = vadd.f32 %v2885, %v2886
    %v2888 = vrot.slane %v2887, 1
    %v2889 = vadd.f32 %v2887, %v2888
    %v2890 = vmul.f32 %v2889, 0.0052083335
    %v2891 = vadd.f32 %v2760, %v2859
    %v2892 = vadd.f32 %v2763, %v2862
    %v2893 = vadd.f32 %v2766, %v2865
    %v2894 = vmul.f32 %v2891, 0.5
    %v2895 = vmul.f32 %v2892, 0.5
    %v2896 = vmul.f32 %v2893, 0.5
    %v2898 = vperm.slane %v579, 0
    %v2901 = vsel %vm738, %v2336, 0
    %v2904 = vsel %vm738, %v2337, 0
    %v2907 = vsel %vm738, %v2338, 0
    %2909 = vmatpush.msra.mxu0 0.0
    %2910 = vmatpush.msra.mxu0 0.0
    %2911 = vmatpush.msra.mxu0 0.0
    %2912 = vmatpush.msra.mxu0 0.0
    %2913 = vmatpush.msra.mxu0 0.0
    %2914 = vmatpush.msra.mxu0 0.0
    %2915 = vmatpush.msra.mxu0 0.0
    %2916 = vmatpush.msra.mxu0 0.0
    %2917 = vmatpush.msra.mxu0 0.0
    %2918 = vmatpush.msra.mxu0 0.0
    %2919 = vmatpush.msra.mxu0 0.0
    %2920 = vmatpush.msra.mxu0 0.0
    %2921 = vmatpush.msra.mxu0 0.0
    %2922 = vmatpush.msra.mxu0 0.0
    %2923 = vmatpush.msra.mxu0 0.0
    %2924 = vmatpush.msra.mxu0 %v578
    %2925 = vmatmul.f32.gmra.mxu0 %v2901
    %v2926 = vpop.f32.mrf.mxu0
    %v2927 = vadd.f32 %v2898, %v2926
    %2928 = vmatmul.f32.gmra.mxu0 %v2904
    %v2929 = vpop.f32.mrf.mxu0
    %v2930 = vadd.f32 %v2898, %v2929
    %2931 = vmatmul.f32.gmra.mxu0 %v2907
    %v2932 = vpop.f32.mrf.mxu0
    %v2933 = vadd.f32 %v2898, %v2932
    %2934 = vdwg.mxu0
    %vm2935 = vcmp.gt.f32.partialorder %v2927, 0.0
    %vm2936 = vcmp.gt.f32.partialorder %v2930, 0.0
    %vm2937 = vcmp.gt.f32.partialorder %v2933, 0.0
    %v2938 = vmul.f32 %v2927, 0.01
    %v2939 = vmul.f32 %v2930, 0.01
    %v2940 = vmul.f32 %v2933, 0.01
    %v2941 = vsel %vm2935, %v2927, %v2938
    %v2942 = vsel %vm2936, %v2930, %v2939
    %v2943 = vsel %vm2937, %v2933, %v2940
    %v2945 = vperm.slane %v582, 0
    %v2948 = vsel %vm667, %v2941, 0
    %v2951 = vsel %vm667, %v2942, 0
    %v2954 = vsel %vm667, %v2943, 0
    %2956 = vmatpush.msra.mxu0 0.0
    %2957 = vmatpush.msra.mxu0 0.0
    %2958 = vmatpush.msra.mxu0 0.0
    %2959 = vmatpush.msra.mxu0 0.0
    %2960 = vmatpush.msra.mxu0 0.0
    %2961 = vmatpush.msra.mxu0 0.0
    %2962 = vmatpush.msra.mxu0 0.0
    %2963 = vmatpush.msra.mxu0 0.0
    %2964 = vmatpush.msra.mxu0 0.0
    %2965 = vmatpush.msra.mxu0 0.0
    %2966 = vmatpush.msra.mxu0 0.0
    %2967 = vmatpush.msra.mxu0 0.0
    %2968 = vmatpush.msra.mxu0 0.0
    %2969 = vmatpush.msra.mxu0 0.0
    %2970 = vmatpush.msra.mxu0 %v581
    %2971 = vmatpush.msra.mxu0 %v580
    %2972 = vmatmul.f32.gmra.mxu0 %v2948
    %v2973 = vpop.f32.mrf.mxu0
    %v2974 = vadd.f32 %v2945, %v2973
    %2975 = vmatmul.f32.gmra.mxu0 %v2951
    %v2976 = vpop.f32.mrf.mxu0
    %v2977 = vadd.f32 %v2945, %v2976
    %2978 = vmatmul.f32.gmra.mxu0 %v2954
    %v2979 = vpop.f32.mrf.mxu0
    %v2980 = vadd.f32 %v2945, %v2979
    %2981 = vdwg.mxu0
    %v2983 = vsel %vm738, %v2974, 0
    %v2986 = vsel %vm738, %v2977, 0
    %v2989 = vsel %vm738, %v2980, 0
    %2991 = vmatpush.msra.mxu0 0.0
    %2992 = vmatpush.msra.mxu0 0.0
    %2993 = vmatpush.msra.mxu0 0.0
    %2994 = vmatpush.msra.mxu0 0.0
    %2995 = vmatpush.msra.mxu0 0.0
    %2996 = vmatpush.msra.mxu0 0.0
    %2997 = vmatpush.msra.mxu0 0.0
    %2998 = vmatpush.msra.mxu0 0.0
    %2999 = vmatpush.msra.mxu0 0.0
    %3000 = vmatpush.msra.mxu0 0.0
    %3001 = vmatpush.msra.mxu0 0.0
    %3002 = vmatpush.msra.mxu0 0.0
    %3003 = vmatpush.msra.mxu0 0.0
    %3004 = vmatpush.msra.mxu0 0.0
    %3005 = vmatpush.msra.mxu0 0.0
    %3006 = vmatpush.msra.mxu0 %v584
    %3007 = vmatmul.f32.gmra.mxu0 %v2983
    %v3008 = vpop.f32.mrf.mxu0
    %v3009 = vadd.f32 0.0, %v3008
    %3010 = vmatmul.f32.gmra.mxu0 %v2986
    %v3011 = vpop.f32.mrf.mxu0
    %v3012 = vadd.f32 0.0, %v3011
    %3013 = vmatmul.f32.gmra.mxu0 %v2989
    %v3014 = vpop.f32.mrf.mxu0
    %v3015 = vadd.f32 0.0, %v3014
    %3016 = vdwg.mxu0
    %v3018 = vsel %vm738, %v2894, 0
    %v3021 = vsel %vm738, %v2895, 0
    %v3024 = vsel %vm738, %v2896, 0
    %3026 = vmatpush.msra.mxu0 0.0
    %3027 = vmatpush.msra.mxu0 0.0
    %3028 = vmatpush.msra.mxu0 0.0
    %3029 = vmatpush.msra.mxu0 0.0
    %3030 = vmatpush.msra.mxu0 0.0
    %3031 = vmatpush.msra.mxu0 0.0
    %3032 = vmatpush.msra.mxu0 0.0
    %3033 = vmatpush.msra.mxu0 0.0
    %3034 = vmatpush.msra.mxu0 0.0
    %3035 = vmatpush.msra.mxu0 0.0
    %3036 = vmatpush.msra.mxu0 0.0
    %3037 = vmatpush.msra.mxu0 0.0
    %3038 = vmatpush.msra.mxu0 0.0
    %3039 = vmatpush.msra.mxu0 0.0
    %3040 = vmatpush.msra.mxu0 0.0
    %3041 = vmatpush.msra.mxu0 %v583
    %3042 = vmatmul.f32.gmra.mxu0 %v3018
    %v3043 = vpop.f32.mrf.mxu0
    %v3044 = vadd.f32 %v3009, %v3043
    %3045 = vmatmul.f32.gmra.mxu0 %v3021
    %v3046 = vpop.f32.mrf.mxu0
    %v3047 = vadd.f32 %v3012, %v3046
    %3048 = vmatmul.f32.gmra.mxu0 %v3024
    %v3049 = vpop.f32.mrf.mxu0
    %v3050 = vadd.f32 %v3015, %v3049
    %3051 = vdwg.mxu0
    %v3053 = vperm.slane %v585, 0
    %v3055 = vadd.f32 %v3044, %v3053
    %v3056 = vadd.f32 %v3047, %v3053
    %v3057 = vadd.f32 %v3050, %v3053
    %vm3058 = vcmp.gt.f32.partialorder %v3055, 0.0
    %vm3059 = vcmp.gt.f32.partialorder %v3056, 0.0
    %vm3060 = vcmp.gt.f32.partialorder %v3057, 0.0
    %v3061 = vmul.f32 %v3055, 0.01
    %v3062 = vmul.f32 %v3056, 0.01
    %v3063 = vmul.f32 %v3057, 0.01
    %v3064 = vsel %vm3058, %v3055, %v3061
    %v3065 = vsel %vm3059, %v3056, %v3062
    %v3066 = vsel %vm3060, %v3057, %v3063
    %v3068 = vperm.slane %v590, 0
    %v3071 = vsel %vm827, %v3064, 0
    %v3074 = vsel %vm827, %v3065, 0
    %v3077 = vsel %vm827, %v3066, 0
    %3079 = vmatpush.msra.mxu0 0.0
    %3080 = vmatpush.msra.mxu0 0.0
    %3081 = vmatpush.msra.mxu0 0.0
    %3082 = vmatpush.msra.mxu0 0.0
    %3083 = vmatpush.msra.mxu0 0.0
    %3084 = vmatpush.msra.mxu0 0.0
    %3085 = vmatpush.msra.mxu0 0.0
    %3086 = vmatpush.msra.mxu0 0.0
    %3087 = vmatpush.msra.mxu0 0.0
    %3088 = vmatpush.msra.mxu0 0.0
    %3089 = vmatpush.msra.mxu0 0.0
    %3090 = vmatpush.msra.mxu0 0.0
    %3091 = vmatpush.msra.mxu0 %v589
    %3092 = vmatpush.msra.mxu0 %v588
    %3093 = vmatpush.msra.mxu0 %v587
    %3094 = vmatpush.msra.mxu0 %v586
    %3095 = vmatmul.f32.gmra.mxu0 %v3071
    %v3096 = vpop.f32.mrf.mxu0
    %v3097 = vadd.f32 %v3068, %v3096
    %3098 = vmatmul.f32.gmra.mxu0 %v3074
    %v3099 = vpop.f32.mrf.mxu0
    %v3100 = vadd.f32 %v3068, %v3099
    %3101 = vmatmul.f32.gmra.mxu0 %v3077
    %v3102 = vpop.f32.mrf.mxu0
    %v3103 = vadd.f32 %v3068, %v3102
    %3104 = vdwg.mxu0
    %3105 = vst.msk [vmem:[%s109] sm:$0xff] %vm738, %v3097
    %3106 = vst.msk [vmem:[%s109 + $0x8] sm:$0xff] %vm738, %v3100
    %3107 = vst.msk [vmem:[%s109 + $0x10] sm:$0xff] %vm738, %v3103
    %v3108 = vadd.f32 %v1350, %v2121
    %v3109 = vadd.f32 %v3108, %v2890
    %v3110 = vmul.f32 %v3109, 0.33333334
    %vm3111 = vcmask 0
    %3112 = vst.msk [vmem:[#allocation31] sm:$0x1] %vm3111, %v3110
    // Predicated region
    $region290: #{gcnn_forward.1} parent=1 // pred_check
      _
    $region291: #{gcnn_forward.1} parent=1 // pred_check_branch
      %3114 = sbr.rel (0) target = $region293
    $region292: #{gcnn_forward.1} parent=1 // pred_region
      _
    $region293: #{gcnn_forward.1} parent=1 // pred_fallthru
      _
    // Predicated region
    $region294: #{gcnn_forward.1} parent=1 // pred_check
      _
    $region295: #{gcnn_forward.1} parent=1 // pred_check_branch
      %3116 = sbr.rel (0) target = $region297
    $region296: #{gcnn_forward.1} parent=1 // pred_region
      %3118 = vsyncadd [#allocation4], 0
      %s3120 = sshll.u32 [#allocation31], 4
      %s3121 = int_to_ptr.vmem [resolvable:$true] %s3120
      %s3122 = sshll.u32 %s111, 4
      %s3123 = int_to_ptr.hbm [resolvable:$true] %s3122
      %3125 = dma.vmem_to_hbm [thread:$0]  %s3121, 16, %s3123, [#allocation4]
    $region297: #{gcnn_forward.1} parent=1 // pred_fallthru
      _
    // Predicated region
    $region298: #{gcnn_forward.1} parent=1 // pred_check
      _
    $region299: #{gcnn_forward.1} parent=1 // pred_check_branch
      %3127 = sbr.rel (0) target = $region301
    $region300: #{gcnn_forward.1} parent=1 // pred_region
      _
    $region301: #{gcnn_forward.1} parent=1 // pred_fallthru
      _
    // Predicated region
    $region302: #{gcnn_forward.1} parent=1 // pred_check
      _
    $region303: #{gcnn_forward.1} parent=1 // pred_check_branch
      %3129 = sbr.rel (0) target = $region305
    $region304: #{gcnn_forward.1} parent=1 // pred_region
      %3131 = dma.done [#allocation4], 16
    $region305: #{gcnn_forward.1} parent=1 // pred_fallthru
      _
    %3132 = vsyncpa [#allocation3], 1
    %3133 = vsyncpa [#allocation6], 1
    %3134 = vsyncpa [#allocation9], 1
    %3135 = vsyncpa [#allocation12], 1
    %3136 = vsyncpa [#allocation15], 1
    %3137 = vsyncpa [#allocation18], 1
    %3138 = vsyncpa [#allocation21], 1
    %3139 = vsyncpa [#allocation24], 1
    %3140 = vsyncpa [#allocation27], 1
    %3141 = vsyncpa [#allocation30], 1
    %3142 = vsyncpa [#allocation4], 1

</llo_original>
